<compile_context>
chip_gen: v6e
topology: v6e:2x2x1
jax: 0.10.0
libtpu: 0.0.40
codegen_flags: <defaults>
</compile_context>

<pallas_src>
import jax
import jax.numpy as jnp
from jax.experimental import pallas as pl
from jax.experimental.pallas import tpu as pltpu


def _cat(parts, axis):
    return parts[0] if len(parts) == 1 else jnp.concatenate(parts, axis=axis)


def _vmem_limit_bytes():
    # ~80% of the per-core VMEM capacity, capped at 100 MiB.
    try:
        info = pltpu.get_tpu_info()
        cap = int(getattr(info, "vmem_capacity_bytes", 64 * 1024 * 1024))
    except Exception:
        cap = 64 * 1024 * 1024          # conservative fallback (v7x physical)
    return min(int(cap * 0.8), 100 * 1024 * 1024)


def _make_resblock_kernel(H, W, n_batch):
    """Fused ResBlock kernel for one (Nb, C, H*W) channel-major block."""
    HW = H * W
    PAD = W + 1          # flat offset of pixel (0, 0) inside the padded scratch

    def kernel(x_ref, w1_ref, b1_ref, w2_ref, b2_ref,
               wse1_ref, bse1_ref, wse2_ref, bse2_ref, o_ref, buf_ref):
        Cin = x_ref.shape[1]
        Cout = o_ref.shape[1]
        L = buf_ref.shape[2]             # HW + 2*W + 2
        cdt = w1_ref.dtype               # bf16 MXU compute dtype

        # Horizontal-edge masks: dx=0 / dx=2 taps of the flat row-major scratch
        # wrap across image rows at w==0 / w==W-1; those positions are zero
        # padding in the real conv, so mask them out of the patch values.
        col = jax.lax.broadcasted_iota(jnp.int32, (1, HW), 1) % W
        not_left = col != 0
        not_right = col != (W - 1)

        # Zero only the guard + top/bottom padding lanes each grid step (cheap,
        # and required for correctness under "parallel" megacore sharding).
        zpad = jnp.zeros((n_batch, Cin, PAD), cdt)
        buf_ref[:, :, 0:PAD] = zpad
        buf_ref[:, :, PAD + HW:L] = zpad

        def conv3x3(w_ref):
            # Partial im2col: one MXU matmul per kernel row dy (K = 3*C),
            # accumulated in f32.  Taps are shifted lane-slices of the flat
            # padded scratch; nothing bigger than (3C, Nb*HW) bf16 is built.
            acc = jnp.zeros((Cout, n_batch * HW), jnp.float32)
            for dy in range(3):
                imgs = []
                for b in range(n_batch):
                    base = dy * W
                    t0 = buf_ref[b, :, base + 0:base + HW]           # dx = 0
                    t1 = buf_ref[b, :, base + 1:base + 1 + HW]       # dx = 1
                    t2 = buf_ref[b, :, base + 2:base + 2 + HW]       # dx = 2
                    t0 = jnp.where(not_left, t0, 0)
                    t2 = jnp.where(not_right, t2, 0)
                    imgs.append(jnp.concatenate([t0, t1, t2], axis=0))
                patch = _cat(imgs, axis=1)                           # (3C, Nb*HW)
                acc = acc + jnp.dot(w_ref[dy], patch,
                                    preferred_element_type=jnp.float32)
            return acc                                               # f32

        # ---- conv1 (BN1 scale pre-folded into w1) + shift + ReLU -------------
        buf_ref[:, :, PAD:PAD + HW] = x_ref[...].astype(cdt)
        y1 = jnp.maximum(conv3x3(w1_ref) + b1_ref[...], 0.0)         # (Cout, Nb*HW)

        # ---- conv2 + BN2 + ReLU (reuse the scratch; Cin == Cout here) --------
        for b in range(n_batch):
            buf_ref[b, :, PAD:PAD + HW] = y1[:, b * HW:(b + 1) * HW].astype(cdt)
        y2 = jnp.maximum(conv3x3(w2_ref) + b2_ref[...], 0.0)         # (Cout, Nb*HW)

        # ---- SE: GAP -> fc(reduce) -> ReLU -> fc(expand) -> sigmoid ----------
        pooled = _cat([jnp.mean(y2[:, b * HW:(b + 1) * HW], axis=1, keepdims=True)
                       for b in range(n_batch)], axis=1)             # (Cout, Nb)
        z = jnp.maximum(jnp.dot(wse1_ref[...], pooled.astype(cdt),
                                preferred_element_type=jnp.float32)
                        + bse1_ref[...], 0.0)                        # (Csq, Nb)
        gate = jax.nn.sigmoid(jnp.dot(wse2_ref[...], z.astype(cdt),
                                      preferred_element_type=jnp.float32)
                              + bse2_ref[...])                       # (Cout, Nb)

        # ---- channel gate + identity residual (f32) + final ReLU -------------
        for b in range(n_batch):
            out_b = (y2[:, b * HW:(b + 1) * HW] * gate[:, b:b + 1]
                     + x_ref[b].astype(jnp.float32))
            o_ref[b] = jnp.maximum(out_b, 0.0).astype(o_ref.dtype)

    return kernel


def resblock_forward(x_nchw, params, *, batch_block=2, out_dtype=None):
    """Fused ResBlock forward.  x_nchw: (N, C, H, W) float32 (PyTorch layout).
    Returns (N, C, H, W) in `out_dtype` (defaults to x.dtype; use bf16 if the
    consumer takes bf16 to halve HBM writeback)."""
    (w1k, b1, w2k, b2, wse1, bse1, wse2, bse2) = params
    N, C, H, W = x_nchw.shape
    Cout = w1k.shape[1]
    Csq = wse1.shape[0]
    assert C == Cout, "ResBlock identity residual needs in_channels == out_channels"
    if N % batch_block != 0:
        batch_block = 1
    Nb = batch_block
    HW = H * W
    out_dtype = x_nchw.dtype if out_dtype is None else out_dtype

    # Channel-major flat layout: (N, C, H, W) -> (N, C, H*W) is a free reshape
    # of a contiguous NCHW array (no transpose, no extra HBM pass).
    x = x_nchw.reshape(N, C, HW)

    kernel = _make_resblock_kernel(H, W, Nb)

    def _call(single_buffer_consts):
        def const_spec(arr):
            idx = lambda n, _nd=arr.ndim: (0,) * _nd
            if single_buffer_consts:
                # Constant operands: index_map never changes, so default
                # double-buffering only wastes VMEM -> single buffer.
                return pl.BlockSpec(arr.shape, idx, pipeline_mode=pl.Buffered(1))
            return pl.BlockSpec(arr.shape, idx)

        grid_spec = pltpu.PrefetchScalarGridSpec(
            num_scalar_prefetch=0,
            grid=(N // Nb,),
            in_specs=[
                pl.BlockSpec((Nb, C, HW), lambda n: (n, 0, 0)),   # x (f32)
                const_spec(w1k),  const_spec(b1),                 # conv1 / BN1
                const_spec(w2k),  const_spec(b2),                 # conv2 / BN2
                const_spec(wse1), const_spec(bse1),               # SE fc1
                const_spec(wse2), const_spec(bse2),               # SE fc2
            ],
            out_specs=pl.BlockSpec((Nb, Cout, HW), lambda n: (n, 0, 0)),
            # Flat bf16 padded scratch shared by conv1/conv2:
            # lane = 1 guard + W top pad + H*W interior + W bottom pad + 1 guard.
            scratch_shapes=[pltpu.VMEM((Nb, C, HW + 2 * W + 2), jnp.bfloat16)],
        )
        return pl.pallas_call(
            kernel,
            out_shape=jax.ShapeDtypeStruct((N, Cout, HW), out_dtype),
            grid_spec=grid_spec,
            compiler_params=pltpu.CompilerParams(
                dimension_semantics=("parallel",),
                vmem_limit_bytes=_vmem_limit_bytes()),
        )(x, w1k, b1, w2k, b2, wse1, bse1, wse2, bse2)

    try:
        out = _call(True)
    except Exception:
        # Fallback if pipeline_mode=pl.Buffered(1) is not supported by this
        # JAX/Mosaic build (only costs the extra double-buffered weight VMEM).
        out = _call(False)

    return out.reshape(N, Cout, H, W)


# ------------------------- pure-JAX reference (for checking) -----------------
def ref_forward(x_nchw, raw):
    (w1, s1, b1, w2, s2, b2, wse1, bse1, wse2, bse2) = raw
    dn = ('NCHW', 'OIHW', 'NCHW')

    def cbr(x, w, s, b):   # conv3x3(SAME) -> BN(eval) -> ReLU
        y = jax.lax.conv_general_dilated(x, w, (1, 1), 'SAME',
                                         dimension_numbers=dn)
        return jnp.maximum(y * s[None, :, None, None] + b[None, :, None, None], 0.0)

    y = cbr(x_nchw, w1, s1, b1)
    y = cbr(y, w2, s2, b2)
    pooled = jnp.mean(y, axis=(2, 3))                               # (N, C)
    z = jnp.maximum(pooled @ wse1.T + bse1, 0.0)
    gate = jax.nn.sigmoid(z @ wse2.T + bse2)
    y = y * gate[:, :, None, None]
    return jnp.maximum(y + x_nchw, 0.0)


def init_params(key, cin, cout, se_reduction=4):
    csq = max(cout // se_reduction, 1)
    ks = jax.random.split(key, 8)
    eps = 1e-5
    # conv weights in OIHW (PyTorch layout)
    w1 = jax.random.normal(ks[0], (cout, cin, 3, 3), jnp.float32) * (2.0 / (9 * cin)) ** 0.5
    w2 = jax.random.normal(ks[1], (cout, cout, 3, 3), jnp.float32) * (2.0 / (9 * cout)) ** 0.5

    def bn(k, c):  # eval-mode BN folded to per-channel scale/shift
        k1, k2, k3, k4 = jax.random.split(k, 4)
        gamma = 0.5 + jax.random.uniform(k1, (c,), jnp.float32)
        beta = 0.1 * jax.random.normal(k2, (c,), jnp.float32)
        mean = 0.1 * jax.random.normal(k3, (c,), jnp.float32)
        var = 0.5 + jax.random.uniform(k4, (c,), jnp.float32)
        scale = gamma / jnp.sqrt(var + eps)
        shift = beta - mean * scale
        return scale, shift

    s1, b1 = bn(ks[2], cout)
    s2, b2 = bn(ks[3], cout)
    # SE block: Linear(cout->csq)+bias, ReLU, Linear(csq->cout)+bias, sigmoid
    wse1 = jax.random.normal(ks[4], (csq, cout), jnp.float32) * (2.0 / cout) ** 0.5
    bse1 = 0.1 * jax.random.normal(ks[5], (csq,), jnp.float32)
    wse2 = jax.random.normal(ks[6], (cout, csq), jnp.float32) * (2.0 / csq) ** 0.5
    bse2 = 0.1 * jax.random.normal(ks[7], (cout,), jnp.float32)
    raw = (w1, s1, b1, w2, s2, b2, wse1, bse1, wse2, bse2)

    def fold_conv(w_oihw, scale):
        # Fold BN scale into the conv weight and lay out as
        # (dy, cout, dx*cin + ci): one K=3*C matmul operand per leading index.
        wf = w_oihw * scale[:, None, None, None]              # (co, ci, 3, 3)
        wf = jnp.transpose(wf, (2, 0, 3, 1))                  # (dy, co, dx, ci)
        return wf.reshape(3, w_oihw.shape[0], 3 * w_oihw.shape[1]).astype(jnp.bfloat16)

    kernel_params = (
        fold_conv(w1, s1), b1.reshape(cout, 1),
        fold_conv(w2, s2), b2.reshape(cout, 1),
        wse1.astype(jnp.bfloat16), bse1.reshape(csq, 1),
        wse2.astype(jnp.bfloat16), bse2.reshape(cout, 1),
    )
    return kernel_params, raw


if __name__ == "__main__":
    N, C, H, W = 4, 8, 16, 16
    key = jax.random.PRNGKey(0)
    kx, kp = jax.random.split(key)
    x = jax.random.normal(kx, (N, C, H, W), jnp.float32)
    kernel_params, raw_params = init_params(kp, C, C)

    out = jax.block_until_ready(resblock_forward(x, kernel_params, batch_block=2))
    ref = jax.block_until_ready(ref_forward(x, raw_params))

    assert out.shape == (N, C, H, W)
    err = float(jnp.max(jnp.abs(out - ref)))
    scale = float(jnp.max(jnp.abs(ref)))
    # bf16 MXU operands (f32 accumulation) => allow ~1% relative error margin.
    assert err <= 5e-2 * max(1.0, scale), f"mismatch vs JAX reference: {err} (scale {scale})"

    print("KERNEL_OK")
</pallas_src>

<mosaic_0001>
module attributes {stable_mosaic.version = 11 : i64} {
  func.func @kernel(%arg0: i32, %arg1: memref<2x8x256xf32, #tpu.memory_space<vmem>>, %arg2: memref<3x8x24xbf16, #tpu.memory_space<vmem>>, %arg3: memref<8x1xf32, #tpu.memory_space<vmem>>, %arg4: memref<3x8x24xbf16, #tpu.memory_space<vmem>>, %arg5: memref<8x1xf32, #tpu.memory_space<vmem>>, %arg6: memref<2x8xbf16, #tpu.memory_space<vmem>>, %arg7: memref<2x1xf32, #tpu.memory_space<vmem>>, %arg8: memref<8x2xbf16, #tpu.memory_space<vmem>>, %arg9: memref<8x1xf32, #tpu.memory_space<vmem>>, %arg10: memref<2x8x256xf32, #tpu.memory_space<vmem>>, %arg11: memref<2x8x290xbf16, #tpu.memory_space<vmem>>) attributes {dimension_semantics = [#tpu.dimension_semantics<parallel>], iteration_bounds = array<i64: 2>, scalar_prefetch = 0 : i64, scratch_operands = 1 : i64, tpu.core_type = #tpu.core_type<tc>, window_params = [{transform_indices = @transform_0, window_bounds = array<i64: 2, 8, 256>}, {pipeline_mode = #tpu.pipeline_mode<synchronous>, transform_indices = @transform_1, window_bounds = array<i64: 3, 8, 24>}, {pipeline_mode = #tpu.pipeline_mode<synchronous>, transform_indices = @transform_2, window_bounds = array<i64: 8, 1>}, {pipeline_mode = #tpu.pipeline_mode<synchronous>, transform_indices = @transform_3, window_bounds = array<i64: 3, 8, 24>}, {pipeline_mode = #tpu.pipeline_mode<synchronous>, transform_indices = @transform_4, window_bounds = array<i64: 8, 1>}, {pipeline_mode = #tpu.pipeline_mode<synchronous>, transform_indices = @transform_5, window_bounds = array<i64: 2, 8>}, {pipeline_mode = #tpu.pipeline_mode<synchronous>, transform_indices = @transform_6, window_bounds = array<i64: 2, 1>}, {pipeline_mode = #tpu.pipeline_mode<synchronous>, transform_indices = @transform_7, window_bounds = array<i64: 8, 2>}, {pipeline_mode = #tpu.pipeline_mode<synchronous>, transform_indices = @transform_8, window_bounds = array<i64: 8, 1>}, {transform_indices = @transform_9, window_bounds = array<i64: 2, 8, 256>}]} {
    %0 = tpu.iota {dimensions = array<i32: 1>} : vector<1x256xi32>
    %c16_i32 = arith.constant 16 : i32
    %c0_i32 = arith.constant 0 : i32
    %1 = arith.cmpi eq, %c16_i32, %c0_i32 : i32
    %c1_i32 = arith.constant 1 : i32
    %2 = arith.select %1, %c1_i32, %c16_i32 : i32
    %3 = vector.broadcast %2 : i32 to vector<1x256xi32>
    %4 = arith.remsi %0, %3 : vector<1x256xi32>
    %c0_i32_0 = arith.constant 0 : i32
    %5 = vector.broadcast %c0_i32_0 : i32 to vector<1x256xi32>
    %6 = arith.cmpi ne, %4, %5 : vector<1x256xi32>
    %c0_i32_1 = arith.constant 0 : i32
    %7 = vector.broadcast %c0_i32_1 : i32 to vector<1x256xi32>
    %8 = arith.cmpi slt, %4, %7 : vector<1x256xi32>
    %c0_i32_2 = arith.constant 0 : i32
    %9 = arith.cmpi slt, %2, %c0_i32_2 : i32
    %10 = vector.broadcast %9 : i1 to vector<1x256xi1>
    %11 = vector.broadcast %10 : vector<1x256xi1> to vector<1x256xi1>
    %12 = arith.xori %8, %11 : vector<1x256xi1>
    %13 = arith.andi %12, %6 : vector<1x256xi1>
    %14 = vector.broadcast %2 : i32 to vector<1x256xi32>
    %15 = arith.addi %4, %14 : vector<1x256xi32>
    %16 = arith.select %13, %15, %4 : vector<1x256xi1>, vector<1x256xi32>
    %c0_i32_3 = arith.constant 0 : i32
    %17 = vector.broadcast %c0_i32_3 : i32 to vector<1x256xi32>
    %18 = arith.cmpi ne, %16, %17 : vector<1x256xi32>
    %c15_i32 = arith.constant 15 : i32
    %19 = vector.broadcast %c15_i32 : i32 to vector<1x256xi32>
    %20 = arith.cmpi ne, %16, %19 : vector<1x256xi32>
    %cst = arith.constant 0.000000e+00 : bf16
    %21 = vector.broadcast %cst : bf16 to vector<2x8x17xbf16>
    %c0 = arith.constant 0 : index
    %c0_4 = arith.constant 0 : index
    %c0_5 = arith.constant 0 : index
    %22 = vector.load %arg11[%c0, %c0_4, %c0_5] : memref<2x8x290xbf16, #tpu.memory_space<vmem>>, vector<2x8x17xbf16>
    tpu.vector_store %arg11[%c0, %c0_4, %c0_5], %21 {strides = array<i32>} : memref<2x8x290xbf16, #tpu.memory_space<vmem>>, vector<2x8x17xbf16>,
    %c0_6 = arith.constant 0 : index
    %c0_7 = arith.constant 0 : index
    %c273 = arith.constant 273 : index
    %23 = vector.load %arg11[%c0_6, %c0_7, %c273] : memref<2x8x290xbf16, #tpu.memory_space<vmem>>, vector<2x8x17xbf16>
    tpu.vector_store %arg11[%c0_6, %c0_7, %c273], %21 {strides = array<i32>} : memref<2x8x290xbf16, #tpu.memory_space<vmem>>, vector<2x8x17xbf16>,
    %c0_8 = arith.constant 0 : index
    %c0_9 = arith.constant 0 : index
    %c0_10 = arith.constant 0 : index
    %24 = vector.load %arg1[%c0_8, %c0_9, %c0_10] : memref<2x8x256xf32, #tpu.memory_space<vmem>>, vector<2x8x256xf32>
    %25 = arith.truncf %24 : vector<2x8x256xf32> to vector<2x8x256xbf16>
    %c0_11 = arith.constant 0 : index
    %c0_12 = arith.constant 0 : index
    %c17 = arith.constant 17 : index
    %26 = vector.load %arg11[%c0_11, %c0_12, %c17] : memref<2x8x290xbf16, #tpu.memory_space<vmem>>, vector<2x8x256xbf16>
    tpu.vector_store %arg11[%c0_11, %c0_12, %c17], %25 {strides = array<i32>} : memref<2x8x290xbf16, #tpu.memory_space<vmem>>, vector<2x8x256xbf16>,
    %cst_13 = arith.constant 0.000000e+00 : f32
    %27 = vector.broadcast %cst_13 : f32 to vector<8x512xf32>
    %c0_14 = arith.constant 0 : index
    %c0_15 = arith.constant 0 : index
    %c0_16 = arith.constant 0 : index
    %28 = vector.load %arg11[%c0_14, %c0_15, %c0_16] : memref<2x8x290xbf16, #tpu.memory_space<vmem>>, vector<1x8x256xbf16>
    %29 = vector.shape_cast %28 : vector<1x8x256xbf16> to vector<8x256xbf16>
    %c0_17 = arith.constant 0 : index
    %c0_18 = arith.constant 0 : index
    %c1 = arith.constant 1 : index
    %30 = vector.load %arg11[%c0_17, %c0_18, %c1] : memref<2x8x290xbf16, #tpu.memory_space<vmem>>, vector<1x8x256xbf16>
    %31 = vector.shape_cast %30 : vector<1x8x256xbf16> to vector<8x256xbf16>
    %c0_19 = arith.constant 0 : index
    %c0_20 = arith.constant 0 : index
    %c2 = arith.constant 2 : index
    %32 = vector.load %arg11[%c0_19, %c0_20, %c2] : memref<2x8x290xbf16, #tpu.memory_space<vmem>>, vector<1x8x256xbf16>
    %33 = vector.shape_cast %32 : vector<1x8x256xbf16> to vector<8x256xbf16>
    %c0_i32_21 = arith.constant 0 : i32
    %34 = arith.sitofp %c0_i32_21 : i32 to bf16
    %35 = vector.shape_cast %18 : vector<1x256xi1> to vector<1x256xi1>
    %36 = vector.broadcast %35 : vector<1x256xi1> to vector<8x256xi1>
    %37 = vector.broadcast %34 : bf16 to vector<8x256xbf16>
    %38 = arith.select %36, %29, %37 : vector<8x256xi1>, vector<8x256xbf16>
    %c0_i32_22 = arith.constant 0 : i32
    %39 = arith.sitofp %c0_i32_22 : i32 to bf16
    %40 = vector.shape_cast %20 : vector<1x256xi1> to vector<1x256xi1>
    %41 = vector.broadcast %40 : vector<1x256xi1> to vector<8x256xi1>
    %42 = vector.broadcast %39 : bf16 to vector<8x256xbf16>
    %43 = arith.select %41, %33, %42 : vector<8x256xi1>, vector<8x256xbf16>
    %44 = tpu.concatenate %38, %31, %43 in 0 : vector<8x256xbf16>, vector<8x256xbf16>, vector<8x256xbf16> -> vector<24x256xbf16>
    %c1_23 = arith.constant 1 : index
    %c0_24 = arith.constant 0 : index
    %c0_25 = arith.constant 0 : index
    %45 = vector.load %arg11[%c1_23, %c0_24, %c0_25] : memref<2x8x290xbf16, #tpu.memory_space<vmem>>, vector<1x8x256xbf16>
    %46 = vector.shape_cast %45 : vector<1x8x256xbf16> to vector<8x256xbf16>
    %c1_26 = arith.constant 1 : index
    %c0_27 = arith.constant 0 : index
    %c1_28 = arith.constant 1 : index
    %47 = vector.load %arg11[%c1_26, %c0_27, %c1_28] : memref<2x8x290xbf16, #tpu.memory_space<vmem>>, vector<1x8x256xbf16>
    %48 = vector.shape_cast %47 : vector<1x8x256xbf16> to vector<8x256xbf16>
    %c1_29 = arith.constant 1 : index
    %c0_30 = arith.constant 0 : index
    %c2_31 = arith.constant 2 : index
    %49 = vector.load %arg11[%c1_29, %c0_30, %c2_31] : memref<2x8x290xbf16, #tpu.memory_space<vmem>>, vector<1x8x256xbf16>
    %50 = vector.shape_cast %49 : vector<1x8x256xbf16> to vector<8x256xbf16>
    %c0_i32_32 = arith.constant 0 : i32
    %51 = arith.sitofp %c0_i32_32 : i32 to bf16
    %52 = vector.shape_cast %18 : vector<1x256xi1> to vector<1x256xi1>
    %53 = vector.broadcast %52 : vector<1x256xi1> to vector<8x256xi1>
    %54 = vector.broadcast %51 : bf16 to vector<8x256xbf16>
    %55 = arith.select %53, %46, %54 : vector<8x256xi1>, vector<8x256xbf16>
    %c0_i32_33 = arith.constant 0 : i32
    %56 = arith.sitofp %c0_i32_33 : i32 to bf16
    %57 = vector.shape_cast %20 : vector<1x256xi1> to vector<1x256xi1>
    %58 = vector.broadcast %57 : vector<1x256xi1> to vector<8x256xi1>
    %59 = vector.broadcast %56 : bf16 to vector<8x256xbf16>
    %60 = arith.select %58, %50, %59 : vector<8x256xi1>, vector<8x256xbf16>
    %61 = tpu.concatenate %55, %48, %60 in 0 : vector<8x256xbf16>, vector<8x256xbf16>, vector<8x256xbf16> -> vector<24x256xbf16>
    %62 = tpu.concatenate %44, %61 in 1 : vector<24x256xbf16>, vector<24x256xbf16> -> vector<24x512xbf16>
    %c0_34 = arith.constant 0 : index
    %c0_35 = arith.constant 0 : index
    %c0_36 = arith.constant 0 : index
    %63 = vector.load %arg2[%c0_34, %c0_35, %c0_36] : memref<3x8x24xbf16, #tpu.memory_space<vmem>>, vector<1x8x24xbf16>
    %64 = vector.shape_cast %63 : vector<1x8x24xbf16> to vector<8x24xbf16>
    %cst_37 = arith.constant dense<0.000000e+00> : vector<8x512xf32>
    %65 = tpu.matmul %64, %62, %cst_37 {dimension_numbers = #tpu.dot_dimension_numbers<[1], [0], [0], [1], [0, 0, 1, 1], [], []>} : vector<8x24xbf16>, vector<24x512xbf16>, vector<8x512xf32> -> vector<8x512xf32>
    %66 = arith.addf %27, %65 : vector<8x512xf32>
    %c0_38 = arith.constant 0 : index
    %c0_39 = arith.constant 0 : index
    %c16 = arith.constant 16 : index
    %67 = vector.load %arg11[%c0_38, %c0_39, %c16] : memref<2x8x290xbf16, #tpu.memory_space<vmem>>, vector<1x8x256xbf16>
    %68 = vector.shape_cast %67 : vector<1x8x256xbf16> to vector<8x256xbf16>
    %c0_40 = arith.constant 0 : index
    %c0_41 = arith.constant 0 : index
    %c17_42 = arith.constant 17 : index
    %69 = vector.load %arg11[%c0_40, %c0_41, %c17_42] : memref<2x8x290xbf16, #tpu.memory_space<vmem>>, vector<1x8x256xbf16>
    %70 = vector.shape_cast %69 : vector<1x8x256xbf16> to vector<8x256xbf16>
    %c0_43 = arith.constant 0 : index
    %c0_44 = arith.constant 0 : index
    %c18 = arith.constant 18 : index
    %71 = vector.load %arg11[%c0_43, %c0_44, %c18] : memref<2x8x290xbf16, #tpu.memory_space<vmem>>, vector<1x8x256xbf16>
    %72 = vector.shape_cast %71 : vector<1x8x256xbf16> to vector<8x256xbf16>
    %c0_i32_45 = arith.constant 0 : i32
    %73 = arith.sitofp %c0_i32_45 : i32 to bf16
    %74 = vector.shape_cast %18 : vector<1x256xi1> to vector<1x256xi1>
    %75 = vector.broadcast %74 : vector<1x256xi1> to vector<8x256xi1>
    %76 = vector.broadcast %73 : bf16 to vector<8x256xbf16>
    %77 = arith.select %75, %68, %76 : vector<8x256xi1>, vector<8x256xbf16>
    %c0_i32_46 = arith.constant 0 : i32
    %78 = arith.sitofp %c0_i32_46 : i32 to bf16
    %79 = vector.shape_cast %20 : vector<1x256xi1> to vector<1x256xi1>
    %80 = vector.broadcast %79 : vector<1x256xi1> to vector<8x256xi1>
    %81 = vector.broadcast %78 : bf16 to vector<8x256xbf16>
    %82 = arith.select %80, %72, %81 : vector<8x256xi1>, vector<8x256xbf16>
    %83 = tpu.concatenate %77, %70, %82 in 0 : vector<8x256xbf16>, vector<8x256xbf16>, vector<8x256xbf16> -> vector<24x256xbf16>
    %c1_47 = arith.constant 1 : index
    %c0_48 = arith.constant 0 : index
    %c16_49 = arith.constant 16 : index
    %84 = vector.load %arg11[%c1_47, %c0_48, %c16_49] : memref<2x8x290xbf16, #tpu.memory_space<vmem>>, vector<1x8x256xbf16>
    %85 = vector.shape_cast %84 : vector<1x8x256xbf16> to vector<8x256xbf16>
    %c1_50 = arith.constant 1 : index
    %c0_51 = arith.constant 0 : index
    %c17_52 = arith.constant 17 : index
    %86 = vector.load %arg11[%c1_50, %c0_51, %c17_52] : memref<2x8x290xbf16, #tpu.memory_space<vmem>>, vector<1x8x256xbf16>
    %87 = vector.shape_cast %86 : vector<1x8x256xbf16> to vector<8x256xbf16>
    %c1_53 = arith.constant 1 : index
    %c0_54 = arith.constant 0 : index
    %c18_55 = arith.constant 18 : index
    %88 = vector.load %arg11[%c1_53, %c0_54, %c18_55] : memref<2x8x290xbf16, #tpu.memory_space<vmem>>, vector<1x8x256xbf16>
    %89 = vector.shape_cast %88 : vector<1x8x256xbf16> to vector<8x256xbf16>
    %c0_i32_56 = arith.constant 0 : i32
    %90 = arith.sitofp %c0_i32_56 : i32 to bf16
    %91 = vector.shape_cast %18 : vector<1x256xi1> to vector<1x256xi1>
    %92 = vector.broadcast %91 : vector<1x256xi1> to vector<8x256xi1>
    %93 = vector.broadcast %90 : bf16 to vector<8x256xbf16>
    %94 = arith.select %92, %85, %93 : vector<8x256xi1>, vector<8x256xbf16>
    %c0_i32_57 = arith.constant 0 : i32
    %95 = arith.sitofp %c0_i32_57 : i32 to bf16
    %96 = vector.shape_cast %20 : vector<1x256xi1> to vector<1x256xi1>
    %97 = vector.broadcast %96 : vector<1x256xi1> to vector<8x256xi1>
    %98 = vector.broadcast %95 : bf16 to vector<8x256xbf16>
    %99 = arith.select %97, %89, %98 : vector<8x256xi1>, vector<8x256xbf16>
    %100 = tpu.concatenate %94, %87, %99 in 0 : vector<8x256xbf16>, vector<8x256xbf16>, vector<8x256xbf16> -> vector<24x256xbf16>
    %101 = tpu.concatenate %83, %100 in 1 : vector<24x256xbf16>, vector<24x256xbf16> -> vector<24x512xbf16>
    %c1_58 = arith.constant 1 : index
    %c0_59 = arith.constant 0 : index
    %c0_60 = arith.constant 0 : index
    %102 = vector.load %arg2[%c1_58, %c0_59, %c0_60] : memref<3x8x24xbf16, #tpu.memory_space<vmem>>, vector<1x8x24xbf16>
    %103 = vector.shape_cast %102 : vector<1x8x24xbf16> to vector<8x24xbf16>
    %cst_61 = arith.constant dense<0.000000e+00> : vector<8x512xf32>
    %104 = tpu.matmul %103, %101, %cst_61 {dimension_numbers = #tpu.dot_dimension_numbers<[1], [0], [0], [1], [0, 0, 1, 1], [], []>} : vector<8x24xbf16>, vector<24x512xbf16>, vector<8x512xf32> -> vector<8x512xf32>
    %105 = arith.addf %66, %104 : vector<8x512xf32>
    %c0_62 = arith.constant 0 : index
    %c0_63 = arith.constant 0 : index
    %c32 = arith.constant 32 : index
    %106 = vector.load %arg11[%c0_62, %c0_63, %c32] : memref<2x8x290xbf16, #tpu.memory_space<vmem>>, vector<1x8x256xbf16>
    %107 = vector.shape_cast %106 : vector<1x8x256xbf16> to vector<8x256xbf16>
    %c0_64 = arith.constant 0 : index
    %c0_65 = arith.constant 0 : index
    %c33 = arith.constant 33 : index
    %108 = vector.load %arg11[%c0_64, %c0_65, %c33] : memref<2x8x290xbf16, #tpu.memory_space<vmem>>, vector<1x8x256xbf16>
    %109 = vector.shape_cast %108 : vector<1x8x256xbf16> to vector<8x256xbf16>
    %c0_66 = arith.constant 0 : index
    %c0_67 = arith.constant 0 : index
    %c34 = arith.constant 34 : index
    %110 = vector.load %arg11[%c0_66, %c0_67, %c34] : memref<2x8x290xbf16, #tpu.memory_space<vmem>>, vector<1x8x256xbf16>
    %111 = vector.shape_cast %110 : vector<1x8x256xbf16> to vector<8x256xbf16>
    %c0_i32_68 = arith.constant 0 : i32
    %112 = arith.sitofp %c0_i32_68 : i32 to bf16
    %113 = vector.shape_cast %18 : vector<1x256xi1> to vector<1x256xi1>
    %114 = vector.broadcast %113 : vector<1x256xi1> to vector<8x256xi1>
    %115 = vector.broadcast %112 : bf16 to vector<8x256xbf16>
    %116 = arith.select %114, %107, %115 : vector<8x256xi1>, vector<8x256xbf16>
    %c0_i32_69 = arith.constant 0 : i32
    %117 = arith.sitofp %c0_i32_69 : i32 to bf16
    %118 = vector.shape_cast %20 : vector<1x256xi1> to vector<1x256xi1>
    %119 = vector.broadcast %118 : vector<1x256xi1> to vector<8x256xi1>
    %120 = vector.broadcast %117 : bf16 to vector<8x256xbf16>
    %121 = arith.select %119, %111, %120 : vector<8x256xi1>, vector<8x256xbf16>
    %122 = tpu.concatenate %116, %109, %121 in 0 : vector<8x256xbf16>, vector<8x256xbf16>, vector<8x256xbf16> -> vector<24x256xbf16>
    %c1_70 = arith.constant 1 : index
    %c0_71 = arith.constant 0 : index
    %c32_72 = arith.constant 32 : index
    %123 = vector.load %arg11[%c1_70, %c0_71, %c32_72] : memref<2x8x290xbf16, #tpu.memory_space<vmem>>, vector<1x8x256xbf16>
    %124 = vector.shape_cast %123 : vector<1x8x256xbf16> to vector<8x256xbf16>
    %c1_73 = arith.constant 1 : index
    %c0_74 = arith.constant 0 : index
    %c33_75 = arith.constant 33 : index
    %125 = vector.load %arg11[%c1_73, %c0_74, %c33_75] : memref<2x8x290xbf16, #tpu.memory_space<vmem>>, vector<1x8x256xbf16>
    %126 = vector.shape_cast %125 : vector<1x8x256xbf16> to vector<8x256xbf16>
    %c1_76 = arith.constant 1 : index
    %c0_77 = arith.constant 0 : index
    %c34_78 = arith.constant 34 : index
    %127 = vector.load %arg11[%c1_76, %c0_77, %c34_78] : memref<2x8x290xbf16, #tpu.memory_space<vmem>>, vector<1x8x256xbf16>
    %128 = vector.shape_cast %127 : vector<1x8x256xbf16> to vector<8x256xbf16>
    %c0_i32_79 = arith.constant 0 : i32
    %129 = arith.sitofp %c0_i32_79 : i32 to bf16
    %130 = vector.shape_cast %18 : vector<1x256xi1> to vector<1x256xi1>
    %131 = vector.broadcast %130 : vector<1x256xi1> to vector<8x256xi1>
    %132 = vector.broadcast %129 : bf16 to vector<8x256xbf16>
    %133 = arith.select %131, %124, %132 : vector<8x256xi1>, vector<8x256xbf16>
    %c0_i32_80 = arith.constant 0 : i32
    %134 = arith.sitofp %c0_i32_80 : i32 to bf16
    %135 = vector.shape_cast %20 : vector<1x256xi1> to vector<1x256xi1>
    %136 = vector.broadcast %135 : vector<1x256xi1> to vector<8x256xi1>
    %137 = vector.broadcast %134 : bf16 to vector<8x256xbf16>
    %138 = arith.select %136, %128, %137 : vector<8x256xi1>, vector<8x256xbf16>
    %139 = tpu.concatenate %133, %126, %138 in 0 : vector<8x256xbf16>, vector<8x256xbf16>, vector<8x256xbf16> -> vector<24x256xbf16>
    %140 = tpu.concatenate %122, %139 in 1 : vector<24x256xbf16>, vector<24x256xbf16> -> vector<24x512xbf16>
    %c2_81 = arith.constant 2 : index
    %c0_82 = arith.constant 0 : index
    %c0_83 = arith.constant 0 : index
    %141 = vector.load %arg2[%c2_81, %c0_82, %c0_83] : memref<3x8x24xbf16, #tpu.memory_space<vmem>>, vector<1x8x24xbf16>
    %142 = vector.shape_cast %141 : vector<1x8x24xbf16> to vector<8x24xbf16>
    %cst_84 = arith.constant dense<0.000000e+00> : vector<8x512xf32>
    %143 = tpu.matmul %142, %140, %cst_84 {dimension_numbers = #tpu.dot_dimension_numbers<[1], [0], [0], [1], [0, 0, 1, 1], [], []>} : vector<8x24xbf16>, vector<24x512xbf16>, vector<8x512xf32> -> vector<8x512xf32>
    %144 = arith.addf %105, %143 : vector<8x512xf32>
    %c0_85 = arith.constant 0 : index
    %c0_86 = arith.constant 0 : index
    %145 = vector.load %arg3[%c0_85, %c0_86] : memref<8x1xf32, #tpu.memory_space<vmem>>, vector<8x1xf32>
    %146 = vector.broadcast %145 : vector<8x1xf32> to vector<8x512xf32>
    %147 = arith.addf %144, %146 : vector<8x512xf32>
    %cst_87 = arith.constant 0.000000e+00 : f32
    %148 = vector.broadcast %cst_87 : f32 to vector<8x512xf32>
    %149 = arith.maximumf %147, %148 : vector<8x512xf32>
    %150 = vector.extract_strided_slice %149 {offsets = [0, 0], sizes = [8, 256], strides = [1, 1]} : vector<8x512xf32> to vector<8x256xf32>
    %151 = arith.truncf %150 : vector<8x256xf32> to vector<8x256xbf16>
    %c0_88 = arith.constant 0 : index
    %c0_89 = arith.constant 0 : index
    %c17_90 = arith.constant 17 : index
    %152 = vector.load %arg11[%c0_88, %c0_89, %c17_90] : memref<2x8x290xbf16, #tpu.memory_space<vmem>>, vector<1x8x256xbf16>
    %153 = vector.shape_cast %152 : vector<1x8x256xbf16> to vector<8x256xbf16>
    %154 = vector.shape_cast %151 : vector<8x256xbf16> to vector<1x8x256xbf16>
    tpu.vector_store %arg11[%c0_88, %c0_89, %c17_90], %154 {strides = array<i32>} : memref<2x8x290xbf16, #tpu.memory_space<vmem>>, vector<1x8x256xbf16>,
    %155 = vector.extract_strided_slice %149 {offsets = [0, 256], sizes = [8, 256], strides = [1, 1]} : vector<8x512xf32> to vector<8x256xf32>
    %156 = arith.truncf %155 : vector<8x256xf32> to vector<8x256xbf16>
    %c1_91 = arith.constant 1 : index
    %c0_92 = arith.constant 0 : index
    %c17_93 = arith.constant 17 : index
    %157 = vector.load %arg11[%c1_91, %c0_92, %c17_93] : memref<2x8x290xbf16, #tpu.memory_space<vmem>>, vector<1x8x256xbf16>
    %158 = vector.shape_cast %157 : vector<1x8x256xbf16> to vector<8x256xbf16>
    %159 = vector.shape_cast %156 : vector<8x256xbf16> to vector<1x8x256xbf16>
    tpu.vector_store %arg11[%c1_91, %c0_92, %c17_93], %159 {strides = array<i32>} : memref<2x8x290xbf16, #tpu.memory_space<vmem>>, vector<1x8x256xbf16>,
    %cst_94 = arith.constant 0.000000e+00 : f32
    %160 = vector.broadcast %cst_94 : f32 to vector<8x512xf32>
    %c0_95 = arith.constant 0 : index
    %c0_96 = arith.constant 0 : index
    %c0_97 = arith.constant 0 : index
    %161 = vector.load %arg11[%c0_95, %c0_96, %c0_97] : memref<2x8x290xbf16, #tpu.memory_space<vmem>>, vector<1x8x256xbf16>
    %162 = vector.shape_cast %161 : vector<1x8x256xbf16> to vector<8x256xbf16>
    %c0_98 = arith.constant 0 : index
    %c0_99 = arith.constant 0 : index
    %c1_100 = arith.constant 1 : index
    %163 = vector.load %arg11[%c0_98, %c0_99, %c1_100] : memref<2x8x290xbf16, #tpu.memory_space<vmem>>, vector<1x8x256xbf16>
    %164 = vector.shape_cast %163 : vector<1x8x256xbf16> to vector<8x256xbf16>
    %c0_101 = arith.constant 0 : index
    %c0_102 = arith.constant 0 : index
    %c2_103 = arith.constant 2 : index
    %165 = vector.load %arg11[%c0_101, %c0_102, %c2_103] : memref<2x8x290xbf16, #tpu.memory_space<vmem>>, vector<1x8x256xbf16>
    %166 = vector.shape_cast %165 : vector<1x8x256xbf16> to vector<8x256xbf16>
    %c0_i32_104 = arith.constant 0 : i32
    %167 = arith.sitofp %c0_i32_104 : i32 to bf16
    %168 = vector.shape_cast %18 : vector<1x256xi1> to vector<1x256xi1>
    %169 = vector.broadcast %168 : vector<1x256xi1> to vector<8x256xi1>
    %170 = vector.broadcast %167 : bf16 to vector<8x256xbf16>
    %171 = arith.select %169, %162, %170 : vector<8x256xi1>, vector<8x256xbf16>
    %c0_i32_105 = arith.constant 0 : i32
    %172 = arith.sitofp %c0_i32_105 : i32 to bf16
    %173 = vector.shape_cast %20 : vector<1x256xi1> to vector<1x256xi1>
    %174 = vector.broadcast %173 : vector<1x256xi1> to vector<8x256xi1>
    %175 = vector.broadcast %172 : bf16 to vector<8x256xbf16>
    %176 = arith.select %174, %166, %175 : vector<8x256xi1>, vector<8x256xbf16>
    %177 = tpu.concatenate %171, %164, %176 in 0 : vector<8x256xbf16>, vector<8x256xbf16>, vector<8x256xbf16> -> vector<24x256xbf16>
    %c1_106 = arith.constant 1 : index
    %c0_107 = arith.constant 0 : index
    %c0_108 = arith.constant 0 : index
    %178 = vector.load %arg11[%c1_106, %c0_107, %c0_108] : memref<2x8x290xbf16, #tpu.memory_space<vmem>>, vector<1x8x256xbf16>
    %179 = vector.shape_cast %178 : vector<1x8x256xbf16> to vector<8x256xbf16>
    %c1_109 = arith.constant 1 : index
    %c0_110 = arith.constant 0 : index
    %c1_111 = arith.constant 1 : index
    %180 = vector.load %arg11[%c1_109, %c0_110, %c1_111] : memref<2x8x290xbf16, #tpu.memory_space<vmem>>, vector<1x8x256xbf16>
    %181 = vector.shape_cast %180 : vector<1x8x256xbf16> to vector<8x256xbf16>
    %c1_112 = arith.constant 1 : index
    %c0_113 = arith.constant 0 : index
    %c2_114 = arith.constant 2 : index
    %182 = vector.load %arg11[%c1_112, %c0_113, %c2_114] : memref<2x8x290xbf16, #tpu.memory_space<vmem>>, vector<1x8x256xbf16>
    %183 = vector.shape_cast %182 : vector<1x8x256xbf16> to vector<8x256xbf16>
    %c0_i32_115 = arith.constant 0 : i32
    %184 = arith.sitofp %c0_i32_115 : i32 to bf16
    %185 = vector.shape_cast %18 : vector<1x256xi1> to vector<1x256xi1>
    %186 = vector.broadcast %185 : vector<1x256xi1> to vector<8x256xi1>
    %187 = vector.broadcast %184 : bf16 to vector<8x256xbf16>
    %188 = arith.select %186, %179, %187 : vector<8x256xi1>, vector<8x256xbf16>
    %c0_i32_116 = arith.constant 0 : i32
    %189 = arith.sitofp %c0_i32_116 : i32 to bf16
    %190 = vector.shape_cast %20 : vector<1x256xi1> to vector<1x256xi1>
    %191 = vector.broadcast %190 : vector<1x256xi1> to vector<8x256xi1>
    %192 = vector.broadcast %189 : bf16 to vector<8x256xbf16>
    %193 = arith.select %191, %183, %192 : vector<8x256xi1>, vector<8x256xbf16>
    %194 = tpu.concatenate %188, %181, %193 in 0 : vector<8x256xbf16>, vector<8x256xbf16>, vector<8x256xbf16> -> vector<24x256xbf16>
    %195 = tpu.concatenate %177, %194 in 1 : vector<24x256xbf16>, vector<24x256xbf16> -> vector<24x512xbf16>
    %c0_117 = arith.constant 0 : index
    %c0_118 = arith.constant 0 : index
    %c0_119 = arith.constant 0 : index
    %196 = vector.load %arg4[%c0_117, %c0_118, %c0_119] : memref<3x8x24xbf16, #tpu.memory_space<vmem>>, vector<1x8x24xbf16>
    %197 = vector.shape_cast %196 : vector<1x8x24xbf16> to vector<8x24xbf16>
    %cst_120 = arith.constant dense<0.000000e+00> : vector<8x512xf32>
    %198 = tpu.matmul %197, %195, %cst_120 {dimension_numbers = #tpu.dot_dimension_numbers<[1], [0], [0], [1], [0, 0, 1, 1], [], []>} : vector<8x24xbf16>, vector<24x512xbf16>, vector<8x512xf32> -> vector<8x512xf32>
    %199 = arith.addf %160, %198 : vector<8x512xf32>
    %c0_121 = arith.constant 0 : index
    %c0_122 = arith.constant 0 : index
    %c16_123 = arith.constant 16 : index
    %200 = vector.load %arg11[%c0_121, %c0_122, %c16_123] : memref<2x8x290xbf16, #tpu.memory_space<vmem>>, vector<1x8x256xbf16>
    %201 = vector.shape_cast %200 : vector<1x8x256xbf16> to vector<8x256xbf16>
    %c0_124 = arith.constant 0 : index
    %c0_125 = arith.constant 0 : index
    %c17_126 = arith.constant 17 : index
    %202 = vector.load %arg11[%c0_124, %c0_125, %c17_126] : memref<2x8x290xbf16, #tpu.memory_space<vmem>>, vector<1x8x256xbf16>
    %203 = vector.shape_cast %202 : vector<1x8x256xbf16> to vector<8x256xbf16>
    %c0_127 = arith.constant 0 : index
    %c0_128 = arith.constant 0 : index
    %c18_129 = arith.constant 18 : index
    %204 = vector.load %arg11[%c0_127, %c0_128, %c18_129] : memref<2x8x290xbf16, #tpu.memory_space<vmem>>, vector<1x8x256xbf16>
    %205 = vector.shape_cast %204 : vector<1x8x256xbf16> to vector<8x256xbf16>
    %c0_i32_130 = arith.constant 0 : i32
    %206 = arith.sitofp %c0_i32_130 : i32 to bf16
    %207 = vector.shape_cast %18 : vector<1x256xi1> to vector<1x256xi1>
    %208 = vector.broadcast %207 : vector<1x256xi1> to vector<8x256xi1>
    %209 = vector.broadcast %206 : bf16 to vector<8x256xbf16>
    %210 = arith.select %208, %201, %209 : vector<8x256xi1>, vector<8x256xbf16>
    %c0_i32_131 = arith.constant 0 : i32
    %211 = arith.sitofp %c0_i32_131 : i32 to bf16
    %212 = vector.shape_cast %20 : vector<1x256xi1> to vector<1x256xi1>
    %213 = vector.broadcast %212 : vector<1x256xi1> to vector<8x256xi1>
    %214 = vector.broadcast %211 : bf16 to vector<8x256xbf16>
    %215 = arith.select %213, %205, %214 : vector<8x256xi1>, vector<8x256xbf16>
    %216 = tpu.concatenate %210, %203, %215 in 0 : vector<8x256xbf16>, vector<8x256xbf16>, vector<8x256xbf16> -> vector<24x256xbf16>
    %c1_132 = arith.constant 1 : index
    %c0_133 = arith.constant 0 : index
    %c16_134 = arith.constant 16 : index
    %217 = vector.load %arg11[%c1_132, %c0_133, %c16_134] : memref<2x8x290xbf16, #tpu.memory_space<vmem>>, vector<1x8x256xbf16>
    %218 = vector.shape_cast %217 : vector<1x8x256xbf16> to vector<8x256xbf16>
    %c1_135 = arith.constant 1 : index
    %c0_136 = arith.constant 0 : index
    %c17_137 = arith.constant 17 : index
    %219 = vector.load %arg11[%c1_135, %c0_136, %c17_137] : memref<2x8x290xbf16, #tpu.memory_space<vmem>>, vector<1x8x256xbf16>
    %220 = vector.shape_cast %219 : vector<1x8x256xbf16> to vector<8x256xbf16>
    %c1_138 = arith.constant 1 : index
    %c0_139 = arith.constant 0 : index
    %c18_140 = arith.constant 18 : index
    %221 = vector.load %arg11[%c1_138, %c0_139, %c18_140] : memref<2x8x290xbf16, #tpu.memory_space<vmem>>, vector<1x8x256xbf16>
    %222 = vector.shape_cast %221 : vector<1x8x256xbf16> to vector<8x256xbf16>
    %c0_i32_141 = arith.constant 0 : i32
    %223 = arith.sitofp %c0_i32_141 : i32 to bf16
    %224 = vector.shape_cast %18 : vector<1x256xi1> to vector<1x256xi1>
    %225 = vector.broadcast %224 : vector<1x256xi1> to vector<8x256xi1>
    %226 = vector.broadcast %223 : bf16 to vector<8x256xbf16>
    %227 = arith.select %225, %218, %226 : vector<8x256xi1>, vector<8x256xbf16>
    %c0_i32_142 = arith.constant 0 : i32
    %228 = arith.sitofp %c0_i32_142 : i32 to bf16
    %229 = vector.shape_cast %20 : vector<1x256xi1> to vector<1x256xi1>
    %230 = vector.broadcast %229 : vector<1x256xi1> to vector<8x256xi1>
    %231 = vector.broadcast %228 : bf16 to vector<8x256xbf16>
    %232 = arith.select %230, %222, %231 : vector<8x256xi1>, vector<8x256xbf16>
    %233 = tpu.concatenate %227, %220, %232 in 0 : vector<8x256xbf16>, vector<8x256xbf16>, vector<8x256xbf16> -> vector<24x256xbf16>
    %234 = tpu.concatenate %216, %233 in 1 : vector<24x256xbf16>, vector<24x256xbf16> -> vector<24x512xbf16>
    %c1_143 = arith.constant 1 : index
    %c0_144 = arith.constant 0 : index
    %c0_145 = arith.constant 0 : index
    %235 = vector.load %arg4[%c1_143, %c0_144, %c0_145] : memref<3x8x24xbf16, #tpu.memory_space<vmem>>, vector<1x8x24xbf16>
    %236 = vector.shape_cast %235 : vector<1x8x24xbf16> to vector<8x24xbf16>
    %cst_146 = arith.constant dense<0.000000e+00> : vector<8x512xf32>
    %237 = tpu.matmul %236, %234, %cst_146 {dimension_numbers = #tpu.dot_dimension_numbers<[1], [0], [0], [1], [0, 0, 1, 1], [], []>} : vector<8x24xbf16>, vector<24x512xbf16>, vector<8x512xf32> -> vector<8x512xf32>
    %238 = arith.addf %199, %237 : vector<8x512xf32>
    %c0_147 = arith.constant 0 : index
    %c0_148 = arith.constant 0 : index
    %c32_149 = arith.constant 32 : index
    %239 = vector.load %arg11[%c0_147, %c0_148, %c32_149] : memref<2x8x290xbf16, #tpu.memory_space<vmem>>, vector<1x8x256xbf16>
    %240 = vector.shape_cast %239 : vector<1x8x256xbf16> to vector<8x256xbf16>
    %c0_150 = arith.constant 0 : index
    %c0_151 = arith.constant 0 : index
    %c33_152 = arith.constant 33 : index
    %241 = vector.load %arg11[%c0_150, %c0_151, %c33_152] : memref<2x8x290xbf16, #tpu.memory_space<vmem>>, vector<1x8x256xbf16>
    %242 = vector.shape_cast %241 : vector<1x8x256xbf16> to vector<8x256xbf16>
    %c0_153 = arith.constant 0 : index
    %c0_154 = arith.constant 0 : index
    %c34_155 = arith.constant 34 : index
    %243 = vector.load %arg11[%c0_153, %c0_154, %c34_155] : memref<2x8x290xbf16, #tpu.memory_space<vmem>>, vector<1x8x256xbf16>
    %244 = vector.shape_cast %243 : vector<1x8x256xbf16> to vector<8x256xbf16>
    %c0_i32_156 = arith.constant 0 : i32
    %245 = arith.sitofp %c0_i32_156 : i32 to bf16
    %246 = vector.shape_cast %18 : vector<1x256xi1> to vector<1x256xi1>
    %247 = vector.broadcast %246 : vector<1x256xi1> to vector<8x256xi1>
    %248 = vector.broadcast %245 : bf16 to vector<8x256xbf16>
    %249 = arith.select %247, %240, %248 : vector<8x256xi1>, vector<8x256xbf16>
    %c0_i32_157 = arith.constant 0 : i32
    %250 = arith.sitofp %c0_i32_157 : i32 to bf16
    %251 = vector.shape_cast %20 : vector<1x256xi1> to vector<1x256xi1>
    %252 = vector.broadcast %251 : vector<1x256xi1> to vector<8x256xi1>
    %253 = vector.broadcast %250 : bf16 to vector<8x256xbf16>
    %254 = arith.select %252, %244, %253 : vector<8x256xi1>, vector<8x256xbf16>
    %255 = tpu.concatenate %249, %242, %254 in 0 : vector<8x256xbf16>, vector<8x256xbf16>, vector<8x256xbf16> -> vector<24x256xbf16>
    %c1_158 = arith.constant 1 : index
    %c0_159 = arith.constant 0 : index
    %c32_160 = arith.constant 32 : index
    %256 = vector.load %arg11[%c1_158, %c0_159, %c32_160] : memref<2x8x290xbf16, #tpu.memory_space<vmem>>, vector<1x8x256xbf16>
    %257 = vector.shape_cast %256 : vector<1x8x256xbf16> to vector<8x256xbf16>
    %c1_161 = arith.constant 1 : index
    %c0_162 = arith.constant 0 : index
    %c33_163 = arith.constant 33 : index
    %258 = vector.load %arg11[%c1_161, %c0_162, %c33_163] : memref<2x8x290xbf16, #tpu.memory_space<vmem>>, vector<1x8x256xbf16>
    %259 = vector.shape_cast %258 : vector<1x8x256xbf16> to vector<8x256xbf16>
    %c1_164 = arith.constant 1 : index
    %c0_165 = arith.constant 0 : index
    %c34_166 = arith.constant 34 : index
    %260 = vector.load %arg11[%c1_164, %c0_165, %c34_166] : memref<2x8x290xbf16, #tpu.memory_space<vmem>>, vector<1x8x256xbf16>
    %261 = vector.shape_cast %260 : vector<1x8x256xbf16> to vector<8x256xbf16>
    %c0_i32_167 = arith.constant 0 : i32
    %262 = arith.sitofp %c0_i32_167 : i32 to bf16
    %263 = vector.shape_cast %18 : vector<1x256xi1> to vector<1x256xi1>
    %264 = vector.broadcast %263 : vector<1x256xi1> to vector<8x256xi1>
    %265 = vector.broadcast %262 : bf16 to vector<8x256xbf16>
    %266 = arith.select %264, %257, %265 : vector<8x256xi1>, vector<8x256xbf16>
    %c0_i32_168 = arith.constant 0 : i32
    %267 = arith.sitofp %c0_i32_168 : i32 to bf16
    %268 = vector.shape_cast %20 : vector<1x256xi1> to vector<1x256xi1>
    %269 = vector.broadcast %268 : vector<1x256xi1> to vector<8x256xi1>
    %270 = vector.broadcast %267 : bf16 to vector<8x256xbf16>
    %271 = arith.select %269, %261, %270 : vector<8x256xi1>, vector<8x256xbf16>
    %272 = tpu.concatenate %266, %259, %271 in 0 : vector<8x256xbf16>, vector<8x256xbf16>, vector<8x256xbf16> -> vector<24x256xbf16>
    %273 = tpu.concatenate %255, %272 in 1 : vector<24x256xbf16>, vector<24x256xbf16> -> vector<24x512xbf16>
    %c2_169 = arith.constant 2 : index
    %c0_170 = arith.constant 0 : index
    %c0_171 = arith.constant 0 : index
    %274 = vector.load %arg4[%c2_169, %c0_170, %c0_171] : memref<3x8x24xbf16, #tpu.memory_space<vmem>>, vector<1x8x24xbf16>
    %275 = vector.shape_cast %274 : vector<1x8x24xbf16> to vector<8x24xbf16>
    %cst_172 = arith.constant dense<0.000000e+00> : vector<8x512xf32>
    %276 = tpu.matmul %275, %273, %cst_172 {dimension_numbers = #tpu.dot_dimension_numbers<[1], [0], [0], [1], [0, 0, 1, 1], [], []>} : vector<8x24xbf16>, vector<24x512xbf16>, vector<8x512xf32> -> vector<8x512xf32>
    %277 = arith.addf %238, %276 : vector<8x512xf32>
    %c0_173 = arith.constant 0 : index
    %c0_174 = arith.constant 0 : index
    %278 = vector.load %arg5[%c0_173, %c0_174] : memref<8x1xf32, #tpu.memory_space<vmem>>, vector<8x1xf32>
    %279 = vector.broadcast %278 : vector<8x1xf32> to vector<8x512xf32>
    %280 = arith.addf %277, %279 : vector<8x512xf32>
    %cst_175 = arith.constant 0.000000e+00 : f32
    %281 = vector.broadcast %cst_175 : f32 to vector<8x512xf32>
    %282 = arith.maximumf %280, %281 : vector<8x512xf32>
    %283 = vector.extract_strided_slice %282 {offsets = [0, 0], sizes = [8, 256], strides = [1, 1]} : vector<8x512xf32> to vector<8x256xf32>
    %cst_176 = arith.constant dense<0.000000e+00> : vector<8xf32>
    %284 = vector.multi_reduction <add>, %283, %cst_176 [1] : vector<8x256xf32> to vector<8xf32>
    %285 = vector.shape_cast %284 : vector<8xf32> to vector<8x1xf32>
    %cst_177 = arith.constant 2.560000e+02 : f32
    %286 = vector.broadcast %cst_177 : f32 to vector<8x1xf32>
    %287 = arith.divf %285, %286 : vector<8x1xf32>
    %288 = vector.extract_strided_slice %282 {offsets = [0, 256], sizes = [8, 256], strides = [1, 1]} : vector<8x512xf32> to vector<8x256xf32>
    %cst_178 = arith.constant dense<0.000000e+00> : vector<8xf32>
    %289 = vector.multi_reduction <add>, %288, %cst_178 [1] : vector<8x256xf32> to vector<8xf32>
    %290 = vector.shape_cast %289 : vector<8xf32> to vector<8x1xf32>
    %cst_179 = arith.constant 2.560000e+02 : f32
    %291 = vector.broadcast %cst_179 : f32 to vector<8x1xf32>
    %292 = arith.divf %290, %291 : vector<8x1xf32>
    %293 = tpu.concatenate %287, %292 in 1 : vector<8x1xf32>, vector<8x1xf32> -> vector<8x2xf32>
    %c0_180 = arith.constant 0 : index
    %c0_181 = arith.constant 0 : index
    %294 = vector.load %arg6[%c0_180, %c0_181] : memref<2x8xbf16, #tpu.memory_space<vmem>>, vector<2x8xbf16>
    %295 = arith.truncf %293 : vector<8x2xf32> to vector<8x2xbf16>
    %cst_182 = arith.constant dense<0.000000e+00> : vector<2x2xf32>
    %296 = tpu.matmul %294, %295, %cst_182 {dimension_numbers = #tpu.dot_dimension_numbers<[1], [0], [0], [1], [0, 0, 1, 1], [], []>} : vector<2x8xbf16>, vector<8x2xbf16>, vector<2x2xf32> -> vector<2x2xf32>
    %c0_183 = arith.constant 0 : index
    %c0_184 = arith.constant 0 : index
    %297 = vector.load %arg7[%c0_183, %c0_184] : memref<2x1xf32, #tpu.memory_space<vmem>>, vector<2x1xf32>
    %298 = vector.broadcast %297 : vector<2x1xf32> to vector<2x2xf32>
    %299 = arith.addf %296, %298 : vector<2x2xf32>
    %cst_185 = arith.constant 0.000000e+00 : f32
    %300 = vector.broadcast %cst_185 : f32 to vector<2x2xf32>
    %301 = arith.maximumf %299, %300 : vector<2x2xf32>
    %c0_186 = arith.constant 0 : index
    %c0_187 = arith.constant 0 : index
    %302 = vector.load %arg8[%c0_186, %c0_187] : memref<8x2xbf16, #tpu.memory_space<vmem>>, vector<8x2xbf16>
    %303 = arith.truncf %301 : vector<2x2xf32> to vector<2x2xbf16>
    %cst_188 = arith.constant dense<0.000000e+00> : vector<8x2xf32>
    %304 = tpu.matmul %302, %303, %cst_188 {dimension_numbers = #tpu.dot_dimension_numbers<[1], [0], [0], [1], [0, 0, 1, 1], [], []>} : vector<8x2xbf16>, vector<2x2xbf16>, vector<8x2xf32> -> vector<8x2xf32>
    %c0_189 = arith.constant 0 : index
    %c0_190 = arith.constant 0 : index
    %305 = vector.load %arg9[%c0_189, %c0_190] : memref<8x1xf32, #tpu.memory_space<vmem>>, vector<8x1xf32>
    %306 = vector.broadcast %305 : vector<8x1xf32> to vector<8x2xf32>
    %307 = arith.addf %304, %306 : vector<8x2xf32>
    %308 = arith.negf %307 : vector<8x2xf32>
    %309 = math.exp %308 : vector<8x2xf32>
    %cst_191 = arith.constant 1.000000e+00 : f32
    %310 = vector.broadcast %cst_191 : f32 to vector<8x2xf32>
    %311 = arith.addf %310, %309 : vector<8x2xf32>
    %312 = arith.divf %310, %311 : vector<8x2xf32>
    %313 = vector.extract_strided_slice %282 {offsets = [0, 0], sizes = [8, 256], strides = [1, 1]} : vector<8x512xf32> to vector<8x256xf32>
    %314 = vector.extract_strided_slice %312 {offsets = [0, 0], sizes = [8, 1], strides = [1, 1]} : vector<8x2xf32> to vector<8x1xf32>
    %315 = vector.broadcast %314 : vector<8x1xf32> to vector<8x256xf32>
    %316 = arith.mulf %313, %315 : vector<8x256xf32>
    %c0_192 = arith.constant 0 : index
    %c0_193 = arith.constant 0 : index
    %c0_194 = arith.constant 0 : index
    %317 = vector.load %arg1[%c0_192, %c0_193, %c0_194] : memref<2x8x256xf32, #tpu.memory_space<vmem>>, vector<1x8x256xf32>
    %318 = vector.shape_cast %317 : vector<1x8x256xf32> to vector<8x256xf32>
    %319 = arith.addf %316, %318 : vector<8x256xf32>
    %cst_195 = arith.constant 0.000000e+00 : f32
    %320 = vector.broadcast %cst_195 : f32 to vector<8x256xf32>
    %321 = arith.maximumf %319, %320 : vector<8x256xf32>
    %c0_196 = arith.constant 0 : index
    %c0_197 = arith.constant 0 : index
    %c0_198 = arith.constant 0 : index
    %322 = vector.load %arg10[%c0_196, %c0_197, %c0_198] : memref<2x8x256xf32, #tpu.memory_space<vmem>>, vector<1x8x256xf32>
    %323 = vector.shape_cast %322 : vector<1x8x256xf32> to vector<8x256xf32>
    %324 = vector.shape_cast %321 : vector<8x256xf32> to vector<1x8x256xf32>
    tpu.vector_store %arg10[%c0_196, %c0_197, %c0_198], %324 {strides = array<i32>} : memref<2x8x256xf32, #tpu.memory_space<vmem>>, vector<1x8x256xf32>,
    %325 = vector.extract_strided_slice %282 {offsets = [0, 256], sizes = [8, 256], strides = [1, 1]} : vector<8x512xf32> to vector<8x256xf32>
    %326 = vector.extract_strided_slice %312 {offsets = [0, 1], sizes = [8, 1], strides = [1, 1]} : vector<8x2xf32> to vector<8x1xf32>
    %327 = vector.broadcast %326 : vector<8x1xf32> to vector<8x256xf32>
    %328 = arith.mulf %325, %327 : vector<8x256xf32>
    %c1_199 = arith.constant 1 : index
    %c0_200 = arith.constant 0 : index
    %c0_201 = arith.constant 0 : index
    %329 = vector.load %arg1[%c1_199, %c0_200, %c0_201] : memref<2x8x256xf32, #tpu.memory_space<vmem>>, vector<1x8x256xf32>
    %330 = vector.shape_cast %329 : vector<1x8x256xf32> to vector<8x256xf32>
    %331 = arith.addf %328, %330 : vector<8x256xf32>
    %cst_202 = arith.constant 0.000000e+00 : f32
    %332 = vector.broadcast %cst_202 : f32 to vector<8x256xf32>
    %333 = arith.maximumf %331, %332 : vector<8x256xf32>
    %c1_203 = arith.constant 1 : index
    %c0_204 = arith.constant 0 : index
    %c0_205 = arith.constant 0 : index
    %334 = vector.load %arg10[%c1_203, %c0_204, %c0_205] : memref<2x8x256xf32, #tpu.memory_space<vmem>>, vector<1x8x256xf32>
    %335 = vector.shape_cast %334 : vector<1x8x256xf32> to vector<8x256xf32>
    %336 = vector.shape_cast %333 : vector<8x256xf32> to vector<1x8x256xf32>
    tpu.vector_store %arg10[%c1_203, %c0_204, %c0_205], %336 {strides = array<i32>} : memref<2x8x256xf32, #tpu.memory_space<vmem>>, vector<1x8x256xf32>,
    return
  }
  func.func @transform_0(%arg0: i32) -> (i32, i32, i32) {
    %c0_i32 = arith.constant 0 : i32
    %c0_i32_0 = arith.constant 0 : i32
    %c0_i32_1 = arith.constant 0 : i32
    return %arg0, %c0_i32, %c0_i32_0 : i32, i32, i32
  }
  func.func @transform_1(%arg0: i32) -> (i32, i32, i32) {
    %c0_i32 = arith.constant 0 : i32
    %c0_i32_0 = arith.constant 0 : i32
    %c0_i32_1 = arith.constant 0 : i32
    %c0_i32_2 = arith.constant 0 : i32
    return %c0_i32, %c0_i32_0, %c0_i32_1 : i32, i32, i32
  }
  func.func @transform_2(%arg0: i32) -> (i32, i32) {
    %c0_i32 = arith.constant 0 : i32
    %c0_i32_0 = arith.constant 0 : i32
    %c0_i32_1 = arith.constant 0 : i32
    return %c0_i32, %c0_i32_0 : i32, i32
  }
  func.func @transform_3(%arg0: i32) -> (i32, i32, i32) {
    %c0_i32 = arith.constant 0 : i32
    %c0_i32_0 = arith.constant 0 : i32
    %c0_i32_1 = arith.constant 0 : i32
    %c0_i32_2 = arith.constant 0 : i32
    return %c0_i32, %c0_i32_0, %c0_i32_1 : i32, i32, i32
  }
  func.func @transform_4(%arg0: i32) -> (i32, i32) {
    %c0_i32 = arith.constant 0 : i32
    %c0_i32_0 = arith.constant 0 : i32
    %c0_i32_1 = arith.constant 0 : i32
    return %c0_i32, %c0_i32_0 : i32, i32
  }
  func.func @transform_5(%arg0: i32) -> (i32, i32) {
    %c0_i32 = arith.constant 0 : i32
    %c0_i32_0 = arith.constant 0 : i32
    %c0_i32_1 = arith.constant 0 : i32
    return %c0_i32, %c0_i32_0 : i32, i32
  }
  func.func @transform_6(%arg0: i32) -> (i32, i32) {
    %c0_i32 = arith.constant 0 : i32
    %c0_i32_0 = arith.constant 0 : i32
    %c0_i32_1 = arith.constant 0 : i32
    return %c0_i32, %c0_i32_0 : i32, i32
  }
  func.func @transform_7(%arg0: i32) -> (i32, i32) {
    %c0_i32 = arith.constant 0 : i32
    %c0_i32_0 = arith.constant 0 : i32
    %c0_i32_1 = arith.constant 0 : i32
    return %c0_i32, %c0_i32_0 : i32, i32
  }
  func.func @transform_8(%arg0: i32) -> (i32, i32) {
    %c0_i32 = arith.constant 0 : i32
    %c0_i32_0 = arith.constant 0 : i32
    %c0_i32_1 = arith.constant 0 : i32
    return %c0_i32, %c0_i32_0 : i32, i32
  }
  func.func @transform_9(%arg0: i32) -> (i32, i32, i32) {
    %c0_i32 = arith.constant 0 : i32
    %c0_i32_0 = arith.constant 0 : i32
    %c0_i32_1 = arith.constant 0 : i32
    return %arg0, %c0_i32, %c0_i32_0 : i32, i32, i32
  }
}

module attributes {stable_mosaic.version = 11 : i64} {
  func.func @kernel(%arg0: i32, %arg1: memref<2x8x256xf32, #tpu.memory_space<vmem>>, %arg2: memref<3x8x24xbf16, #tpu.memory_space<vmem>>, %arg3: memref<8x1xf32, #tpu.memory_space<vmem>>, %arg4: memref<3x8x24xbf16, #tpu.memory_space<vmem>>, %arg5: memref<8x1xf32, #tpu.memory_space<vmem>>, %arg6: memref<2x8xbf16, #tpu.memory_space<vmem>>, %arg7: memref<2x1xf32, #tpu.memory_space<vmem>>, %arg8: memref<8x2xbf16, #tpu.memory_space<vmem>>, %arg9: memref<8x1xf32, #tpu.memory_space<vmem>>, %arg10: memref<2x8x256xf32, #tpu.memory_space<vmem>>, %arg11: memref<2x8x290xbf16, #tpu.memory_space<vmem>>) attributes {dimension_semantics = [#tpu.dimension_semantics<parallel>], iteration_bounds = array<i64: 2>, scalar_prefetch = 0 : i64, scratch_operands = 1 : i64, tpu.core_type = #tpu.core_type<tc>, window_params = [{transform_indices = @transform_0, window_bounds = array<i64: 2, 8, 256>}, {pipeline_mode = #tpu.pipeline_mode<synchronous>, transform_indices = @transform_1, window_bounds = array<i64: 3, 8, 24>}, {pipeline_mode = #tpu.pipeline_mode<synchronous>, transform_indices = @transform_2, window_bounds = array<i64: 8, 1>}, {pipeline_mode = #tpu.pipeline_mode<synchronous>, transform_indices = @transform_3, window_bounds = array<i64: 3, 8, 24>}, {pipeline_mode = #tpu.pipeline_mode<synchronous>, transform_indices = @transform_4, window_bounds = array<i64: 8, 1>}, {pipeline_mode = #tpu.pipeline_mode<synchronous>, transform_indices = @transform_5, window_bounds = array<i64: 2, 8>}, {pipeline_mode = #tpu.pipeline_mode<synchronous>, transform_indices = @transform_6, window_bounds = array<i64: 2, 1>}, {pipeline_mode = #tpu.pipeline_mode<synchronous>, transform_indices = @transform_7, window_bounds = array<i64: 8, 2>}, {pipeline_mode = #tpu.pipeline_mode<synchronous>, transform_indices = @transform_8, window_bounds = array<i64: 8, 1>}, {transform_indices = @transform_9, window_bounds = array<i64: 2, 8, 256>}]} {
    %0 = tpu.iota {dimensions = array<i32: 1>} : vector<1x256xi32>
    %c16_i32 = arith.constant 16 : i32
    %c0_i32 = arith.constant 0 : i32
    %1 = arith.cmpi eq, %c16_i32, %c0_i32 : i32
    %c1_i32 = arith.constant 1 : i32
    %2 = arith.select %1, %c1_i32, %c16_i32 : i32
    %3 = vector.broadcast %2 : i32 to vector<1x256xi32>
    %4 = arith.remsi %0, %3 : vector<1x256xi32>
    %c0_i32_0 = arith.constant 0 : i32
    %5 = vector.broadcast %c0_i32_0 : i32 to vector<1x256xi32>
    %6 = arith.cmpi ne, %4, %5 : vector<1x256xi32>
    %c0_i32_1 = arith.constant 0 : i32
    %7 = vector.broadcast %c0_i32_1 : i32 to vector<1x256xi32>
    %8 = arith.cmpi slt, %4, %7 : vector<1x256xi32>
    %c0_i32_2 = arith.constant 0 : i32
    %9 = arith.cmpi slt, %2, %c0_i32_2 : i32
    %10 = vector.broadcast %9 : i1 to vector<1x256xi1>
    %11 = vector.broadcast %10 : vector<1x256xi1> to vector<1x256xi1>
    %12 = arith.xori %8, %11 : vector<1x256xi1>
    %13 = arith.andi %12, %6 : vector<1x256xi1>
    %14 = vector.broadcast %2 : i32 to vector<1x256xi32>
    %15 = arith.addi %4, %14 : vector<1x256xi32>
    %16 = arith.select %13, %15, %4 : vector<1x256xi1>, vector<1x256xi32>
    %c0_i32_3 = arith.constant 0 : i32
    %17 = vector.broadcast %c0_i32_3 : i32 to vector<1x256xi32>
    %18 = arith.cmpi ne, %16, %17 : vector<1x256xi32>
    %c15_i32 = arith.constant 15 : i32
    %19 = vector.broadcast %c15_i32 : i32 to vector<1x256xi32>
    %20 = arith.cmpi ne, %16, %19 : vector<1x256xi32>
    %cst = arith.constant 0.000000e+00 : bf16
    %21 = vector.broadcast %cst : bf16 to vector<2x8x17xbf16>
    %c0 = arith.constant 0 : index
    %c0_4 = arith.constant 0 : index
    %c0_5 = arith.constant 0 : index
    %22 = vector.load %arg11[%c0, %c0_4, %c0_5] : memref<2x8x290xbf16, #tpu.memory_space<vmem>>, vector<2x8x17xbf16>
    tpu.vector_store %arg11[%c0, %c0_4, %c0_5], %21 {strides = array<i32>} : memref<2x8x290xbf16, #tpu.memory_space<vmem>>, vector<2x8x17xbf16>,
    %c0_6 = arith.constant 0 : index
    %c0_7 = arith.constant 0 : index
    %c273 = arith.constant 273 : index
    %23 = vector.load %arg11[%c0_6, %c0_7, %c273] : memref<2x8x290xbf16, #tpu.memory_space<vmem>>, vector<2x8x17xbf16>
    tpu.vector_store %arg11[%c0_6, %c0_7, %c273], %21 {strides = array<i32>} : memref<2x8x290xbf16, #tpu.memory_space<vmem>>, vector<2x8x17xbf16>,
    %c0_8 = arith.constant 0 : index
    %c0_9 = arith.constant 0 : index
    %c0_10 = arith.constant 0 : index
    %24 = vector.load %arg1[%c0_8, %c0_9, %c0_10] : memref<2x8x256xf32, #tpu.memory_space<vmem>>, vector<2x8x256xf32>
    %25 = arith.truncf %24 : vector<2x8x256xf32> to vector<2x8x256xbf16>
    %c0_11 = arith.constant 0 : index
    %c0_12 = arith.constant 0 : index
    %c17 = arith.constant 17 : index
    %26 = vector.load %arg11[%c0_11, %c0_12, %c17] : memref<2x8x290xbf16, #tpu.memory_space<vmem>>, vector<2x8x256xbf16>
    tpu.vector_store %arg11[%c0_11, %c0_12, %c17], %25 {strides = array<i32>} : memref<2x8x290xbf16, #tpu.memory_space<vmem>>, vector<2x8x256xbf16>,
    %cst_13 = arith.constant 0.000000e+00 : f32
    %27 = vector.broadcast %cst_13 : f32 to vector<8x512xf32>
    %c0_14 = arith.constant 0 : index
    %c0_15 = arith.constant 0 : index
    %c0_16 = arith.constant 0 : index
    %28 = vector.load %arg11[%c0_14, %c0_15, %c0_16] : memref<2x8x290xbf16, #tpu.memory_space<vmem>>, vector<1x8x256xbf16>
    %29 = vector.shape_cast %28 : vector<1x8x256xbf16> to vector<8x256xbf16>
    %c0_17 = arith.constant 0 : index
    %c0_18 = arith.constant 0 : index
    %c1 = arith.constant 1 : index
    %30 = vector.load %arg11[%c0_17, %c0_18, %c1] : memref<2x8x290xbf16, #tpu.memory_space<vmem>>, vector<1x8x256xbf16>
    %31 = vector.shape_cast %30 : vector<1x8x256xbf16> to vector<8x256xbf16>
    %c0_19 = arith.constant 0 : index
    %c0_20 = arith.constant 0 : index
    %c2 = arith.constant 2 : index
    %32 = vector.load %arg11[%c0_19, %c0_20, %c2] : memref<2x8x290xbf16, #tpu.memory_space<vmem>>, vector<1x8x256xbf16>
    %33 = vector.shape_cast %32 : vector<1x8x256xbf16> to vector<8x256xbf16>
    %c0_i32_21 = arith.constant 0 : i32
    %34 = arith.sitofp %c0_i32_21 : i32 to bf16
    %35 = vector.shape_cast %18 : vector<1x256xi1> to vector<1x256xi1>
    %36 = vector.broadcast %35 : vector<1x256xi1> to vector<8x256xi1>
    %37 = vector.broadcast %34 : bf16 to vector<8x256xbf16>
    %38 = arith.select %36, %29, %37 : vector<8x256xi1>, vector<8x256xbf16>
    %c0_i32_22 = arith.constant 0 : i32
    %39 = arith.sitofp %c0_i32_22 : i32 to bf16
    %40 = vector.shape_cast %20 : vector<1x256xi1> to vector<1x256xi1>
    %41 = vector.broadcast %40 : vector<1x256xi1> to vector<8x256xi1>
    %42 = vector.broadcast %39 : bf16 to vector<8x256xbf16>
    %43 = arith.select %41, %33, %42 : vector<8x256xi1>, vector<8x256xbf16>
    %44 = tpu.concatenate %38, %31, %43 in 0 : vector<8x256xbf16>, vector<8x256xbf16>, vector<8x256xbf16> -> vector<24x256xbf16>
    %c1_23 = arith.constant 1 : index
    %c0_24 = arith.constant 0 : index
    %c0_25 = arith.constant 0 : index
    %45 = vector.load %arg11[%c1_23, %c0_24, %c0_25] : memref<2x8x290xbf16, #tpu.memory_space<vmem>>, vector<1x8x256xbf16>
    %46 = vector.shape_cast %45 : vector<1x8x256xbf16> to vector<8x256xbf16>
    %c1_26 = arith.constant 1 : index
    %c0_27 = arith.constant 0 : index
    %c1_28 = arith.constant 1 : index
    %47 = vector.load %arg11[%c1_26, %c0_27, %c1_28] : memref<2x8x290xbf16, #tpu.memory_space<vmem>>, vector<1x8x256xbf16>
    %48 = vector.shape_cast %47 : vector<1x8x256xbf16> to vector<8x256xbf16>
    %c1_29 = arith.constant 1 : index
    %c0_30 = arith.constant 0 : index
    %c2_31 = arith.constant 2 : index
    %49 = vector.load %arg11[%c1_29, %c0_30, %c2_31] : memref<2x8x290xbf16, #tpu.memory_space<vmem>>, vector<1x8x256xbf16>
    %50 = vector.shape_cast %49 : vector<1x8x256xbf16> to vector<8x256xbf16>
    %c0_i32_32 = arith.constant 0 : i32
    %51 = arith.sitofp %c0_i32_32 : i32 to bf16
    %52 = vector.shape_cast %18 : vector<1x256xi1> to vector<1x256xi1>
    %53 = vector.broadcast %52 : vector<1x256xi1> to vector<8x256xi1>
    %54 = vector.broadcast %51 : bf16 to vector<8x256xbf16>
    %55 = arith.select %53, %46, %54 : vector<8x256xi1>, vector<8x256xbf16>
    %c0_i32_33 = arith.constant 0 : i32
    %56 = arith.sitofp %c0_i32_33 : i32 to bf16
    %57 = vector.shape_cast %20 : vector<1x256xi1> to vector<1x256xi1>
    %58 = vector.broadcast %57 : vector<1x256xi1> to vector<8x256xi1>
    %59 = vector.broadcast %56 : bf16 to vector<8x256xbf16>
    %60 = arith.select %58, %50, %59 : vector<8x256xi1>, vector<8x256xbf16>
    %61 = tpu.concatenate %55, %48, %60 in 0 : vector<8x256xbf16>, vector<8x256xbf16>, vector<8x256xbf16> -> vector<24x256xbf16>
    %62 = tpu.concatenate %44, %61 in 1 : vector<24x256xbf16>, vector<24x256xbf16> -> vector<24x512xbf16>
    %c0_34 = arith.constant 0 : index
    %c0_35 = arith.constant 0 : index
    %c0_36 = arith.constant 0 : index
    %63 = vector.load %arg2[%c0_34, %c0_35, %c0_36] : memref<3x8x24xbf16, #tpu.memory_space<vmem>>, vector<1x8x24xbf16>
    %64 = vector.shape_cast %63 : vector<1x8x24xbf16> to vector<8x24xbf16>
    %cst_37 = arith.constant dense<0.000000e+00> : vector<8x512xf32>
    %65 = tpu.matmul %64, %62, %cst_37 {dimension_numbers = #tpu.dot_dimension_numbers<[1], [0], [0], [1], [0, 0, 1, 1], [], []>} : vector<8x24xbf16>, vector<24x512xbf16>, vector<8x512xf32> -> vector<8x512xf32>
    %66 = arith.addf %27, %65 : vector<8x512xf32>
    %c0_38 = arith.constant 0 : index
    %c0_39 = arith.constant 0 : index
    %c16 = arith.constant 16 : index
    %67 = vector.load %arg11[%c0_38, %c0_39, %c16] : memref<2x8x290xbf16, #tpu.memory_space<vmem>>, vector<1x8x256xbf16>
    %68 = vector.shape_cast %67 : vector<1x8x256xbf16> to vector<8x256xbf16>
    %c0_40 = arith.constant 0 : index
    %c0_41 = arith.constant 0 : index
    %c17_42 = arith.constant 17 : index
    %69 = vector.load %arg11[%c0_40, %c0_41, %c17_42] : memref<2x8x290xbf16, #tpu.memory_space<vmem>>, vector<1x8x256xbf16>
    %70 = vector.shape_cast %69 : vector<1x8x256xbf16> to vector<8x256xbf16>
    %c0_43 = arith.constant 0 : index
    %c0_44 = arith.constant 0 : index
    %c18 = arith.constant 18 : index
    %71 = vector.load %arg11[%c0_43, %c0_44, %c18] : memref<2x8x290xbf16, #tpu.memory_space<vmem>>, vector<1x8x256xbf16>
    %72 = vector.shape_cast %71 : vector<1x8x256xbf16> to vector<8x256xbf16>
    %c0_i32_45 = arith.constant 0 : i32
    %73 = arith.sitofp %c0_i32_45 : i32 to bf16
    %74 = vector.shape_cast %18 : vector<1x256xi1> to vector<1x256xi1>
    %75 = vector.broadcast %74 : vector<1x256xi1> to vector<8x256xi1>
    %76 = vector.broadcast %73 : bf16 to vector<8x256xbf16>
    %77 = arith.select %75, %68, %76 : vector<8x256xi1>, vector<8x256xbf16>
    %c0_i32_46 = arith.constant 0 : i32
    %78 = arith.sitofp %c0_i32_46 : i32 to bf16
    %79 = vector.shape_cast %20 : vector<1x256xi1> to vector<1x256xi1>
    %80 = vector.broadcast %79 : vector<1x256xi1> to vector<8x256xi1>
    %81 = vector.broadcast %78 : bf16 to vector<8x256xbf16>
    %82 = arith.select %80, %72, %81 : vector<8x256xi1>, vector<8x256xbf16>
    %83 = tpu.concatenate %77, %70, %82 in 0 : vector<8x256xbf16>, vector<8x256xbf16>, vector<8x256xbf16> -> vector<24x256xbf16>
    %c1_47 = arith.constant 1 : index
    %c0_48 = arith.constant 0 : index
    %c16_49 = arith.constant 16 : index
    %84 = vector.load %arg11[%c1_47, %c0_48, %c16_49] : memref<2x8x290xbf16, #tpu.memory_space<vmem>>, vector<1x8x256xbf16>
    %85 = vector.shape_cast %84 : vector<1x8x256xbf16> to vector<8x256xbf16>
    %c1_50 = arith.constant 1 : index
    %c0_51 = arith.constant 0 : index
    %c17_52 = arith.constant 17 : index
    %86 = vector.load %arg11[%c1_50, %c0_51, %c17_52] : memref<2x8x290xbf16, #tpu.memory_space<vmem>>, vector<1x8x256xbf16>
    %87 = vector.shape_cast %86 : vector<1x8x256xbf16> to vector<8x256xbf16>
    %c1_53 = arith.constant 1 : index
    %c0_54 = arith.constant 0 : index
    %c18_55 = arith.constant 18 : index
    %88 = vector.load %arg11[%c1_53, %c0_54, %c18_55] : memref<2x8x290xbf16, #tpu.memory_space<vmem>>, vector<1x8x256xbf16>
    %89 = vector.shape_cast %88 : vector<1x8x256xbf16> to vector<8x256xbf16>
    %c0_i32_56 = arith.constant 0 : i32
    %90 = arith.sitofp %c0_i32_56 : i32 to bf16
    %91 = vector.shape_cast %18 : vector<1x256xi1> to vector<1x256xi1>
    %92 = vector.broadcast %91 : vector<1x256xi1> to vector<8x256xi1>
    %93 = vector.broadcast %90 : bf16 to vector<8x256xbf16>
    %94 = arith.select %92, %85, %93 : vector<8x256xi1>, vector<8x256xbf16>
    %c0_i32_57 = arith.constant 0 : i32
    %95 = arith.sitofp %c0_i32_57 : i32 to bf16
    %96 = vector.shape_cast %20 : vector<1x256xi1> to vector<1x256xi1>
    %97 = vector.broadcast %96 : vector<1x256xi1> to vector<8x256xi1>
    %98 = vector.broadcast %95 : bf16 to vector<8x256xbf16>
    %99 = arith.select %97, %89, %98 : vector<8x256xi1>, vector<8x256xbf16>
    %100 = tpu.concatenate %94, %87, %99 in 0 : vector<8x256xbf16>, vector<8x256xbf16>, vector<8x256xbf16> -> vector<24x256xbf16>
    %101 = tpu.concatenate %83, %100 in 1 : vector<24x256xbf16>, vector<24x256xbf16> -> vector<24x512xbf16>
    %c1_58 = arith.constant 1 : index
    %c0_59 = arith.constant 0 : index
    %c0_60 = arith.constant 0 : index
    %102 = vector.load %arg2[%c1_58, %c0_59, %c0_60] : memref<3x8x24xbf16, #tpu.memory_space<vmem>>, vector<1x8x24xbf16>
    %103 = vector.shape_cast %102 : vector<1x8x24xbf16> to vector<8x24xbf16>
    %cst_61 = arith.constant dense<0.000000e+00> : vector<8x512xf32>
    %104 = tpu.matmul %103, %101, %cst_61 {dimension_numbers = #tpu.dot_dimension_numbers<[1], [0], [0], [1], [0, 0, 1, 1], [], []>} : vector<8x24xbf16>, vector<24x512xbf16>, vector<8x512xf32> -> vector<8x512xf32>
    %105 = arith.addf %66, %104 : vector<8x512xf32>
    %c0_62 = arith.constant 0 : index
    %c0_63 = arith.constant 0 : index
    %c32 = arith.constant 32 : index
    %106 = vector.load %arg11[%c0_62, %c0_63, %c32] : memref<2x8x290xbf16, #tpu.memory_space<vmem>>, vector<1x8x256xbf16>
    %107 = vector.shape_cast %106 : vector<1x8x256xbf16> to vector<8x256xbf16>
    %c0_64 = arith.constant 0 : index
    %c0_65 = arith.constant 0 : index
    %c33 = arith.constant 33 : index
    %108 = vector.load %arg11[%c0_64, %c0_65, %c33] : memref<2x8x290xbf16, #tpu.memory_space<vmem>>, vector<1x8x256xbf16>
    %109 = vector.shape_cast %108 : vector<1x8x256xbf16> to vector<8x256xbf16>
    %c0_66 = arith.constant 0 : index
    %c0_67 = arith.constant 0 : index
    %c34 = arith.constant 34 : index
    %110 = vector.load %arg11[%c0_66, %c0_67, %c34] : memref<2x8x290xbf16, #tpu.memory_space<vmem>>, vector<1x8x256xbf16>
    %111 = vector.shape_cast %110 : vector<1x8x256xbf16> to vector<8x256xbf16>
    %c0_i32_68 = arith.constant 0 : i32
    %112 = arith.sitofp %c0_i32_68 : i32 to bf16
    %113 = vector.shape_cast %18 : vector<1x256xi1> to vector<1x256xi1>
    %114 = vector.broadcast %113 : vector<1x256xi1> to vector<8x256xi1>
    %115 = vector.broadcast %112 : bf16 to vector<8x256xbf16>
    %116 = arith.select %114, %107, %115 : vector<8x256xi1>, vector<8x256xbf16>
    %c0_i32_69 = arith.constant 0 : i32
    %117 = arith.sitofp %c0_i32_69 : i32 to bf16
    %118 = vector.shape_cast %20 : vector<1x256xi1> to vector<1x256xi1>
    %119 = vector.broadcast %118 : vector<1x256xi1> to vector<8x256xi1>
    %120 = vector.broadcast %117 : bf16 to vector<8x256xbf16>
    %121 = arith.select %119, %111, %120 : vector<8x256xi1>, vector<8x256xbf16>
    %122 = tpu.concatenate %116, %109, %121 in 0 : vector<8x256xbf16>, vector<8x256xbf16>, vector<8x256xbf16> -> vector<24x256xbf16>
    %c1_70 = arith.constant 1 : index
    %c0_71 = arith.constant 0 : index
    %c32_72 = arith.constant 32 : index
    %123 = vector.load %arg11[%c1_70, %c0_71, %c32_72] : memref<2x8x290xbf16, #tpu.memory_space<vmem>>, vector<1x8x256xbf16>
    %124 = vector.shape_cast %123 : vector<1x8x256xbf16> to vector<8x256xbf16>
    %c1_73 = arith.constant 1 : index
    %c0_74 = arith.constant 0 : index
    %c33_75 = arith.constant 33 : index
    %125 = vector.load %arg11[%c1_73, %c0_74, %c33_75] : memref<2x8x290xbf16, #tpu.memory_space<vmem>>, vector<1x8x256xbf16>
    %126 = vector.shape_cast %125 : vector<1x8x256xbf16> to vector<8x256xbf16>
    %c1_76 = arith.constant 1 : index
    %c0_77 = arith.constant 0 : index
    %c34_78 = arith.constant 34 : index
    %127 = vector.load %arg11[%c1_76, %c0_77, %c34_78] : memref<2x8x290xbf16, #tpu.memory_space<vmem>>, vector<1x8x256xbf16>
    %128 = vector.shape_cast %127 : vector<1x8x256xbf16> to vector<8x256xbf16>
    %c0_i32_79 = arith.constant 0 : i32
    %129 = arith.sitofp %c0_i32_79 : i32 to bf16
    %130 = vector.shape_cast %18 : vector<1x256xi1> to vector<1x256xi1>
    %131 = vector.broadcast %130 : vector<1x256xi1> to vector<8x256xi1>
    %132 = vector.broadcast %129 : bf16 to vector<8x256xbf16>
    %133 = arith.select %131, %124, %132 : vector<8x256xi1>, vector<8x256xbf16>
    %c0_i32_80 = arith.constant 0 : i32
    %134 = arith.sitofp %c0_i32_80 : i32 to bf16
    %135 = vector.shape_cast %20 : vector<1x256xi1> to vector<1x256xi1>
    %136 = vector.broadcast %135 : vector<1x256xi1> to vector<8x256xi1>
    %137 = vector.broadcast %134 : bf16 to vector<8x256xbf16>
    %138 = arith.select %136, %128, %137 : vector<8x256xi1>, vector<8x256xbf16>
    %139 = tpu.concatenate %133, %126, %138 in 0 : vector<8x256xbf16>, vector<8x256xbf16>, vector<8x256xbf16> -> vector<24x256xbf16>
    %140 = tpu.concatenate %122, %139 in 1 : vector<24x256xbf16>, vector<24x256xbf16> -> vector<24x512xbf16>
    %c2_81 = arith.constant 2 : index
    %c0_82 = arith.constant 0 : index
    %c0_83 = arith.constant 0 : index
    %141 = vector.load %arg2[%c2_81, %c0_82, %c0_83] : memref<3x8x24xbf16, #tpu.memory_space<vmem>>, vector<1x8x24xbf16>
    %142 = vector.shape_cast %141 : vector<1x8x24xbf16> to vector<8x24xbf16>
    %cst_84 = arith.constant dense<0.000000e+00> : vector<8x512xf32>
    %143 = tpu.matmul %142, %140, %cst_84 {dimension_numbers = #tpu.dot_dimension_numbers<[1], [0], [0], [1], [0, 0, 1, 1], [], []>} : vector<8x24xbf16>, vector<24x512xbf16>, vector<8x512xf32> -> vector<8x512xf32>
    %144 = arith.addf %105, %143 : vector<8x512xf32>
    %c0_85 = arith.constant 0 : index
    %c0_86 = arith.constant 0 : index
    %145 = vector.load %arg3[%c0_85, %c0_86] : memref<8x1xf32, #tpu.memory_space<vmem>>, vector<8x1xf32>
    %146 = vector.broadcast %145 : vector<8x1xf32> to vector<8x512xf32>
    %147 = arith.addf %144, %146 : vector<8x512xf32>
    %cst_87 = arith.constant 0.000000e+00 : f32
    %148 = vector.broadcast %cst_87 : f32 to vector<8x512xf32>
    %149 = arith.maximumf %147, %148 : vector<8x512xf32>
    %150 = vector.extract_strided_slice %149 {offsets = [0, 0], sizes = [8, 256], strides = [1, 1]} : vector<8x512xf32> to vector<8x256xf32>
    %151 = arith.truncf %150 : vector<8x256xf32> to vector<8x256xbf16>
    %c0_88 = arith.constant 0 : index
    %c0_89 = arith.constant 0 : index
    %c17_90 = arith.constant 17 : index
    %152 = vector.load %arg11[%c0_88, %c0_89, %c17_90] : memref<2x8x290xbf16, #tpu.memory_space<vmem>>, vector<1x8x256xbf16>
    %153 = vector.shape_cast %152 : vector<1x8x256xbf16> to vector<8x256xbf16>
    %154 = vector.shape_cast %151 : vector<8x256xbf16> to vector<1x8x256xbf16>
    tpu.vector_store %arg11[%c0_88, %c0_89, %c17_90], %154 {strides = array<i32>} : memref<2x8x290xbf16, #tpu.memory_space<vmem>>, vector<1x8x256xbf16>,
    %155 = vector.extract_strided_slice %149 {offsets = [0, 256], sizes = [8, 256], strides = [1, 1]} : vector<8x512xf32> to vector<8x256xf32>
    %156 = arith.truncf %155 : vector<8x256xf32> to vector<8x256xbf16>
    %c1_91 = arith.constant 1 : index
    %c0_92 = arith.constant 0 : index
    %c17_93 = arith.constant 17 : index
    %157 = vector.load %arg11[%c1_91, %c0_92, %c17_93] : memref<2x8x290xbf16, #tpu.memory_space<vmem>>, vector<1x8x256xbf16>
    %158 = vector.shape_cast %157 : vector<1x8x256xbf16> to vector<8x256xbf16>
    %159 = vector.shape_cast %156 : vector<8x256xbf16> to vector<1x8x256xbf16>
    tpu.vector_store %arg11[%c1_91, %c0_92, %c17_93], %159 {strides = array<i32>} : memref<2x8x290xbf16, #tpu.memory_space<vmem>>, vector<1x8x256xbf16>,
    %cst_94 = arith.constant 0.000000e+00 : f32
    %160 = vector.broadcast %cst_94 : f32 to vector<8x512xf32>
    %c0_95 = arith.constant 0 : index
    %c0_96 = arith.constant 0 : index
    %c0_97 = arith.constant 0 : index
    %161 = vector.load %arg11[%c0_95, %c0_96, %c0_97] : memref<2x8x290xbf16, #tpu.memory_space<vmem>>, vector<1x8x256xbf16>
    %162 = vector.shape_cast %161 : vector<1x8x256xbf16> to vector<8x256xbf16>
    %c0_98 = arith.constant 0 : index
    %c0_99 = arith.constant 0 : index
    %c1_100 = arith.constant 1 : index
    %163 = vector.load %arg11[%c0_98, %c0_99, %c1_100] : memref<2x8x290xbf16, #tpu.memory_space<vmem>>, vector<1x8x256xbf16>
    %164 = vector.shape_cast %163 : vector<1x8x256xbf16> to vector<8x256xbf16>
    %c0_101 = arith.constant 0 : index
    %c0_102 = arith.constant 0 : index
    %c2_103 = arith.constant 2 : index
    %165 = vector.load %arg11[%c0_101, %c0_102, %c2_103] : memref<2x8x290xbf16, #tpu.memory_space<vmem>>, vector<1x8x256xbf16>
    %166 = vector.shape_cast %165 : vector<1x8x256xbf16> to vector<8x256xbf16>
    %c0_i32_104 = arith.constant 0 : i32
    %167 = arith.sitofp %c0_i32_104 : i32 to bf16
    %168 = vector.shape_cast %18 : vector<1x256xi1> to vector<1x256xi1>
    %169 = vector.broadcast %168 : vector<1x256xi1> to vector<8x256xi1>
    %170 = vector.broadcast %167 : bf16 to vector<8x256xbf16>
    %171 = arith.select %169, %162, %170 : vector<8x256xi1>, vector<8x256xbf16>
    %c0_i32_105 = arith.constant 0 : i32
    %172 = arith.sitofp %c0_i32_105 : i32 to bf16
    %173 = vector.shape_cast %20 : vector<1x256xi1> to vector<1x256xi1>
    %174 = vector.broadcast %173 : vector<1x256xi1> to vector<8x256xi1>
    %175 = vector.broadcast %172 : bf16 to vector<8x256xbf16>
    %176 = arith.select %174, %166, %175 : vector<8x256xi1>, vector<8x256xbf16>
    %177 = tpu.concatenate %171, %164, %176 in 0 : vector<8x256xbf16>, vector<8x256xbf16>, vector<8x256xbf16> -> vector<24x256xbf16>
    %c1_106 = arith.constant 1 : index
    %c0_107 = arith.constant 0 : index
    %c0_108 = arith.constant 0 : index
    %178 = vector.load %arg11[%c1_106, %c0_107, %c0_108] : memref<2x8x290xbf16, #tpu.memory_space<vmem>>, vector<1x8x256xbf16>
    %179 = vector.shape_cast %178 : vector<1x8x256xbf16> to vector<8x256xbf16>
    %c1_109 = arith.constant 1 : index
    %c0_110 = arith.constant 0 : index
    %c1_111 = arith.constant 1 : index
    %180 = vector.load %arg11[%c1_109, %c0_110, %c1_111] : memref<2x8x290xbf16, #tpu.memory_space<vmem>>, vector<1x8x256xbf16>
    %181 = vector.shape_cast %180 : vector<1x8x256xbf16> to vector<8x256xbf16>
    %c1_112 = arith.constant 1 : index
    %c0_113 = arith.constant 0 : index
    %c2_114 = arith.constant 2 : index
    %182 = vector.load %arg11[%c1_112, %c0_113, %c2_114] : memref<2x8x290xbf16, #tpu.memory_space<vmem>>, vector<1x8x256xbf16>
    %183 = vector.shape_cast %182 : vector<1x8x256xbf16> to vector<8x256xbf16>
    %c0_i32_115 = arith.constant 0 : i32
    %184 = arith.sitofp %c0_i32_115 : i32 to bf16
    %185 = vector.shape_cast %18 : vector<1x256xi1> to vector<1x256xi1>
    %186 = vector.broadcast %185 : vector<1x256xi1> to vector<8x256xi1>
    %187 = vector.broadcast %184 : bf16 to vector<8x256xbf16>
    %188 = arith.select %186, %179, %187 : vector<8x256xi1>, vector<8x256xbf16>
    %c0_i32_116 = arith.constant 0 : i32
    %189 = arith.sitofp %c0_i32_116 : i32 to bf16
    %190 = vector.shape_cast %20 : vector<1x256xi1> to vector<1x256xi1>
    %191 = vector.broadcast %190 : vector<1x256xi1> to vector<8x256xi1>
    %192 = vector.broadcast %189 : bf16 to vector<8x256xbf16>
    %193 = arith.select %191, %183, %192 : vector<8x256xi1>, vector<8x256xbf16>
    %194 = tpu.concatenate %188, %181, %193 in 0 : vector<8x256xbf16>, vector<8x256xbf16>, vector<8x256xbf16> -> vector<24x256xbf16>
    %195 = tpu.concatenate %177, %194 in 1 : vector<24x256xbf16>, vector<24x256xbf16> -> vector<24x512xbf16>
    %c0_117 = arith.constant 0 : index
    %c0_118 = arith.constant 0 : index
    %c0_119 = arith.constant 0 : index
    %196 = vector.load %arg4[%c0_117, %c0_118, %c0_119] : memref<3x8x24xbf16, #tpu.memory_space<vmem>>, vector<1x8x24xbf16>
    %197 = vector.shape_cast %196 : vector<1x8x24xbf16> to vector<8x24xbf16>
    %cst_120 = arith.constant dense<0.000000e+00> : vector<8x512xf32>
    %198 = tpu.matmul %197, %195, %cst_120 {dimension_numbers = #tpu.dot_dimension_numbers<[1], [0], [0], [1], [0, 0, 1, 1], [], []>} : vector<8x24xbf16>, vector<24x512xbf16>, vector<8x512xf32> -> vector<8x512xf32>
    %199 = arith.addf %160, %198 : vector<8x512xf32>
    %c0_121 = arith.constant 0 : index
    %c0_122 = arith.constant 0 : index
    %c16_123 = arith.constant 16 : index
    %200 = vector.load %arg11[%c0_121, %c0_122, %c16_123] : memref<2x8x290xbf16, #tpu.memory_space<vmem>>, vector<1x8x256xbf16>
    %201 = vector.shape_cast %200 : vector<1x8x256xbf16> to vector<8x256xbf16>
    %c0_124 = arith.constant 0 : index
    %c0_125 = arith.constant 0 : index
    %c17_126 = arith.constant 17 : index
    %202 = vector.load %arg11[%c0_124, %c0_125, %c17_126] : memref<2x8x290xbf16, #tpu.memory_space<vmem>>, vector<1x8x256xbf16>
    %203 = vector.shape_cast %202 : vector<1x8x256xbf16> to vector<8x256xbf16>
    %c0_127 = arith.constant 0 : index
    %c0_128 = arith.constant 0 : index
    %c18_129 = arith.constant 18 : index
    %204 = vector.load %arg11[%c0_127, %c0_128, %c18_129] : memref<2x8x290xbf16, #tpu.memory_space<vmem>>, vector<1x8x256xbf16>
    %205 = vector.shape_cast %204 : vector<1x8x256xbf16> to vector<8x256xbf16>
    %c0_i32_130 = arith.constant 0 : i32
    %206 = arith.sitofp %c0_i32_130 : i32 to bf16
    %207 = vector.shape_cast %18 : vector<1x256xi1> to vector<1x256xi1>
    %208 = vector.broadcast %207 : vector<1x256xi1> to vector<8x256xi1>
    %209 = vector.broadcast %206 : bf16 to vector<8x256xbf16>
    %210 = arith.select %208, %201, %209 : vector<8x256xi1>, vector<8x256xbf16>
    %c0_i32_131 = arith.constant 0 : i32
    %211 = arith.sitofp %c0_i32_131 : i32 to bf16
    %212 = vector.shape_cast %20 : vector<1x256xi1> to vector<1x256xi1>
    %213 = vector.broadcast %212 : vector<1x256xi1> to vector<8x256xi1>
    %214 = vector.broadcast %211 : bf16 to vector<8x256xbf16>
    %215 = arith.select %213, %205, %214 : vector<8x256xi1>, vector<8x256xbf16>
    %216 = tpu.concatenate %210, %203, %215 in 0 : vector<8x256xbf16>, vector<8x256xbf16>, vector<8x256xbf16> -> vector<24x256xbf16>
    %c1_132 = arith.constant 1 : index
    %c0_133 = arith.constant 0 : index
    %c16_134 = arith.constant 16 : index
    %217 = vector.load %arg11[%c1_132, %c0_133, %c16_134] : memref<2x8x290xbf16, #tpu.memory_space<vmem>>, vector<1x8x256xbf16>
    %218 = vector.shape_cast %217 : vector<1x8x256xbf16> to vector<8x256xbf16>
    %c1_135 = arith.constant 1 : index
    %c0_136 = arith.constant 0 : index
    %c17_137 = arith.constant 17 : index
    %219 = vector.load %arg11[%c1_135, %c0_136, %c17_137] : memref<2x8x290xbf16, #tpu.memory_space<vmem>>, vector<1x8x256xbf16>
    %220 = vector.shape_cast %219 : vector<1x8x256xbf16> to vector<8x256xbf16>
    %c1_138 = arith.constant 1 : index
    %c0_139 = arith.constant 0 : index
    %c18_140 = arith.constant 18 : index
    %221 = vector.load %arg11[%c1_138, %c0_139, %c18_140] : memref<2x8x290xbf16, #tpu.memory_space<vmem>>, vector<1x8x256xbf16>
    %222 = vector.shape_cast %221 : vector<1x8x256xbf16> to vector<8x256xbf16>
    %c0_i32_141 = arith.constant 0 : i32
    %223 = arith.sitofp %c0_i32_141 : i32 to bf16
    %224 = vector.shape_cast %18 : vector<1x256xi1> to vector<1x256xi1>
    %225 = vector.broadcast %224 : vector<1x256xi1> to vector<8x256xi1>
    %226 = vector.broadcast %223 : bf16 to vector<8x256xbf16>
    %227 = arith.select %225, %218, %226 : vector<8x256xi1>, vector<8x256xbf16>
    %c0_i32_142 = arith.constant 0 : i32
    %228 = arith.sitofp %c0_i32_142 : i32 to bf16
    %229 = vector.shape_cast %20 : vector<1x256xi1> to vector<1x256xi1>
    %230 = vector.broadcast %229 : vector<1x256xi1> to vector<8x256xi1>
    %231 = vector.broadcast %228 : bf16 to vector<8x256xbf16>
    %232 = arith.select %230, %222, %231 : vector<8x256xi1>, vector<8x256xbf16>
    %233 = tpu.concatenate %227, %220, %232 in 0 : vector<8x256xbf16>, vector<8x256xbf16>, vector<8x256xbf16> -> vector<24x256xbf16>
    %234 = tpu.concatenate %216, %233 in 1 : vector<24x256xbf16>, vector<24x256xbf16> -> vector<24x512xbf16>
    %c1_143 = arith.constant 1 : index
    %c0_144 = arith.constant 0 : index
    %c0_145 = arith.constant 0 : index
    %235 = vector.load %arg4[%c1_143, %c0_144, %c0_145] : memref<3x8x24xbf16, #tpu.memory_space<vmem>>, vector<1x8x24xbf16>
    %236 = vector.shape_cast %235 : vector<1x8x24xbf16> to vector<8x24xbf16>
    %cst_146 = arith.constant dense<0.000000e+00> : vector<8x512xf32>
    %237 = tpu.matmul %236, %234, %cst_146 {dimension_numbers = #tpu.dot_dimension_numbers<[1], [0], [0], [1], [0, 0, 1, 1], [], []>} : vector<8x24xbf16>, vector<24x512xbf16>, vector<8x512xf32> -> vector<8x512xf32>
    %238 = arith.addf %199, %237 : vector<8x512xf32>
    %c0_147 = arith.constant 0 : index
    %c0_148 = arith.constant 0 : index
    %c32_149 = arith.constant 32 : index
    %239 = vector.load %arg11[%c0_147, %c0_148, %c32_149] : memref<2x8x290xbf16, #tpu.memory_space<vmem>>, vector<1x8x256xbf16>
    %240 = vector.shape_cast %239 : vector<1x8x256xbf16> to vector<8x256xbf16>
    %c0_150 = arith.constant 0 : index
    %c0_151 = arith.constant 0 : index
    %c33_152 = arith.constant 33 : index
    %241 = vector.load %arg11[%c0_150, %c0_151, %c33_152] : memref<2x8x290xbf16, #tpu.memory_space<vmem>>, vector<1x8x256xbf16>
    %242 = vector.shape_cast %241 : vector<1x8x256xbf16> to vector<8x256xbf16>
    %c0_153 = arith.constant 0 : index
    %c0_154 = arith.constant 0 : index
    %c34_155 = arith.constant 34 : index
    %243 = vector.load %arg11[%c0_153, %c0_154, %c34_155] : memref<2x8x290xbf16, #tpu.memory_space<vmem>>, vector<1x8x256xbf16>
    %244 = vector.shape_cast %243 : vector<1x8x256xbf16> to vector<8x256xbf16>
    %c0_i32_156 = arith.constant 0 : i32
    %245 = arith.sitofp %c0_i32_156 : i32 to bf16
    %246 = vector.shape_cast %18 : vector<1x256xi1> to vector<1x256xi1>
    %247 = vector.broadcast %246 : vector<1x256xi1> to vector<8x256xi1>
    %248 = vector.broadcast %245 : bf16 to vector<8x256xbf16>
    %249 = arith.select %247, %240, %248 : vector<8x256xi1>, vector<8x256xbf16>
    %c0_i32_157 = arith.constant 0 : i32
    %250 = arith.sitofp %c0_i32_157 : i32 to bf16
    %251 = vector.shape_cast %20 : vector<1x256xi1> to vector<1x256xi1>
    %252 = vector.broadcast %251 : vector<1x256xi1> to vector<8x256xi1>
    %253 = vector.broadcast %250 : bf16 to vector<8x256xbf16>
    %254 = arith.select %252, %244, %253 : vector<8x256xi1>, vector<8x256xbf16>
    %255 = tpu.concatenate %249, %242, %254 in 0 : vector<8x256xbf16>, vector<8x256xbf16>, vector<8x256xbf16> -> vector<24x256xbf16>
    %c1_158 = arith.constant 1 : index
    %c0_159 = arith.constant 0 : index
    %c32_160 = arith.constant 32 : index
    %256 = vector.load %arg11[%c1_158, %c0_159, %c32_160] : memref<2x8x290xbf16, #tpu.memory_space<vmem>>, vector<1x8x256xbf16>
    %257 = vector.shape_cast %256 : vector<1x8x256xbf16> to vector<8x256xbf16>
    %c1_161 = arith.constant 1 : index
    %c0_162 = arith.constant 0 : index
    %c33_163 = arith.constant 33 : index
    %258 = vector.load %arg11[%c1_161, %c0_162, %c33_163] : memref<2x8x290xbf16, #tpu.memory_space<vmem>>, vector<1x8x256xbf16>
    %259 = vector.shape_cast %258 : vector<1x8x256xbf16> to vector<8x256xbf16>
    %c1_164 = arith.constant 1 : index
    %c0_165 = arith.constant 0 : index
    %c34_166 = arith.constant 34 : index
    %260 = vector.load %arg11[%c1_164, %c0_165, %c34_166] : memref<2x8x290xbf16, #tpu.memory_space<vmem>>, vector<1x8x256xbf16>
    %261 = vector.shape_cast %260 : vector<1x8x256xbf16> to vector<8x256xbf16>
    %c0_i32_167 = arith.constant 0 : i32
    %262 = arith.sitofp %c0_i32_167 : i32 to bf16
    %263 = vector.shape_cast %18 : vector<1x256xi1> to vector<1x256xi1>
    %264 = vector.broadcast %263 : vector<1x256xi1> to vector<8x256xi1>
    %265 = vector.broadcast %262 : bf16 to vector<8x256xbf16>
    %266 = arith.select %264, %257, %265 : vector<8x256xi1>, vector<8x256xbf16>
    %c0_i32_168 = arith.constant 0 : i32
    %267 = arith.sitofp %c0_i32_168 : i32 to bf16
    %268 = vector.shape_cast %20 : vector<1x256xi1> to vector<1x256xi1>
    %269 = vector.broadcast %268 : vector<1x256xi1> to vector<8x256xi1>
    %270 = vector.broadcast %267 : bf16 to vector<8x256xbf16>
    %271 = arith.select %269, %261, %270 : vector<8x256xi1>, vector<8x256xbf16>
    %272 = tpu.concatenate %266, %259, %271 in 0 : vector<8x256xbf16>, vector<8x256xbf16>, vector<8x256xbf16> -> vector<24x256xbf16>
    %273 = tpu.concatenate %255, %272 in 1 : vector<24x256xbf16>, vector<24x256xbf16> -> vector<24x512xbf16>
    %c2_169 = arith.constant 2 : index
    %c0_170 = arith.constant 0 : index
    %c0_171 = arith.constant 0 : index
    %274 = vector.load %arg4[%c2_169, %c0_170, %c0_171] : memref<3x8x24xbf16, #tpu.memory_space<vmem>>, vector<1x8x24xbf16>
    %275 = vector.shape_cast %274 : vector<1x8x24xbf16> to vector<8x24xbf16>
    %cst_172 = arith.constant dense<0.000000e+00> : vector<8x512xf32>
    %276 = tpu.matmul %275, %273, %cst_172 {dimension_numbers = #tpu.dot_dimension_numbers<[1], [0], [0], [1], [0, 0, 1, 1], [], []>} : vector<8x24xbf16>, vector<24x512xbf16>, vector<8x512xf32> -> vector<8x512xf32>
    %277 = arith.addf %238, %276 : vector<8x512xf32>
    %c0_173 = arith.constant 0 : index
    %c0_174 = arith.constant 0 : index
    %278 = vector.load %arg5[%c0_173, %c0_174] : memref<8x1xf32, #tpu.memory_space<vmem>>, vector<8x1xf32>
    %279 = vector.broadcast %278 : vector<8x1xf32> to vector<8x512xf32>
    %280 = arith.addf %277, %279 : vector<8x512xf32>
    %cst_175 = arith.constant 0.000000e+00 : f32
    %281 = vector.broadcast %cst_175 : f32 to vector<8x512xf32>
    %282 = arith.maximumf %280, %281 : vector<8x512xf32>
    %283 = vector.extract_strided_slice %282 {offsets = [0, 0], sizes = [8, 256], strides = [1, 1]} : vector<8x512xf32> to vector<8x256xf32>
    %cst_176 = arith.constant dense<0.000000e+00> : vector<8xf32>
    %284 = vector.multi_reduction <add>, %283, %cst_176 [1] : vector<8x256xf32> to vector<8xf32>
    %285 = vector.shape_cast %284 : vector<8xf32> to vector<8x1xf32>
    %cst_177 = arith.constant 2.560000e+02 : f32
    %286 = vector.broadcast %cst_177 : f32 to vector<8x1xf32>
    %287 = arith.divf %285, %286 : vector<8x1xf32>
    %288 = vector.extract_strided_slice %282 {offsets = [0, 256], sizes = [8, 256], strides = [1, 1]} : vector<8x512xf32> to vector<8x256xf32>
    %cst_178 = arith.constant dense<0.000000e+00> : vector<8xf32>
    %289 = vector.multi_reduction <add>, %288, %cst_178 [1] : vector<8x256xf32> to vector<8xf32>
    %290 = vector.shape_cast %289 : vector<8xf32> to vector<8x1xf32>
    %cst_179 = arith.constant 2.560000e+02 : f32
    %291 = vector.broadcast %cst_179 : f32 to vector<8x1xf32>
    %292 = arith.divf %290, %291 : vector<8x1xf32>
    %293 = tpu.concatenate %287, %292 in 1 : vector<8x1xf32>, vector<8x1xf32> -> vector<8x2xf32>
    %c0_180 = arith.constant 0 : index
    %c0_181 = arith.constant 0 : index
    %294 = vector.load %arg6[%c0_180, %c0_181] : memref<2x8xbf16, #tpu.memory_space<vmem>>, vector<2x8xbf16>
    %295 = arith.truncf %293 : vector<8x2xf32> to vector<8x2xbf16>
    %cst_182 = arith.constant dense<0.000000e+00> : vector<2x2xf32>
    %296 = tpu.matmul %294, %295, %cst_182 {dimension_numbers = #tpu.dot_dimension_numbers<[1], [0], [0], [1], [0, 0, 1, 1], [], []>} : vector<2x8xbf16>, vector<8x2xbf16>, vector<2x2xf32> -> vector<2x2xf32>
    %c0_183 = arith.constant 0 : index
    %c0_184 = arith.constant 0 : index
    %297 = vector.load %arg7[%c0_183, %c0_184] : memref<2x1xf32, #tpu.memory_space<vmem>>, vector<2x1xf32>
    %298 = vector.broadcast %297 : vector<2x1xf32> to vector<2x2xf32>
    %299 = arith.addf %296, %298 : vector<2x2xf32>
    %cst_185 = arith.constant 0.000000e+00 : f32
    %300 = vector.broadcast %cst_185 : f32 to vector<2x2xf32>
    %301 = arith.maximumf %299, %300 : vector<2x2xf32>
    %c0_186 = arith.constant 0 : index
    %c0_187 = arith.constant 0 : index
    %302 = vector.load %arg8[%c0_186, %c0_187] : memref<8x2xbf16, #tpu.memory_space<vmem>>, vector<8x2xbf16>
    %303 = arith.truncf %301 : vector<2x2xf32> to vector<2x2xbf16>
    %cst_188 = arith.constant dense<0.000000e+00> : vector<8x2xf32>
    %304 = tpu.matmul %302, %303, %cst_188 {dimension_numbers = #tpu.dot_dimension_numbers<[1], [0], [0], [1], [0, 0, 1, 1], [], []>} : vector<8x2xbf16>, vector<2x2xbf16>, vector<8x2xf32> -> vector<8x2xf32>
    %c0_189 = arith.constant 0 : index
    %c0_190 = arith.constant 0 : index
    %305 = vector.load %arg9[%c0_189, %c0_190] : memref<8x1xf32, #tpu.memory_space<vmem>>, vector<8x1xf32>
    %306 = vector.broadcast %305 : vector<8x1xf32> to vector<8x2xf32>
    %307 = arith.addf %304, %306 : vector<8x2xf32>
    %308 = arith.negf %307 : vector<8x2xf32>
    %309 = math.exp %308 : vector<8x2xf32>
    %cst_191 = arith.constant 1.000000e+00 : f32
    %310 = vector.broadcast %cst_191 : f32 to vector<8x2xf32>
    %311 = arith.addf %310, %309 : vector<8x2xf32>
    %312 = arith.divf %310, %311 : vector<8x2xf32>
    %313 = vector.extract_strided_slice %282 {offsets = [0, 0], sizes = [8, 256], strides = [1, 1]} : vector<8x512xf32> to vector<8x256xf32>
    %314 = vector.extract_strided_slice %312 {offsets = [0, 0], sizes = [8, 1], strides = [1, 1]} : vector<8x2xf32> to vector<8x1xf32>
    %315 = vector.broadcast %314 : vector<8x1xf32> to vector<8x256xf32>
    %316 = arith.mulf %313, %315 : vector<8x256xf32>
    %c0_192 = arith.constant 0 : index
    %c0_193 = arith.constant 0 : index
    %c0_194 = arith.constant 0 : index
    %317 = vector.load %arg1[%c0_192, %c0_193, %c0_194] : memref<2x8x256xf32, #tpu.memory_space<vmem>>, vector<1x8x256xf32>
    %318 = vector.shape_cast %317 : vector<1x8x256xf32> to vector<8x256xf32>
    %319 = arith.addf %316, %318 : vector<8x256xf32>
    %cst_195 = arith.constant 0.000000e+00 : f32
    %320 = vector.broadcast %cst_195 : f32 to vector<8x256xf32>
    %321 = arith.maximumf %319, %320 : vector<8x256xf32>
    %c0_196 = arith.constant 0 : index
    %c0_197 = arith.constant 0 : index
    %c0_198 = arith.constant 0 : index
    %322 = vector.load %arg10[%c0_196, %c0_197, %c0_198] : memref<2x8x256xf32, #tpu.memory_space<vmem>>, vector<1x8x256xf32>
    %323 = vector.shape_cast %322 : vector<1x8x256xf32> to vector<8x256xf32>
    %324 = vector.shape_cast %321 : vector<8x256xf32> to vector<1x8x256xf32>
    tpu.vector_store %arg10[%c0_196, %c0_197, %c0_198], %324 {strides = array<i32>} : memref<2x8x256xf32, #tpu.memory_space<vmem>>, vector<1x8x256xf32>,
    %325 = vector.extract_strided_slice %282 {offsets = [0, 256], sizes = [8, 256], strides = [1, 1]} : vector<8x512xf32> to vector<8x256xf32>
    %326 = vector.extract_strided_slice %312 {offsets = [0, 1], sizes = [8, 1], strides = [1, 1]} : vector<8x2xf32> to vector<8x1xf32>
    %327 = vector.broadcast %326 : vector<8x1xf32> to vector<8x256xf32>
    %328 = arith.mulf %325, %327 : vector<8x256xf32>
    %c1_199 = arith.constant 1 : index
    %c0_200 = arith.constant 0 : index
    %c0_201 = arith.constant 0 : index
    %329 = vector.load %arg1[%c1_199, %c0_200, %c0_201] : memref<2x8x256xf32, #tpu.memory_space<vmem>>, vector<1x8x256xf32>
    %330 = vector.shape_cast %329 : vector<1x8x256xf32> to vector<8x256xf32>
    %331 = arith.addf %328, %330 : vector<8x256xf32>
    %cst_202 = arith.constant 0.000000e+00 : f32
    %332 = vector.broadcast %cst_202 : f32 to vector<8x256xf32>
    %333 = arith.maximumf %331, %332 : vector<8x256xf32>
    %c1_203 = arith.constant 1 : index
    %c0_204 = arith.constant 0 : index
    %c0_205 = arith.constant 0 : index
    %334 = vector.load %arg10[%c1_203, %c0_204, %c0_205] : memref<2x8x256xf32, #tpu.memory_space<vmem>>, vector<1x8x256xf32>
    %335 = vector.shape_cast %334 : vector<1x8x256xf32> to vector<8x256xf32>
    %336 = vector.shape_cast %333 : vector<8x256xf32> to vector<1x8x256xf32>
    tpu.vector_store %arg10[%c1_203, %c0_204, %c0_205], %336 {strides = array<i32>} : memref<2x8x256xf32, #tpu.memory_space<vmem>>, vector<1x8x256xf32>,
    return
  }
  func.func @transform_0(%arg0: i32) -> (i32, i32, i32) {
    %c0_i32 = arith.constant 0 : i32
    %c0_i32_0 = arith.constant 0 : i32
    %c0_i32_1 = arith.constant 0 : i32
    return %arg0, %c0_i32, %c0_i32_0 : i32, i32, i32
  }
  func.func @transform_1(%arg0: i32) -> (i32, i32, i32) {
    %c0_i32 = arith.constant 0 : i32
    %c0_i32_0 = arith.constant 0 : i32
    %c0_i32_1 = arith.constant 0 : i32
    %c0_i32_2 = arith.constant 0 : i32
    return %c0_i32, %c0_i32_0, %c0_i32_1 : i32, i32, i32
  }
  func.func @transform_2(%arg0: i32) -> (i32, i32) {
    %c0_i32 = arith.constant 0 : i32
    %c0_i32_0 = arith.constant 0 : i32
    %c0_i32_1 = arith.constant 0 : i32
    return %c0_i32, %c0_i32_0 : i32, i32
  }
  func.func @transform_3(%arg0: i32) -> (i32, i32, i32) {
    %c0_i32 = arith.constant 0 : i32
    %c0_i32_0 = arith.constant 0 : i32
    %c0_i32_1 = arith.constant 0 : i32
    %c0_i32_2 = arith.constant 0 : i32
    return %c0_i32, %c0_i32_0, %c0_i32_1 : i32, i32, i32
  }
  func.func @transform_4(%arg0: i32) -> (i32, i32) {
    %c0_i32 = arith.constant 0 : i32
    %c0_i32_0 = arith.constant 0 : i32
    %c0_i32_1 = arith.constant 0 : i32
    return %c0_i32, %c0_i32_0 : i32, i32
  }
  func.func @transform_5(%arg0: i32) -> (i32, i32) {
    %c0_i32 = arith.constant 0 : i32
    %c0_i32_0 = arith.constant 0 : i32
    %c0_i32_1 = arith.constant 0 : i32
    return %c0_i32, %c0_i32_0 : i32, i32
  }
  func.func @transform_6(%arg0: i32) -> (i32, i32) {
    %c0_i32 = arith.constant 0 : i32
    %c0_i32_0 = arith.constant 0 : i32
    %c0_i32_1 = arith.constant 0 : i32
    return %c0_i32, %c0_i32_0 : i32, i32
  }
  func.func @transform_7(%arg0: i32) -> (i32, i32) {
    %c0_i32 = arith.constant 0 : i32
    %c0_i32_0 = arith.constant 0 : i32
    %c0_i32_1 = arith.constant 0 : i32
    return %c0_i32, %c0_i32_0 : i32, i32
  }
  func.func @transform_8(%arg0: i32) -> (i32, i32) {
    %c0_i32 = arith.constant 0 : i32
    %c0_i32_0 = arith.constant 0 : i32
    %c0_i32_1 = arith.constant 0 : i32
    return %c0_i32, %c0_i32_0 : i32, i32
  }
  func.func @transform_9(%arg0: i32) -> (i32, i32, i32) {
    %c0_i32 = arith.constant 0 : i32
    %c0_i32_0 = arith.constant 0 : i32
    %c0_i32_1 = arith.constant 0 : i32
    return %arg0, %c0_i32, %c0_i32_0 : i32, i32, i32
  }
}

</mosaic_0001>

<llo_original>
// kernel: tpu_custom_call.1
$region0: #{tpu_custom_call.1}
  #allocation0 [shape = 'u32[]', space=smem, size = 0x4, offset = 0x4, fixed_abs, tag = 'smem constant byte address 0x4 - core index']
  #allocation1 [shape = 'u32[144,128]{1,0:T(1,128)}', space=vmem, size = 0x12000, scoped, tag = 'internal scratch']
  #allocation2 [shape = 'bf16[2,8,290]{2,1,0:T(8,128)(2,1)}', space=vmem, size = 0x3000, scoped, tag = 'scratch operand']
  %s0 = inlined_call_operand.hbm [shape: f32[4,8,256], index: 0, kind: input, shape index: {}]
  %s1 = inlined_call_operand.vmem [shape: bf16[3,8,24], index: 1, kind: input, shape index: {}]
  %s2 = inlined_call_operand.vmem [shape: f32[8,1], index: 2, kind: input, shape index: {}]
  %s3 = inlined_call_operand.vmem [shape: bf16[3,8,24], index: 3, kind: input, shape index: {}]
  %s4 = inlined_call_operand.vmem [shape: f32[8,1], index: 4, kind: input, shape index: {}]
  %s5 = inlined_call_operand.vmem [shape: bf16[2,8], index: 5, kind: input, shape index: {}]
  %s6 = inlined_call_operand.vmem [shape: f32[2,1], index: 6, kind: input, shape index: {}]
  %s7 = inlined_call_operand.vmem [shape: bf16[8,2], index: 7, kind: input, shape index: {}]
  %s8 = inlined_call_operand.vmem [shape: f32[8,1], index: 8, kind: input, shape index: {}]
  %s9 = inlined_call_operand.hbm [shape: f32[4,8,256], index: 9, kind: output, shape index: {}]
  %s10 = sld [smem:[#allocation0]]
  $region73: #{tpu_custom_call.1} parent=0
    _
  %s12 = ssub.s32 1, %s10
  %s13 = scalar_select 0, %s12, %s10
  $region1: #{tpu_custom_call.1} parent=0
    #allocation3 [shape = 'u8[32768]{0}', space=vmem, size = 0x8000, scoped, tag = 'input window, operand 0']
    #allocation4 [shape = 's32[2]{0}', space=sflag, size = 0x8, scoped, tag = 'scoped memory for tpu_custom_call.1']
    #allocation5 [shape = 's32[2]{0}', space=sflag, size = 0x8, scoped, tag = 'scoped memory for tpu_custom_call.1']
    #allocation6 [shape = 'u8[32768]{0}', space=vmem, size = 0x8000, scoped, tag = 'output window, operand 0']
    %14 = vsyncpa [#allocation4], 0
    %s15 = scalar_lea.sflag [#allocation4], 1
    %16 = vsyncpa %s15, 0
    %17 = vsyncpa [#allocation5], 0
    %s18 = scalar_lea.sflag [#allocation5], 1
    %19 = vsyncpa %s18, 0
    loop: start=0, step=1, limit=4
    $region2: #{tpu_custom_call.1} parent=1 // loop_pre_header
      _
    $region3: #{tpu_custom_call.1} parent=1 // loop_header
      %s21 = sphi 0, %s25
      %p22 = scmp.ge.s32.totalorder %s21, 4
      %s31 = sphi 0, %s33
      %s34 = sphi 0, %s31
      %s35 = sphi 0, %s34
      %s51 = sphi 0, %s35
      %s55 = sphi 0, %s55
      %s57 = sphi 0, %s55
      %s58 = sphi 0, %s57
      %s72 = sphi 0, %s58
      %s76 = sphi 0, %s76
      %s78 = sphi 0, %s76
      %s79 = sphi 0, %s78
      %s93 = sphi 0, %s79
      %s97 = sphi 0, %s97
      %s99 = sphi 0, %s97
      %s100 = sphi 0, %s99
      %s114 = sphi 0, %s100
      %s118 = sphi 0, %s118
      %s120 = sphi 0, %s118
      %s121 = sphi 0, %s120
      %s135 = sphi 0, %s121
      %s139 = sphi 0, %s139
      %s141 = sphi 0, %s139
      %s142 = sphi 0, %s141
      %s156 = sphi 0, %s142
      %s160 = sphi 0, %s160
      %s162 = sphi 0, %s160
      %s163 = sphi 0, %s162
      %s177 = sphi 0, %s163
      %s181 = sphi 0, %s181
      %s183 = sphi 0, %s181
      %s184 = sphi 0, %s183
      %s198 = sphi 0, %s184
      %s202 = sphi 0, %s202
      %s204 = sphi 0, %s202
      %s205 = sphi 0, %s204
      %s219 = sphi 0, %s205
      %s225 = sphi 0, %s227
      %s228 = sphi 0, %s225
      %s229 = sphi 0, %s228
      %s245 = sphi 0, %s229
    $region4: #{tpu_custom_call.1} parent=1 // loop_header_branch
      %24 = sbr.rel (%p22) target = $region8
    $region5: #{tpu_custom_call.1} parent=1 // loop_body
      %s26 = ssub.s32 %s21, 1
      %s27 = ssub.s32 %s21, 2
      %s28 = sadd.s32 %s21, 1
      %s29 = ssub.s32 %s21, %s28
      %p30 = scmp.eq.s32.totalorder %s29, 0
      %s32 = sadd.s32 %s31, 1
      %s33 = scalar_select %p30, %s31, %s32
      %p36 = pneg %p30
      %p37 = scmp.eq.s32.totalorder %s21, 1
      %p38 = por %p36, %p37
      %p39 = scmp.ne.s32.totalorder %s31, %s34
      %p40 = scmp.eq.s32.totalorder %s21, 0
      %p41 = por %p39, %p40
      %p42 = scmp.ne.s32.totalorder %s31, %s34
      %p43 = scmp.eq.s32.totalorder %s26, 1
      %p44 = por %p42, %p43
      %p45 = scmp.ne.s32.totalorder %s34, %s35
      %p46 = scmp.eq.s32.totalorder %s26, 0
      %p47 = por %p45, %p46
      %p48 = scmp.ne.s32.totalorder %s34, %s35
      %p49 = scmp.eq.s32.totalorder %s27, 1
      %p50 = por %p48, %p49
      %p52 = scmp.ne.s32.totalorder %s35, %s51
      %p53 = scmp.eq.s32.totalorder %s27, 0
      %p54 = por %p52, %p53
      %s56 = sadd.s32 %s55, 1
      %p59 = scmp.eq.s32.totalorder %s21, 1
      %p60 = scmp.ne.s32.totalorder %s55, %s57
      %p61 = scmp.eq.s32.totalorder %s21, 0
      %p62 = por %p60, %p61
      %p63 = scmp.ne.s32.totalorder %s55, %s57
      %p64 = scmp.eq.s32.totalorder %s26, 1
      %p65 = por %p63, %p64
      %p66 = scmp.ne.s32.totalorder %s57, %s58
      %p67 = scmp.eq.s32.totalorder %s26, 0
      %p68 = por %p66, %p67
      %p69 = scmp.ne.s32.totalorder %s57, %s58
      %p70 = scmp.eq.s32.totalorder %s27, 1
      %p71 = por %p69, %p70
      %p73 = scmp.ne.s32.totalorder %s58, %s72
      %p74 = scmp.eq.s32.totalorder %s27, 0
      %p75 = por %p73, %p74
      %s77 = sadd.s32 %s76, 1
      %p80 = scmp.eq.s32.totalorder %s21, 1
      %p81 = scmp.ne.s32.totalorder %s76, %s78
      %p82 = scmp.eq.s32.totalorder %s21, 0
      %p83 = por %p81, %p82
      %p84 = scmp.ne.s32.totalorder %s76, %s78
      %p85 = scmp.eq.s32.totalorder %s26, 1
      %p86 = por %p84, %p85
      %p87 = scmp.ne.s32.totalorder %s78, %s79
      %p88 = scmp.eq.s32.totalorder %s26, 0
      %p89 = por %p87, %p88
      %p90 = scmp.ne.s32.totalorder %s78, %s79
      %p91 = scmp.eq.s32.totalorder %s27, 1
      %p92 = por %p90, %p91
      %p94 = scmp.ne.s32.totalorder %s79, %s93
      %p95 = scmp.eq.s32.totalorder %s27, 0
      %p96 = por %p94, %p95
      %s98 = sadd.s32 %s97, 1
      %p101 = scmp.eq.s32.totalorder %s21, 1
      %p102 = scmp.ne.s32.totalorder %s97, %s99
      %p103 = scmp.eq.s32.totalorder %s21, 0
      %p104 = por %p102, %p103
      %p105 = scmp.ne.s32.totalorder %s97, %s99
      %p106 = scmp.eq.s32.totalorder %s26, 1
      %p107 = por %p105, %p106
      %p108 = scmp.ne.s32.totalorder %s99, %s100
      %p109 = scmp.eq.s32.totalorder %s26, 0
      %p110 = por %p108, %p109
      %p111 = scmp.ne.s32.totalorder %s99, %s100
      %p112 = scmp.eq.s32.totalorder %s27, 1
      %p113 = por %p111, %p112
      %p115 = scmp.ne.s32.totalorder %s100, %s114
      %p116 = scmp.eq.s32.totalorder %s27, 0
      %p117 = por %p115, %p116
      %s119 = sadd.s32 %s118, 1
      %p122 = scmp.eq.s32.totalorder %s21, 1
      %p123 = scmp.ne.s32.totalorder %s118, %s120
      %p124 = scmp.eq.s32.totalorder %s21, 0
      %p125 = por %p123, %p124
      %p126 = scmp.ne.s32.totalorder %s118, %s120
      %p127 = scmp.eq.s32.totalorder %s26, 1
      %p128 = por %p126, %p127
      %p129 = scmp.ne.s32.totalorder %s120, %s121
      %p130 = scmp.eq.s32.totalorder %s26, 0
      %p131 = por %p129, %p130
      %p132 = scmp.ne.s32.totalorder %s120, %s121
      %p133 = scmp.eq.s32.totalorder %s27, 1
      %p134 = por %p132, %p133
      %p136 = scmp.ne.s32.totalorder %s121, %s135
      %p137 = scmp.eq.s32.totalorder %s27, 0
      %p138 = por %p136, %p137
      %s140 = sadd.s32 %s139, 1
      %p143 = scmp.eq.s32.totalorder %s21, 1
      %p144 = scmp.ne.s32.totalorder %s139, %s141
      %p145 = scmp.eq.s32.totalorder %s21, 0
      %p146 = por %p144, %p145
      %p147 = scmp.ne.s32.totalorder %s139, %s141
      %p148 = scmp.eq.s32.totalorder %s26, 1
      %p149 = por %p147, %p148
      %p150 = scmp.ne.s32.totalorder %s141, %s142
      %p151 = scmp.eq.s32.totalorder %s26, 0
      %p152 = por %p150, %p151
      %p153 = scmp.ne.s32.totalorder %s141, %s142
      %p154 = scmp.eq.s32.totalorder %s27, 1
      %p155 = por %p153, %p154
      %p157 = scmp.ne.s32.totalorder %s142, %s156
      %p158 = scmp.eq.s32.totalorder %s27, 0
      %p159 = por %p157, %p158
      %s161 = sadd.s32 %s160, 1
      %p164 = scmp.eq.s32.totalorder %s21, 1
      %p165 = scmp.ne.s32.totalorder %s160, %s162
      %p166 = scmp.eq.s32.totalorder %s21, 0
      %p167 = por %p165, %p166
      %p168 = scmp.ne.s32.totalorder %s160, %s162
      %p169 = scmp.eq.s32.totalorder %s26, 1
      %p170 = por %p168, %p169
      %p171 = scmp.ne.s32.totalorder %s162, %s163
      %p172 = scmp.eq.s32.totalorder %s26, 0
      %p173 = por %p171, %p172
      %p174 = scmp.ne.s32.totalorder %s162, %s163
      %p175 = scmp.eq.s32.totalorder %s27, 1
      %p176 = por %p174, %p175
      %p178 = scmp.ne.s32.totalorder %s163, %s177
      %p179 = scmp.eq.s32.totalorder %s27, 0
      %p180 = por %p178, %p179
      %s182 = sadd.s32 %s181, 1
      %p185 = scmp.eq.s32.totalorder %s21, 1
      %p186 = scmp.ne.s32.totalorder %s181, %s183
      %p187 = scmp.eq.s32.totalorder %s21, 0
      %p188 = por %p186, %p187
      %p189 = scmp.ne.s32.totalorder %s181, %s183
      %p190 = scmp.eq.s32.totalorder %s26, 1
      %p191 = por %p189, %p190
      %p192 = scmp.ne.s32.totalorder %s183, %s184
      %p193 = scmp.eq.s32.totalorder %s26, 0
      %p194 = por %p192, %p193
      %p195 = scmp.ne.s32.totalorder %s183, %s184
      %p196 = scmp.eq.s32.totalorder %s27, 1
      %p197 = por %p195, %p196
      %p199 = scmp.ne.s32.totalorder %s184, %s198
      %p200 = scmp.eq.s32.totalorder %s27, 0
      %p201 = por %p199, %p200
      %s203 = sadd.s32 %s202, 1
      %p206 = scmp.eq.s32.totalorder %s21, 1
      %p207 = scmp.ne.s32.totalorder %s202, %s204
      %p208 = scmp.eq.s32.totalorder %s21, 0
      %p209 = por %p207, %p208
      %p210 = scmp.ne.s32.totalorder %s202, %s204
      %p211 = scmp.eq.s32.totalorder %s26, 1
      %p212 = por %p210, %p211
      %p213 = scmp.ne.s32.totalorder %s204, %s205
      %p214 = scmp.eq.s32.totalorder %s26, 0
      %p215 = por %p213, %p214
      %p216 = scmp.ne.s32.totalorder %s204, %s205
      %p217 = scmp.eq.s32.totalorder %s27, 1
      %p218 = por %p216, %p217
      %p220 = scmp.ne.s32.totalorder %s205, %s219
      %p221 = scmp.eq.s32.totalorder %s27, 0
      %p222 = por %p220, %p221
      %s223 = ssub.s32 %s21, %s28
      %p224 = scmp.eq.s32.totalorder %s223, 0
      %s226 = sadd.s32 %s225, 1
      %s227 = scalar_select %p224, %s225, %s226
      %p230 = pneg %p224
      %p231 = scmp.eq.s32.totalorder %s21, 1
      %p232 = por %p230, %p231
      %p233 = scmp.ne.s32.totalorder %s225, %s228
      %p234 = scmp.eq.s32.totalorder %s21, 0
      %p235 = por %p233, %p234
      %p236 = scmp.ne.s32.totalorder %s225, %s228
      %p237 = scmp.eq.s32.totalorder %s26, 1
      %p238 = por %p236, %p237
      %p239 = scmp.ne.s32.totalorder %s228, %s229
      %p240 = scmp.eq.s32.totalorder %s26, 0
      %p241 = por %p239, %p240
      %p242 = scmp.ne.s32.totalorder %s228, %s229
      %p243 = scmp.eq.s32.totalorder %s27, 1
      %p244 = por %p242, %p243
      %p246 = scmp.ne.s32.totalorder %s229, %s245
      %p247 = scmp.eq.s32.totalorder %s27, 0
      %p248 = por %p246, %p247
      %p249 = scmp.le.s32.totalorder 1, %s21
      %p250 = scmp.lt.s32.totalorder %s21, 3
      %p251 = pnand %p249, %p250
      %p252 = pneg %p251
      // Predicated region
      $region9: #{tpu_custom_call.1} parent=5 // pred_check
        _
      $region10: #{tpu_custom_call.1} parent=5 // pred_check_branch
        %254 = sbr.rel (%p251) target = $region12
      $region11: #{tpu_custom_call.1} parent=5 // pred_region
        %s255 = ssub.s32 %s21, 1
        // Predicated region
        $region13: #{tpu_custom_call.1} parent=11 // pred_check
          %p256 = pneg %p68
        $region14: #{tpu_custom_call.1} parent=11 // pred_check_branch
          %258 = sbr.rel (%p256) target = $region16
        $region15: #{tpu_custom_call.1} parent=11 // pred_region
          _
        $region16: #{tpu_custom_call.1} parent=11 // pred_fallthru
          _
        // Predicated region
        $region17: #{tpu_custom_call.1} parent=11 // pred_check
          %p259 = pneg %p89
        $region18: #{tpu_custom_call.1} parent=11 // pred_check_branch
          %261 = sbr.rel (%p259) target = $region20
        $region19: #{tpu_custom_call.1} parent=11 // pred_region
          _
        $region20: #{tpu_custom_call.1} parent=11 // pred_fallthru
          _
        // Predicated region
        $region21: #{tpu_custom_call.1} parent=11 // pred_check
          %p262 = pneg %p110
        $region22: #{tpu_custom_call.1} parent=11 // pred_check_branch
          %264 = sbr.rel (%p262) target = $region24
        $region23: #{tpu_custom_call.1} parent=11 // pred_region
          _
        $region24: #{tpu_custom_call.1} parent=11 // pred_fallthru
          _
        // Predicated region
        $region25: #{tpu_custom_call.1} parent=11 // pred_check
          %p265 = pneg %p131
        $region26: #{tpu_custom_call.1} parent=11 // pred_check_branch
          %267 = sbr.rel (%p265) target = $region28
        $region27: #{tpu_custom_call.1} parent=11 // pred_region
          _
        $region28: #{tpu_custom_call.1} parent=11 // pred_fallthru
          _
        // Predicated region
        $region29: #{tpu_custom_call.1} parent=11 // pred_check
          %p268 = pneg %p152
        $region30: #{tpu_custom_call.1} parent=11 // pred_check_branch
          %270 = sbr.rel (%p268) target = $region32
        $region31: #{tpu_custom_call.1} parent=11 // pred_region
          _
        $region32: #{tpu_custom_call.1} parent=11 // pred_fallthru
          _
        // Predicated region
        $region33: #{tpu_custom_call.1} parent=11 // pred_check
          %p271 = pneg %p173
        $region34: #{tpu_custom_call.1} parent=11 // pred_check_branch
          %273 = sbr.rel (%p271) target = $region36
        $region35: #{tpu_custom_call.1} parent=11 // pred_region
          _
        $region36: #{tpu_custom_call.1} parent=11 // pred_fallthru
          _
        // Predicated region
        $region37: #{tpu_custom_call.1} parent=11 // pred_check
          %p274 = pneg %p194
        $region38: #{tpu_custom_call.1} parent=11 // pred_check_branch
          %276 = sbr.rel (%p274) target = $region40
        $region39: #{tpu_custom_call.1} parent=11 // pred_region
          _
        $region40: #{tpu_custom_call.1} parent=11 // pred_fallthru
          _
        // Predicated region
        $region41: #{tpu_custom_call.1} parent=11 // pred_check
          %p277 = pneg %p215
        $region42: #{tpu_custom_call.1} parent=11 // pred_check_branch
          %279 = sbr.rel (%p277) target = $region44
        $region43: #{tpu_custom_call.1} parent=11 // pred_region
          _
        $region44: #{tpu_custom_call.1} parent=11 // pred_fallthru
          _
      $region12: #{tpu_custom_call.1} parent=5 // pred_fallthru
        _
      %p280 = scmp.lt.s32.totalorder %s21, 2
      // Predicated region
      $region45: #{tpu_custom_call.1} parent=5 // pred_check
        %p281 = pneg %p280
      $region46: #{tpu_custom_call.1} parent=5 // pred_check_branch
        %283 = sbr.rel (%p281) target = $region48
      $region47: #{tpu_custom_call.1} parent=5 // pred_region
        // Predicated region
        $region49: #{tpu_custom_call.1} parent=47 // pred_check
          %p284 = pneg %p41
        $region50: #{tpu_custom_call.1} parent=47 // pred_check_branch
          %286 = sbr.rel (%p284) target = $region52
        $region51: #{tpu_custom_call.1} parent=47 // pred_region
          %s287 = sand.u32 %s31, 1
          %s288 = scalar_lea.sflag [#allocation4], %s287
          %s289 = sand.u32 %s31, 1
          %s290 = smul.addr %s289, 32
          %s291 = scalar_lea.vmem [#allocation3], %s290
          %s292 = smul.u32 2, %s21
          %s294 = ssub.s32 512, 512
          %295 = vsyncadd %s288, %s294
          %s296 = smul.addr %s292, 2
          %s297 = smul.addr %s296, 128
          %s298 = scalar_lea.hbm %s0, %s297
          %s299 = sshll.u32 %s291, 4
          %s300 = int_to_ptr.vmem [resolvable:$true] %s299
          %305 = dma.hbm_to_vmem [thread:$0]  %s298, 512, %s300, %s288, 256, 256, 16
        $region52: #{tpu_custom_call.1} parent=47 // pred_fallthru
          _
      $region48: #{tpu_custom_call.1} parent=5 // pred_fallthru
        _
      %p306 = scmp.le.s32.totalorder 1, %s21
      %p307 = scmp.lt.s32.totalorder %s21, 3
      %p308 = pnand %p306, %p307
      %p309 = pneg %p308
      // Predicated region
      $region53: #{tpu_custom_call.1} parent=5 // pred_check
        _
      $region54: #{tpu_custom_call.1} parent=5 // pred_check_branch
        %311 = sbr.rel (%p308) target = $region56
      $region55: #{tpu_custom_call.1} parent=5 // pred_region
        %s312 = ssub.s32 %s21, 1
        %s313 = sand.u32 %s34, 1
        %s314 = scalar_lea.sflag [#allocation4], %s313
        %s315 = sand.u32 %s34, 1
        %s316 = smul.addr %s315, 32
        %s317 = scalar_lea.vmem [#allocation3], %s316
        // Predicated region
        $region57: #{tpu_custom_call.1} parent=55 // pred_check
          %p318 = pneg %p47
        $region58: #{tpu_custom_call.1} parent=55 // pred_check_branch
          %320 = sbr.rel (%p318) target = $region60
        $region59: #{tpu_custom_call.1} parent=55 // pred_region
          %321 = dma.done %s314, 512
        $region60: #{tpu_custom_call.1} parent=55 // pred_fallthru
          _
        %s322 = sand.u32 %s34, 1
        %s323 = scalar_lea.sflag [#allocation4], %s322
        %s324 = sand.u32 %s34, 1
        %s325 = smul.addr %s324, 32
        %s326 = scalar_lea.vmem [#allocation3], %s325
        %p327 = pneg %p47
        %p328 = pneg %p44
        %p329 = pneg %p68
        %p330 = pneg %p65
        %p331 = pneg %p89
        %p332 = pneg %p86
        %p333 = pneg %p110
        %p334 = pneg %p107
        %p335 = pneg %p131
        %p336 = pneg %p128
        %p337 = pneg %p152
        %p338 = pneg %p149
        %p339 = pneg %p173
        %p340 = pneg %p170
        %p341 = pneg %p194
        %p342 = pneg %p191
        %p343 = pneg %p215
        %p344 = pneg %p212
        %p345 = pneg %p241
        %p346 = pneg %p238
        %s347 = sand.u32 %s228, 1
        %s348 = scalar_lea.sflag [#allocation5], %s347
        %s349 = sand.u32 %s228, 1
        %s350 = smul.addr %s349, 32
        %s351 = scalar_lea.vmem [#allocation6], %s350
        %s352 = smul.u32 2, %s26
        %s353 = smul.u32 2, %s26
        %v357 = vlaneseq
        %v358 = vand.u32 %v357, 127
        %v359 = vadd.s32 %v358, 128
        %vm360 = vcmp.lt.s32.totalorder %v358, 0
        %v361 = vsub.s32 0, %v358
        %v362 = vsel %vm360, %v361, %v358
        %v363 = vshrl.u32 %v362, 4
        %v364 = vand.u32 %v362, 15
        %v365 = vsub.s32 0, %v364
        %v366 = vsel %vm360, %v365, %v364
        %vm367 = vcmp.lt.s32.totalorder %v359, 0
        %v368 = vsub.s32 0, %v359
        %v369 = vsel %vm367, %v368, %v359
        %v370 = vshrl.u32 %v369, 4
        %v371 = vand.u32 %v369, 15
        %v372 = vsub.s32 0, %v371
        %v373 = vsel %vm367, %v372, %v371
        %vm374 = vcmp.ne.s32.totalorder %v366, 0
        %vm375 = vcmp.ne.s32.totalorder %v373, 0
        %vm376 = vcmp.lt.s32.totalorder %v366, 0
        %vm377 = vcmp.lt.s32.totalorder %v373, 0
        %vm378 = vmand %vm376, %vm374
        %vm379 = vmand %vm377, %vm375
        %v380 = vadd.s32 %v366, 16
        %v381 = vadd.s32 %v373, 16
        %v382 = vsel %vm378, %v380, %v366
        %v383 = vsel %vm379, %v381, %v373
        %vm384 = vcmp.ne.s32.totalorder %v382, 0
        %vm385 = vcmp.ne.s32.totalorder %v383, 0
        %vm386 = vcmp.ne.s32.totalorder %v382, 15
        %vm387 = vcmp.ne.s32.totalorder %v383, 15
        %vm388 = vcmask 134144
        %389 = vst.msk [vmem:[#allocation2] sm:$0xf] %vm388, 0
        %390 = vst.msk [vmem:[#allocation2 + $0xc] sm:$0xf] %vm388, 0
        %vm391 = vcmask 273544
        %392 = vst.msk [vmem:[#allocation2 + $0x8] sm:$0xf] %vm391, 0
        %393 = vst.msk [vmem:[#allocation2 + $0x14] sm:$0xf] %vm391, 0
        %v394 = vld [vmem:[%s317] sm:$0xff]
        %v395 = vld [vmem:[%s317 + $0x8] sm:$0xff]
        %v396 = vld [vmem:[%s317 + $0x10] sm:$0xff]
        %v397 = vld [vmem:[%s317 + $0x18] sm:$0xff]
        %v398 = vpack.c.bf16 %v394, %v394
        %v399 = vpack.c.bf16 %v395, %v395
        %v400 = vpack.c.bf16 %v396, %v396
        %v401 = vpack.c.bf16 %v397, %v397
        %v406 = vunpack.c.l.b16 %v398
        %v407 = vunpack.c.l.b16 %v399
        %v408 = vunpack.c.l.b16 %v400
        %v409 = vunpack.c.l.b16 %v401
        %v410 = vpack.c.b16 %v407, %v406
        %v411 = vpack.c.b16 %v409, %v408
        %412 = vrot.lane.b32.xlu0 %v410, 17
        %v413 = vpop.permute.xlu0 %412
        %414 = vrot.lane.b32.xlu0 %v411, 17
        %v415 = vpop.permute.xlu0 %414
        %v416 = vrot.slane %v413, 4
        %v417 = vrot.slane %v415, 4
        %vm418 = vcmask 138240
        %v419 = vsel %vm418, %v416, %v413
        %v420 = vsel %vm418, %v417, %v415
        %vm425 = vcmask 1043592
        %vm426 = vcmask 1047556
        %vm427 = vmor %vm426, %vm425
        %428 = vst.msk [vmem:[#allocation2] sm:$0xff] %vm427, %v419
        %429 = vst.msk [vmem:[#allocation2 + $0x8] sm:$0xf] %vm388, %v416
        %430 = vst.msk [vmem:[#allocation2 + $0xc] sm:$0xff] %vm427, %v420
        %431 = vst.msk [vmem:[#allocation2 + $0x14] sm:$0xf] %vm388, %v417
        %v432 = vld [vmem:[#allocation2] sm:$0xff]
        %v433 = vld [vmem:[#allocation2 + $0x8] sm:$0xf]
        %v434 = vsel %vm384, 1, 0
        %v435 = vsel %vm385, 1, 0
        %vm436 = vcmp.eq.s32.totalorder %v434, 1
        %vm437 = vcmp.eq.s32.totalorder %v435, 1
        %vm438 = vmpackc.low %vm437, %vm436
        %v439 = vsel %vm438, %v432, 0
        %v440 = vsel %vm386, 1, 0
        %v441 = vsel %vm387, 1, 0
        %vm442 = vcmp.eq.s32.totalorder %v440, 1
        %vm443 = vcmp.eq.s32.totalorder %v441, 1
        %vm444 = vmpackc.low %vm443, %vm442
        %v445 = vsel %vm444, 65537, 0
        %446 = vrot.lane.b32.xlu0 %v445, 2
        %v447 = vpop.permute.xlu0 %446
        %v448 = vrot.slane %v447, 4
        %vm449 = vcmask 15360
        %v450 = vsel %vm449, %v448, %v447
        %vm451 = vcmp.ne.s16.totalorder %v450, 0
        %vm452 = vcmp.ne.s16.totalorder %v448, 0
        %v453 = vsel %vm451, %v432, 0
        %v454 = vsel %vm452, %v433, 0
        %v456 = vunpack.c.l.b16 %v439
        %v457 = vunpack.c.h.b16 %v439
        %v458 = vpack.c.b16 %v456, %v456
        %v459 = vpack.c.b16 %v457, %v457
        %v462 = vunpack.c.l.b16 %v432
        %v463 = vunpack.c.h.b16 %v432
        %v464 = vunpack.c.l.b16 %v433
        %v465 = vpack.c.b16 %v462, %v462
        %v466 = vpack.c.b16 %v463, %v463
        %v467 = vpack.c.b16 %v464, %v464
        %468 = vrot.lane.b32.xlu0 %v465, 127
        %v469 = vpop.permute.xlu0 %468
        %470 = vrot.lane.b32.xlu0 %v466, 127
        %v471 = vpop.permute.xlu0 %470
        %472 = vrot.lane.b32.xlu0 %v467, 127
        %v473 = vpop.permute.xlu0 %472
        %vm474 = vcmask 1039360
        %v475 = vsel %vm474, %v469, %v471
        %v476 = vsel %vm474, %v471, %v473
        %v479 = vunpack.c.l.b16 %v453
        %v480 = vunpack.c.h.b16 %v453
        %v481 = vunpack.c.l.b16 %v454
        %v482 = vpack.c.b16 %v479, %v479
        %v483 = vpack.c.b16 %v480, %v480
        %v484 = vpack.c.b16 %v481, %v481
        %485 = vrot.lane.b32.xlu0 %v482, 126
        %v486 = vpop.permute.xlu0 %485
        %487 = vrot.lane.b32.xlu0 %v483, 126
        %v488 = vpop.permute.xlu0 %487
        %489 = vrot.lane.b32.xlu0 %v484, 126
        %v490 = vpop.permute.xlu0 %489
        %vm491 = vcmask 1031168
        %v492 = vsel %vm491, %v486, %v488
        %v493 = vsel %vm491, %v488, %v490
        %vm494 = vcmask 1043456
        %v497 = vsel %vm494, %v458, %v475
        %v501 = vsel %vm494, %v459, %v476
        %s503 = scalar_lea.vmem [#allocation2], 12
        %v504 = vld [vmem:[%s503] sm:$0xff]
        %v505 = vld [vmem:[%s503 + $0x8] sm:$0xf]
        %v506 = vsel %vm438, %v504, 0
        %v507 = vsel %vm451, %v504, 0
        %v508 = vsel %vm452, %v505, 0
        %v510 = vunpack.c.l.b16 %v506
        %v511 = vunpack.c.h.b16 %v506
        %v512 = vpack.c.b16 %v510, %v510
        %v513 = vpack.c.b16 %v511, %v511
        %v516 = vunpack.c.l.b16 %v504
        %v517 = vunpack.c.h.b16 %v504
        %v518 = vunpack.c.l.b16 %v505
        %v519 = vpack.c.b16 %v516, %v516
        %v520 = vpack.c.b16 %v517, %v517
        %v521 = vpack.c.b16 %v518, %v518
        %522 = vrot.lane.b32.xlu0 %v519, 127
        %v523 = vpop.permute.xlu0 %522
        %524 = vrot.lane.b32.xlu0 %v520, 127
        %v525 = vpop.permute.xlu0 %524
        %526 = vrot.lane.b32.xlu0 %v521, 127
        %v527 = vpop.permute.xlu0 %526
        %v528 = vsel %vm474, %v523, %v525
        %v529 = vsel %vm474, %v525, %v527
        %v532 = vunpack.c.l.b16 %v507
        %v533 = vunpack.c.h.b16 %v507
        %v534 = vunpack.c.l.b16 %v508
        %v535 = vpack.c.b16 %v532, %v532
        %v536 = vpack.c.b16 %v533, %v533
        %v537 = vpack.c.b16 %v534, %v534
        %538 = vrot.lane.b32.xlu0 %v535, 126
        %v539 = vpop.permute.xlu0 %538
        %540 = vrot.lane.b32.xlu0 %v536, 126
        %v541 = vpop.permute.xlu0 %540
        %542 = vrot.lane.b32.xlu0 %v537, 126
        %v543 = vpop.permute.xlu0 %542
        %v544 = vsel %vm491, %v539, %v541
        %v545 = vsel %vm491, %v541, %v543
        %v548 = vsel %vm494, %v512, %v528
        %v552 = vsel %vm494, %v513, %v529
        %v554 = vld [vmem:[%s1] sm:$0xf]
        %v555 = vsel %vm438, 65537, 0
        %556 = vrot.lane.b32.xlu0 %v555, 16
        %v557 = vpop.permute.xlu0 %556
        %v558 = vrot.slane %v557, 4
        %vm559 = vcmask 130048
        %v560 = vsel %vm559, %v558, %v557
        %vm561 = vcmp.ne.s16.totalorder %v560, 0
        %vm562 = vcmp.ne.s16.totalorder %v558, 0
        %v563 = vsel %vm561, %v432, 0
        %v564 = vsel %vm562, %v433, 0
        %565 = vrot.lane.b32.xlu0 %v445, 18
        %v566 = vpop.permute.xlu0 %565
        %v567 = vrot.slane %v566, 4
        %vm568 = vcmask 146432
        %v569 = vsel %vm568, %v567, %v566
        %vm570 = vcmp.ne.s16.totalorder %v569, 0
        %vm571 = vcmp.ne.s16.totalorder %v567, 0
        %v572 = vsel %vm570, %v432, 0
        %v573 = vsel %vm571, %v433, 0
        %v576 = vunpack.c.l.b16 %v563
        %v577 = vunpack.c.h.b16 %v563
        %v578 = vunpack.c.l.b16 %v564
        %v579 = vpack.c.b16 %v576, %v576
        %v580 = vpack.c.b16 %v577, %v577
        %v581 = vpack.c.b16 %v578, %v578
        %v584 = vunpack.c.l.b16 %v572
        %v585 = vunpack.c.h.b16 %v572
        %v586 = vunpack.c.l.b16 %v573
        %v587 = vpack.c.b16 %v584, %v584
        %v588 = vpack.c.b16 %v585, %v585
        %v589 = vpack.c.b16 %v586, %v586
        %590 = vrot.lane.b32.xlu0 %v587, 126
        %v591 = vpop.permute.xlu0 %590
        %592 = vrot.lane.b32.xlu0 %v588, 126
        %v593 = vpop.permute.xlu0 %592
        %594 = vrot.lane.b32.xlu0 %v589, 126
        %v595 = vpop.permute.xlu0 %594
        %v596 = vsel %vm491, %v591, %v593
        %v597 = vsel %vm491, %v593, %v595
        %v599 = vsel %vm494, %v579, %v475
        %v601 = vsel %vm494, %v580, %v476
        %v604 = vsel %vm494, %v581, %v473
        %v605 = vsel %vm561, %v504, 0
        %v606 = vsel %vm562, %v505, 0
        %v607 = vsel %vm570, %v504, 0
        %v608 = vsel %vm571, %v505, 0
        %v611 = vunpack.c.l.b16 %v605
        %v612 = vunpack.c.h.b16 %v605
        %v613 = vunpack.c.l.b16 %v606
        %v614 = vpack.c.b16 %v611, %v611
        %v615 = vpack.c.b16 %v612, %v612
        %v616 = vpack.c.b16 %v613, %v613
        %v619 = vunpack.c.l.b16 %v607
        %v620 = vunpack.c.h.b16 %v607
        %v621 = vunpack.c.l.b16 %v608
        %v622 = vpack.c.b16 %v619, %v619
        %v623 = vpack.c.b16 %v620, %v620
        %v624 = vpack.c.b16 %v621, %v621
        %625 = vrot.lane.b32.xlu0 %v622, 126
        %v626 = vpop.permute.xlu0 %625
        %627 = vrot.lane.b32.xlu0 %v623, 126
        %v628 = vpop.permute.xlu0 %627
        %629 = vrot.lane.b32.xlu0 %v624, 126
        %v630 = vpop.permute.xlu0 %629
        %v631 = vsel %vm491, %v626, %v628
        %v632 = vsel %vm491, %v628, %v630
        %v634 = vsel %vm494, %v614, %v528
        %v636 = vsel %vm494, %v615, %v529
        %v639 = vsel %vm494, %v616, %v527
        %643 = vrot.lane.b32.xlu0 %v599, 112
        %v644 = vpop.permute.xlu0 %643
        %645 = vrot.lane.b32.xlu0 %v601, 112
        %v646 = vpop.permute.xlu0 %645
        %647 = vrot.lane.b32.xlu0 %v604, 112
        %v648 = vpop.permute.xlu0 %647
        %649 = vrot.lane.b32.xlu0 %v596, 112
        %v650 = vpop.permute.xlu0 %649
        %651 = vrot.lane.b32.xlu0 %v597, 112
        %v652 = vpop.permute.xlu0 %651
        %653 = vrot.lane.b32.xlu0 %v595, 112
        %v654 = vpop.permute.xlu0 %653
        %vm655 = vcmask 916480
        %v656 = vsel %vm655, %v644, %v646
        %v657 = vsel %vm655, %v646, %v648
        %v658 = vsel %vm655, %v650, %v652
        %v659 = vsel %vm655, %v652, %v654
        %665 = vrot.lane.b32.xlu0 %v634, 112
        %v666 = vpop.permute.xlu0 %665
        %667 = vrot.lane.b32.xlu0 %v636, 112
        %v668 = vpop.permute.xlu0 %667
        %669 = vrot.lane.b32.xlu0 %v639, 112
        %v670 = vpop.permute.xlu0 %669
        %671 = vrot.lane.b32.xlu0 %v631, 112
        %v672 = vpop.permute.xlu0 %671
        %673 = vrot.lane.b32.xlu0 %v632, 112
        %v674 = vpop.permute.xlu0 %673
        %675 = vrot.lane.b32.xlu0 %v630, 112
        %v676 = vpop.permute.xlu0 %675
        %v677 = vsel %vm655, %v666, %v668
        %v678 = vsel %vm655, %v668, %v670
        %v679 = vsel %vm655, %v672, %v674
        %v680 = vsel %vm655, %v674, %v676
        %s683 = scalar_lea.vmem %s1, 4
        %v684 = vld [vmem:[%s683] sm:$0xf]
        %vm685 = vcmask 195584
        %v687 = vsel %vm685, %v684, 0
        %v690 = vsel %vm494, %v658, 0
        %v693 = vsel %vm494, %v659, 0
        %v696 = vsel %vm494, %v679, 0
        %v699 = vsel %vm494, %v680, 0
        %701 = vmatprep.subr.bf16.mxu0 0
        %702 = vmatpush1.bf16.msra.mxu0 0
        %703 = vmatprep.subr.bf16.mxu0 0
        %704 = vmatpush1.bf16.msra.mxu0 0
        %705 = vmatprep.subr.bf16.mxu0 0
        %706 = vmatpush1.bf16.msra.mxu0 0
        %707 = vmatprep.subr.bf16.mxu0 0
        %708 = vmatpush1.bf16.msra.mxu0 0
        %709 = vmatprep.subr.bf16.mxu0 0
        %710 = vmatpush1.bf16.msra.mxu0 0
        %711 = vmatprep.subr.bf16.mxu0 0
        %712 = vmatpush1.bf16.msra.mxu0 0
        %713 = vmatprep.subr.bf16.mxu0 %v693
        %714 = vmatpush1.bf16.msra.mxu0 %v690
        %715 = vmatprep.subr.bf16.mxu0 %v657
        %716 = vmatpush1.bf16.msra.mxu0 %v656
        %717 = vmatprep.subr.bf16.mxu0 0
        %718 = vmatpush2.bf16.msra.mxu0 0
        %719 = vmatprep.subr.bf16.mxu0 0
        %720 = vmatpush2.bf16.msra.mxu0 0
        %721 = vmatprep.subr.bf16.mxu0 0
        %722 = vmatpush2.bf16.msra.mxu0 0
        %723 = vmatprep.subr.bf16.mxu0 0
        %724 = vmatpush2.bf16.msra.mxu0 0
        %725 = vmatprep.subr.bf16.mxu0 0
        %726 = vmatpush2.bf16.msra.mxu0 0
        %727 = vmatprep.subr.bf16.mxu0 0
        %728 = vmatpush2.bf16.msra.mxu0 0
        %729 = vmatprep.subr.bf16.mxu0 0
        %730 = vmatpush2.bf16.msra.mxu0 0
        %731 = vmatprep.subr.bf16.mxu0 0
        %732 = vmatpush2.bf16.msra.mxu0 0
        %733 = vmatprep.mubr.bf16.mxu0 0
        %734 = vmatmul.mubr.bf16.gmra.mxu0 %v687
        %v735 = vpop.f32.mrf.mxu0
        %v736 = vadd.f32 0.0, %v735
        %v737 = vpop.f32.mrf.mxu0
        %v738 = vadd.f32 0.0, %v737
        %v739 = vpop.f32.mrf.mxu0
        %v740 = vpop.f32.mrf.mxu0
        %741 = vdwg.mxu0
        %742 = vmatprep.subr.bf16.mxu0 0
        %743 = vmatpush1.bf16.msra.mxu0 0
        %744 = vmatprep.subr.bf16.mxu0 0
        %745 = vmatpush1.bf16.msra.mxu0 0
        %746 = vmatprep.subr.bf16.mxu0 0
        %747 = vmatpush1.bf16.msra.mxu0 0
        %748 = vmatprep.subr.bf16.mxu0 0
        %749 = vmatpush1.bf16.msra.mxu0 0
        %750 = vmatprep.subr.bf16.mxu0 0
        %751 = vmatpush1.bf16.msra.mxu0 0
        %752 = vmatprep.subr.bf16.mxu0 0
        %753 = vmatpush1.bf16.msra.mxu0 0
        %754 = vmatprep.subr.bf16.mxu0 %v699
        %755 = vmatpush1.bf16.msra.mxu0 %v696
        %756 = vmatprep.subr.bf16.mxu0 %v678
        %757 = vmatpush1.bf16.msra.mxu0 %v677
        %758 = vmatprep.subr.bf16.mxu0 0
        %759 = vmatpush2.bf16.msra.mxu0 0
        %760 = vmatprep.subr.bf16.mxu0 0
        %761 = vmatpush2.bf16.msra.mxu0 0
        %762 = vmatprep.subr.bf16.mxu0 0
        %763 = vmatpush2.bf16.msra.mxu0 0
        %764 = vmatprep.subr.bf16.mxu0 0
        %765 = vmatpush2.bf16.msra.mxu0 0
        %766 = vmatprep.subr.bf16.mxu0 0
        %767 = vmatpush2.bf16.msra.mxu0 0
        %768 = vmatprep.subr.bf16.mxu0 0
        %769 = vmatpush2.bf16.msra.mxu0 0
        %770 = vmatprep.subr.bf16.mxu0 0
        %771 = vmatpush2.bf16.msra.mxu0 0
        %772 = vmatprep.subr.bf16.mxu0 0
        %773 = vmatpush2.bf16.msra.mxu0 0
        %774 = vmatprep.mubr.bf16.mxu0 0
        %775 = vmatmul.mubr.bf16.gmra.mxu0 %v687
        %v776 = vpop.f32.mrf.mxu0
        %v777 = vadd.f32 0.0, %v776
        %v778 = vpop.f32.mrf.mxu0
        %v779 = vadd.f32 0.0, %v778
        %v780 = vpop.f32.mrf.mxu0
        %v781 = vpop.f32.mrf.mxu0
        %782 = vdwg.mxu0
        %v784 = vsel %vm685, %v554, 0
        %v787 = vsel %vm494, %v492, 0
        %v790 = vsel %vm494, %v493, 0
        %v793 = vsel %vm494, %v544, 0
        %v796 = vsel %vm494, %v545, 0
        %798 = vmatprep.subr.bf16.mxu0 0
        %799 = vmatpush1.bf16.msra.mxu0 0
        %800 = vmatprep.subr.bf16.mxu0 0
        %801 = vmatpush1.bf16.msra.mxu0 0
        %802 = vmatprep.subr.bf16.mxu0 0
        %803 = vmatpush1.bf16.msra.mxu0 0
        %804 = vmatprep.subr.bf16.mxu0 0
        %805 = vmatpush1.bf16.msra.mxu0 0
        %806 = vmatprep.subr.bf16.mxu0 0
        %807 = vmatpush1.bf16.msra.mxu0 0
        %808 = vmatprep.subr.bf16.mxu0 0
        %809 = vmatpush1.bf16.msra.mxu0 0
        %810 = vmatprep.subr.bf16.mxu0 %v790
        %811 = vmatpush1.bf16.msra.mxu0 %v787
        %812 = vmatprep.subr.bf16.mxu0 %v501
        %813 = vmatpush1.bf16.msra.mxu0 %v497
        %814 = vmatprep.subr.bf16.mxu0 0
        %815 = vmatpush2.bf16.msra.mxu0 0
        %816 = vmatprep.subr.bf16.mxu0 0
        %817 = vmatpush2.bf16.msra.mxu0 0
        %818 = vmatprep.subr.bf16.mxu0 0
        %819 = vmatpush2.bf16.msra.mxu0 0
        %820 = vmatprep.subr.bf16.mxu0 0
        %821 = vmatpush2.bf16.msra.mxu0 0
        %822 = vmatprep.subr.bf16.mxu0 0
        %823 = vmatpush2.bf16.msra.mxu0 0
        %824 = vmatprep.subr.bf16.mxu0 0
        %825 = vmatpush2.bf16.msra.mxu0 0
        %826 = vmatprep.subr.bf16.mxu0 0
        %827 = vmatpush2.bf16.msra.mxu0 0
        %828 = vmatprep.subr.bf16.mxu0 0
        %829 = vmatpush2.bf16.msra.mxu0 0
        %830 = vmatprep.mubr.bf16.mxu0 0
        %831 = vmatmul.mubr.bf16.gmra.mxu0 %v784
        %v832 = vpop.f32.mrf.mxu0
        %v833 = vadd.f32 %v736, %v832
        %v834 = vpop.f32.mrf.mxu0
        %v835 = vadd.f32 %v738, %v834
        %v836 = vpop.f32.mrf.mxu0
        %v837 = vpop.f32.mrf.mxu0
        %838 = vdwg.mxu0
        %839 = vmatprep.subr.bf16.mxu0 0
        %840 = vmatpush1.bf16.msra.mxu0 0
        %841 = vmatprep.subr.bf16.mxu0 0
        %842 = vmatpush1.bf16.msra.mxu0 0
        %843 = vmatprep.subr.bf16.mxu0 0
        %844 = vmatpush1.bf16.msra.mxu0 0
        %845 = vmatprep.subr.bf16.mxu0 0
        %846 = vmatpush1.bf16.msra.mxu0 0
        %847 = vmatprep.subr.bf16.mxu0 0
        %848 = vmatpush1.bf16.msra.mxu0 0
        %849 = vmatprep.subr.bf16.mxu0 0
        %850 = vmatpush1.bf16.msra.mxu0 0
        %851 = vmatprep.subr.bf16.mxu0 %v796
        %852 = vmatpush1.bf16.msra.mxu0 %v793
        %853 = vmatprep.subr.bf16.mxu0 %v552
        %854 = vmatpush1.bf16.msra.mxu0 %v548
        %855 = vmatprep.subr.bf16.mxu0 0
        %856 = vmatpush2.bf16.msra.mxu0 0
        %857 = vmatprep.subr.bf16.mxu0 0
        %858 = vmatpush2.bf16.msra.mxu0 0
        %859 = vmatprep.subr.bf16.mxu0 0
        %860 = vmatpush2.bf16.msra.mxu0 0
        %861 = vmatprep.subr.bf16.mxu0 0
        %862 = vmatpush2.bf16.msra.mxu0 0
        %863 = vmatprep.subr.bf16.mxu0 0
        %864 = vmatpush2.bf16.msra.mxu0 0
        %865 = vmatprep.subr.bf16.mxu0 0
        %866 = vmatpush2.bf16.msra.mxu0 0
        %867 = vmatprep.subr.bf16.mxu0 0
        %868 = vmatpush2.bf16.msra.mxu0 0
        %869 = vmatprep.subr.bf16.mxu0 0
        %870 = vmatpush2.bf16.msra.mxu0 0
        %871 = vmatprep.mubr.bf16.mxu0 0
        %872 = vmatmul.mubr.bf16.gmra.mxu0 %v784
        %v873 = vpop.f32.mrf.mxu0
        %v874 = vadd.f32 %v777, %v873
        %v875 = vpop.f32.mrf.mxu0
        %v876 = vadd.f32 %v779, %v875
        %v877 = vpop.f32.mrf.mxu0
        %v878 = vpop.f32.mrf.mxu0
        %879 = vdwg.mxu0
        %880 = vrot.lane.b32.xlu0 %v555, 32
        %v881 = vpop.permute.xlu0 %880
        %v882 = vrot.slane %v881, 4
        %vm883 = vcmask 261120
        %v884 = vsel %vm883, %v882, %v881
        %vm885 = vcmp.ne.s16.totalorder %v884, 0
        %vm886 = vcmp.ne.s16.totalorder %v882, 0
        %v887 = vsel %vm885, %v432, 0
        %v888 = vsel %vm886, %v433, 0
        %889 = vrot.lane.b32.xlu0 %v445, 34
        %v890 = vpop.permute.xlu0 %889
        %v891 = vrot.slane %v890, 4
        %vm892 = vcmask 277504
        %v893 = vsel %vm892, %v891, %v890
        %vm894 = vcmp.ne.s16.totalorder %v893, 0
        %vm895 = vcmp.ne.s16.totalorder %v891, 0
        %v896 = vsel %vm894, %v432, 0
        %v897 = vsel %vm895, %v433, 0
        %v900 = vunpack.c.l.b16 %v887
        %v901 = vunpack.c.h.b16 %v887
        %v902 = vunpack.c.l.b16 %v888
        %v903 = vpack.c.b16 %v900, %v900
        %v904 = vpack.c.b16 %v901, %v901
        %v905 = vpack.c.b16 %v902, %v902
        %v908 = vunpack.c.l.b16 %v896
        %v909 = vunpack.c.h.b16 %v896
        %v910 = vunpack.c.l.b16 %v897
        %v911 = vpack.c.b16 %v908, %v908
        %v912 = vpack.c.b16 %v909, %v909
        %v913 = vpack.c.b16 %v910, %v910
        %914 = vrot.lane.b32.xlu0 %v911, 126
        %v915 = vpop.permute.xlu0 %914
        %916 = vrot.lane.b32.xlu0 %v912, 126
        %v917 = vpop.permute.xlu0 %916
        %918 = vrot.lane.b32.xlu0 %v913, 126
        %v919 = vpop.permute.xlu0 %918
        %v920 = vsel %vm491, %v915, %v917
        %v921 = vsel %vm491, %v917, %v919
        %v923 = vsel %vm494, %v903, %v475
        %v925 = vsel %vm494, %v904, %v476
        %v927 = vsel %vm494, %v905, %v473
        %v928 = vsel %vm885, %v504, 0
        %v929 = vsel %vm886, %v505, 0
        %v930 = vsel %vm894, %v504, 0
        %v931 = vsel %vm895, %v505, 0
        %v934 = vunpack.c.l.b16 %v928
        %v935 = vunpack.c.h.b16 %v928
        %v936 = vunpack.c.l.b16 %v929
        %v937 = vpack.c.b16 %v934, %v934
        %v938 = vpack.c.b16 %v935, %v935
        %v939 = vpack.c.b16 %v936, %v936
        %v942 = vunpack.c.l.b16 %v930
        %v943 = vunpack.c.h.b16 %v930
        %v944 = vunpack.c.l.b16 %v931
        %v945 = vpack.c.b16 %v942, %v942
        %v946 = vpack.c.b16 %v943, %v943
        %v947 = vpack.c.b16 %v944, %v944
        %948 = vrot.lane.b32.xlu0 %v945, 126
        %v949 = vpop.permute.xlu0 %948
        %950 = vrot.lane.b32.xlu0 %v946, 126
        %v951 = vpop.permute.xlu0 %950
        %952 = vrot.lane.b32.xlu0 %v947, 126
        %v953 = vpop.permute.xlu0 %952
        %v954 = vsel %vm491, %v949, %v951
        %v955 = vsel %vm491, %v951, %v953
        %v957 = vsel %vm494, %v937, %v528
        %v959 = vsel %vm494, %v938, %v529
        %v961 = vsel %vm494, %v939, %v527
        %965 = vrot.lane.b32.xlu0 %v923, 96
        %v966 = vpop.permute.xlu0 %965
        %967 = vrot.lane.b32.xlu0 %v925, 96
        %v968 = vpop.permute.xlu0 %967
        %969 = vrot.lane.b32.xlu0 %v927, 96
        %v970 = vpop.permute.xlu0 %969
        %971 = vrot.lane.b32.xlu0 %v920, 96
        %v972 = vpop.permute.xlu0 %971
        %973 = vrot.lane.b32.xlu0 %v921, 96
        %v974 = vpop.permute.xlu0 %973
        %975 = vrot.lane.b32.xlu0 %v919, 96
        %v976 = vpop.permute.xlu0 %975
        %vm977 = vcmask 785408
        %v978 = vsel %vm977, %v966, %v968
        %v979 = vsel %vm977, %v968, %v970
        %v980 = vsel %vm977, %v972, %v974
        %v981 = vsel %vm977, %v974, %v976
        %987 = vrot.lane.b32.xlu0 %v957, 96
        %v988 = vpop.permute.xlu0 %987
        %989 = vrot.lane.b32.xlu0 %v959, 96
        %v990 = vpop.permute.xlu0 %989
        %991 = vrot.lane.b32.xlu0 %v961, 96
        %v992 = vpop.permute.xlu0 %991
        %993 = vrot.lane.b32.xlu0 %v954, 96
        %v994 = vpop.permute.xlu0 %993
        %995 = vrot.lane.b32.xlu0 %v955, 96
        %v996 = vpop.permute.xlu0 %995
        %997 = vrot.lane.b32.xlu0 %v953, 96
        %v998 = vpop.permute.xlu0 %997
        %v999 = vsel %vm977, %v988, %v990
        %v1000 = vsel %vm977, %v990, %v992
        %v1001 = vsel %vm977, %v994, %v996
        %v1002 = vsel %vm977, %v996, %v998
        %s1005 = scalar_lea.vmem %s1, 8
        %v1006 = vld [vmem:[%s1005] sm:$0xf]
        %v1008 = vsel %vm685, %v1006, 0
        %v1011 = vsel %vm494, %v980, 0
        %v1014 = vsel %vm494, %v981, 0
        %v1017 = vsel %vm494, %v1001, 0
        %v1020 = vsel %vm494, %v1002, 0
        %1022 = vmatprep.subr.bf16.mxu0 0
        %1023 = vmatpush1.bf16.msra.mxu0 0
        %1024 = vmatprep.subr.bf16.mxu0 0
        %1025 = vmatpush1.bf16.msra.mxu0 0
        %1026 = vmatprep.subr.bf16.mxu0 0
        %1027 = vmatpush1.bf16.msra.mxu0 0
        %1028 = vmatprep.subr.bf16.mxu0 0
        %1029 = vmatpush1.bf16.msra.mxu0 0
        %1030 = vmatprep.subr.bf16.mxu0 0
        %1031 = vmatpush1.bf16.msra.mxu0 0
        %1032 = vmatprep.subr.bf16.mxu0 0
        %1033 = vmatpush1.bf16.msra.mxu0 0
        %1034 = vmatprep.subr.bf16.mxu0 %v1014
        %1035 = vmatpush1.bf16.msra.mxu0 %v1011
        %1036 = vmatprep.subr.bf16.mxu0 %v979
        %1037 = vmatpush1.bf16.msra.mxu0 %v978
        %1038 = vmatprep.subr.bf16.mxu0 0
        %1039 = vmatpush2.bf16.msra.mxu0 0
        %1040 = vmatprep.subr.bf16.mxu0 0
        %1041 = vmatpush2.bf16.msra.mxu0 0
        %1042 = vmatprep.subr.bf16.mxu0 0
        %1043 = vmatpush2.bf16.msra.mxu0 0
        %1044 = vmatprep.subr.bf16.mxu0 0
        %1045 = vmatpush2.bf16.msra.mxu0 0
        %1046 = vmatprep.subr.bf16.mxu0 0
        %1047 = vmatpush2.bf16.msra.mxu0 0
        %1048 = vmatprep.subr.bf16.mxu0 0
        %1049 = vmatpush2.bf16.msra.mxu0 0
        %1050 = vmatprep.subr.bf16.mxu0 0
        %1051 = vmatpush2.bf16.msra.mxu0 0
        %1052 = vmatprep.subr.bf16.mxu0 0
        %1053 = vmatpush2.bf16.msra.mxu0 0
        %1054 = vmatprep.mubr.bf16.mxu0 0
        %1055 = vmatmul.mubr.bf16.gmra.mxu0 %v1008
        %v1056 = vpop.f32.mrf.mxu0
        %v1057 = vadd.f32 0.0, %v1056
        %v1058 = vpop.f32.mrf.mxu0
        %v1059 = vadd.f32 0.0, %v1058
        %v1060 = vpop.f32.mrf.mxu0
        %v1061 = vpop.f32.mrf.mxu0
        %1062 = vdwg.mxu0
        %1063 = vmatprep.subr.bf16.mxu0 0
        %1064 = vmatpush1.bf16.msra.mxu0 0
        %1065 = vmatprep.subr.bf16.mxu0 0
        %1066 = vmatpush1.bf16.msra.mxu0 0
        %1067 = vmatprep.subr.bf16.mxu0 0
        %1068 = vmatpush1.bf16.msra.mxu0 0
        %1069 = vmatprep.subr.bf16.mxu0 0
        %1070 = vmatpush1.bf16.msra.mxu0 0
        %1071 = vmatprep.subr.bf16.mxu0 0
        %1072 = vmatpush1.bf16.msra.mxu0 0
        %1073 = vmatprep.subr.bf16.mxu0 0
        %1074 = vmatpush1.bf16.msra.mxu0 0
        %1075 = vmatprep.subr.bf16.mxu0 %v1020
        %1076 = vmatpush1.bf16.msra.mxu0 %v1017
        %1077 = vmatprep.subr.bf16.mxu0 %v1000
        %1078 = vmatpush1.bf16.msra.mxu0 %v999
        %1079 = vmatprep.subr.bf16.mxu0 0
        %1080 = vmatpush2.bf16.msra.mxu0 0
        %1081 = vmatprep.subr.bf16.mxu0 0
        %1082 = vmatpush2.bf16.msra.mxu0 0
        %1083 = vmatprep.subr.bf16.mxu0 0
        %1084 = vmatpush2.bf16.msra.mxu0 0
        %1085 = vmatprep.subr.bf16.mxu0 0
        %1086 = vmatpush2.bf16.msra.mxu0 0
        %1087 = vmatprep.subr.bf16.mxu0 0
        %1088 = vmatpush2.bf16.msra.mxu0 0
        %1089 = vmatprep.subr.bf16.mxu0 0
        %1090 = vmatpush2.bf16.msra.mxu0 0
        %1091 = vmatprep.subr.bf16.mxu0 0
        %1092 = vmatpush2.bf16.msra.mxu0 0
        %1093 = vmatprep.subr.bf16.mxu0 0
        %1094 = vmatpush2.bf16.msra.mxu0 0
        %1095 = vmatprep.mubr.bf16.mxu0 0
        %1096 = vmatmul.mubr.bf16.gmra.mxu0 %v1008
        %v1097 = vpop.f32.mrf.mxu0
        %v1098 = vadd.f32 0.0, %v1097
        %v1099 = vpop.f32.mrf.mxu0
        %v1100 = vadd.f32 0.0, %v1099
        %v1101 = vpop.f32.mrf.mxu0
        %v1102 = vpop.f32.mrf.mxu0
        %1103 = vdwg.mxu0
        %v1104 = vadd.f32 %v833, %v1057
        %v1105 = vadd.f32 %v835, %v1059
        %v1106 = vadd.f32 %v874, %v1098
        %v1107 = vadd.f32 %v876, %v1100
        %v1108 = vld [vmem:[%s2] sm:$0xff]
        %1110 = vset.pattern.permute.xlu0 0
        %1111 = vperm.xlu0 %1110, %v1108
        %v1112 = vpop.permute.xlu0 %1111
        %v1114 = vadd.f32 %v1104, %v1112
        %v1115 = vadd.f32 %v1105, %v1112
        %v1116 = vadd.f32 %v1106, %v1112
        %v1117 = vadd.f32 %v1107, %v1112
        %v1118 = vmax.f32 %v1114, 0.0
        %v1119 = vmax.f32 %v1115, 0.0
        %v1120 = vmax.f32 %v1116, 0.0
        %v1121 = vmax.f32 %v1117, 0.0
        %v1122 = vpack.c.bf16 %v1118, %v1118
        %v1123 = vpack.c.bf16 %v1119, %v1119
        %v1126 = vunpack.c.l.b16 %v1122
        %v1127 = vunpack.c.l.b16 %v1123
        %v1128 = vpack.c.b16 %v1127, %v1126
        %1129 = vrot.lane.b32.xlu0 %v1128, 17
        %v1130 = vpop.permute.xlu0 %1129
        %v1131 = vrot.slane %v1130, 4
        %v1132 = vsel %vm418, %v1131, %v1130
        %1135 = vst.msk [vmem:[#allocation2] sm:$0xff] %vm427, %v1132
        %1136 = vst.msk [vmem:[#allocation2 + $0x8] sm:$0xf] %vm388, %v1131
        %v1137 = vpack.c.bf16 %v1120, %v1120
        %v1138 = vpack.c.bf16 %v1121, %v1121
        %v1141 = vunpack.c.l.b16 %v1137
        %v1142 = vunpack.c.l.b16 %v1138
        %v1143 = vpack.c.b16 %v1142, %v1141
        %1144 = vrot.lane.b32.xlu0 %v1143, 17
        %v1145 = vpop.permute.xlu0 %1144
        %v1146 = vrot.slane %v1145, 4
        %v1147 = vsel %vm418, %v1146, %v1145
        %1150 = vst.msk [vmem:[%s503] sm:$0xff] %vm427, %v1147
        %1151 = vst.msk [vmem:[%s503 + $0x8] sm:$0xf] %vm388, %v1146
        %v1152 = vld [vmem:[#allocation2] sm:$0xff]
        %v1153 = vld [vmem:[#allocation2 + $0x8] sm:$0xf]
        %v1154 = vsel %vm438, %v1152, 0
        %v1155 = vsel %vm451, %v1152, 0
        %v1156 = vsel %vm452, %v1153, 0
        %v1158 = vunpack.c.l.b16 %v1154
        %v1159 = vunpack.c.h.b16 %v1154
        %v1160 = vpack.c.b16 %v1158, %v1158
        %v1161 = vpack.c.b16 %v1159, %v1159
        %v1164 = vunpack.c.l.b16 %v1152
        %v1165 = vunpack.c.h.b16 %v1152
        %v1166 = vunpack.c.l.b16 %v1153
        %v1167 = vpack.c.b16 %v1164, %v1164
        %v1168 = vpack.c.b16 %v1165, %v1165
        %v1169 = vpack.c.b16 %v1166, %v1166
        %1170 = vrot.lane.b32.xlu0 %v1167, 127
        %v1171 = vpop.permute.xlu0 %1170
        %1172 = vrot.lane.b32.xlu0 %v1168, 127
        %v1173 = vpop.permute.xlu0 %1172
        %1174 = vrot.lane.b32.xlu0 %v1169, 127
        %v1175 = vpop.permute.xlu0 %1174
        %v1176 = vsel %vm474, %v1171, %v1173
        %v1177 = vsel %vm474, %v1173, %v1175
        %v1180 = vunpack.c.l.b16 %v1155
        %v1181 = vunpack.c.h.b16 %v1155
        %v1182 = vunpack.c.l.b16 %v1156
        %v1183 = vpack.c.b16 %v1180, %v1180
        %v1184 = vpack.c.b16 %v1181, %v1181
        %v1185 = vpack.c.b16 %v1182, %v1182
        %1186 = vrot.lane.b32.xlu0 %v1183, 126
        %v1187 = vpop.permute.xlu0 %1186
        %1188 = vrot.lane.b32.xlu0 %v1184, 126
        %v1189 = vpop.permute.xlu0 %1188
        %1190 = vrot.lane.b32.xlu0 %v1185, 126
        %v1191 = vpop.permute.xlu0 %1190
        %v1192 = vsel %vm491, %v1187, %v1189
        %v1193 = vsel %vm491, %v1189, %v1191
        %v1196 = vsel %vm494, %v1160, %v1176
        %v1200 = vsel %vm494, %v1161, %v1177
        %v1202 = vld [vmem:[%s503] sm:$0xff]
        %v1203 = vld [vmem:[%s503 + $0x8] sm:$0xf]
        %v1204 = vsel %vm438, %v1202, 0
        %v1205 = vsel %vm451, %v1202, 0
        %v1206 = vsel %vm452, %v1203, 0
        %v1208 = vunpack.c.l.b16 %v1204
        %v1209 = vunpack.c.h.b16 %v1204
        %v1210 = vpack.c.b16 %v1208, %v1208
        %v1211 = vpack.c.b16 %v1209, %v1209
        %v1214 = vunpack.c.l.b16 %v1202
        %v1215 = vunpack.c.h.b16 %v1202
        %v1216 = vunpack.c.l.b16 %v1203
        %v1217 = vpack.c.b16 %v1214, %v1214
        %v1218 = vpack.c.b16 %v1215, %v1215
        %v1219 = vpack.c.b16 %v1216, %v1216
        %1220 = vrot.lane.b32.xlu0 %v1217, 127
        %v1221 = vpop.permute.xlu0 %1220
        %1222 = vrot.lane.b32.xlu0 %v1218, 127
        %v1223 = vpop.permute.xlu0 %1222
        %1224 = vrot.lane.b32.xlu0 %v1219, 127
        %v1225 = vpop.permute.xlu0 %1224
        %v1226 = vsel %vm474, %v1221, %v1223
        %v1227 = vsel %vm474, %v1223, %v1225
        %v1230 = vunpack.c.l.b16 %v1205
        %v1231 = vunpack.c.h.b16 %v1205
        %v1232 = vunpack.c.l.b16 %v1206
        %v1233 = vpack.c.b16 %v1230, %v1230
        %v1234 = vpack.c.b16 %v1231, %v1231
        %v1235 = vpack.c.b16 %v1232, %v1232
        %1236 = vrot.lane.b32.xlu0 %v1233, 126
        %v1237 = vpop.permute.xlu0 %1236
        %1238 = vrot.lane.b32.xlu0 %v1234, 126
        %v1239 = vpop.permute.xlu0 %1238
        %1240 = vrot.lane.b32.xlu0 %v1235, 126
        %v1241 = vpop.permute.xlu0 %1240
        %v1242 = vsel %vm491, %v1237, %v1239
        %v1243 = vsel %vm491, %v1239, %v1241
        %v1246 = vsel %vm494, %v1210, %v1226
        %v1250 = vsel %vm494, %v1211, %v1227
        %v1252 = vld [vmem:[%s3] sm:$0xf]
        %v1253 = vsel %vm561, %v1152, 0
        %v1254 = vsel %vm562, %v1153, 0
        %v1255 = vsel %vm570, %v1152, 0
        %v1256 = vsel %vm571, %v1153, 0
        %v1259 = vunpack.c.l.b16 %v1253
        %v1260 = vunpack.c.h.b16 %v1253
        %v1261 = vunpack.c.l.b16 %v1254
        %v1262 = vpack.c.b16 %v1259, %v1259
        %v1263 = vpack.c.b16 %v1260, %v1260
        %v1264 = vpack.c.b16 %v1261, %v1261
        %v1267 = vunpack.c.l.b16 %v1255
        %v1268 = vunpack.c.h.b16 %v1255
        %v1269 = vunpack.c.l.b16 %v1256
        %v1270 = vpack.c.b16 %v1267, %v1267
        %v1271 = vpack.c.b16 %v1268, %v1268
        %v1272 = vpack.c.b16 %v1269, %v1269
        %1273 = vrot.lane.b32.xlu0 %v1270, 126
        %v1274 = vpop.permute.xlu0 %1273
        %1275 = vrot.lane.b32.xlu0 %v1271, 126
        %v1276 = vpop.permute.xlu0 %1275
        %1277 = vrot.lane.b32.xlu0 %v1272, 126
        %v1278 = vpop.permute.xlu0 %1277
        %v1279 = vsel %vm491, %v1274, %v1276
        %v1280 = vsel %vm491, %v1276, %v1278
        %v1282 = vsel %vm494, %v1262, %v1176
        %v1284 = vsel %vm494, %v1263, %v1177
        %v1287 = vsel %vm494, %v1264, %v1175
        %v1288 = vsel %vm561, %v1202, 0
        %v1289 = vsel %vm562, %v1203, 0
        %v1290 = vsel %vm570, %v1202, 0
        %v1291 = vsel %vm571, %v1203, 0
        %v1294 = vunpack.c.l.b16 %v1288
        %v1295 = vunpack.c.h.b16 %v1288
        %v1296 = vunpack.c.l.b16 %v1289
        %v1297 = vpack.c.b16 %v1294, %v1294
        %v1298 = vpack.c.b16 %v1295, %v1295
        %v1299 = vpack.c.b16 %v1296, %v1296
        %v1302 = vunpack.c.l.b16 %v1290
        %v1303 = vunpack.c.h.b16 %v1290
        %v1304 = vunpack.c.l.b16 %v1291
        %v1305 = vpack.c.b16 %v1302, %v1302
        %v1306 = vpack.c.b16 %v1303, %v1303
        %v1307 = vpack.c.b16 %v1304, %v1304
        %1308 = vrot.lane.b32.xlu0 %v1305, 126
        %v1309 = vpop.permute.xlu0 %1308
        %1310 = vrot.lane.b32.xlu0 %v1306, 126
        %v1311 = vpop.permute.xlu0 %1310
        %1312 = vrot.lane.b32.xlu0 %v1307, 126
        %v1313 = vpop.permute.xlu0 %1312
        %v1314 = vsel %vm491, %v1309, %v1311
        %v1315 = vsel %vm491, %v1311, %v1313
        %v1317 = vsel %vm494, %v1297, %v1226
        %v1319 = vsel %vm494, %v1298, %v1227
        %v1322 = vsel %vm494, %v1299, %v1225
        %1326 = vrot.lane.b32.xlu0 %v1282, 112
        %v1327 = vpop.permute.xlu0 %1326
        %1328 = vrot.lane.b32.xlu0 %v1284, 112
        %v1329 = vpop.permute.xlu0 %1328
        %1330 = vrot.lane.b32.xlu0 %v1287, 112
        %v1331 = vpop.permute.xlu0 %1330
        %1332 = vrot.lane.b32.xlu0 %v1279, 112
        %v1333 = vpop.permute.xlu0 %1332
        %1334 = vrot.lane.b32.xlu0 %v1280, 112
        %v1335 = vpop.permute.xlu0 %1334
        %1336 = vrot.lane.b32.xlu0 %v1278, 112
        %v1337 = vpop.permute.xlu0 %1336
        %v1338 = vsel %vm655, %v1327, %v1329
        %v1339 = vsel %vm655, %v1329, %v1331
        %v1340 = vsel %vm655, %v1333, %v1335
        %v1341 = vsel %vm655, %v1335, %v1337
        %1347 = vrot.lane.b32.xlu0 %v1317, 112
        %v1348 = vpop.permute.xlu0 %1347
        %1349 = vrot.lane.b32.xlu0 %v1319, 112
        %v1350 = vpop.permute.xlu0 %1349
        %1351 = vrot.lane.b32.xlu0 %v1322, 112
        %v1352 = vpop.permute.xlu0 %1351
        %1353 = vrot.lane.b32.xlu0 %v1314, 112
        %v1354 = vpop.permute.xlu0 %1353
        %1355 = vrot.lane.b32.xlu0 %v1315, 112
        %v1356 = vpop.permute.xlu0 %1355
        %1357 = vrot.lane.b32.xlu0 %v1313, 112
        %v1358 = vpop.permute.xlu0 %1357
        %v1359 = vsel %vm655, %v1348, %v1350
        %v1360 = vsel %vm655, %v1350, %v1352
        %v1361 = vsel %vm655, %v1354, %v1356
        %v1362 = vsel %vm655, %v1356, %v1358
        %s1365 = scalar_lea.vmem %s3, 4
        %v1366 = vld [vmem:[%s1365] sm:$0xf]
        %v1368 = vsel %vm685, %v1366, 0
        %v1371 = vsel %vm494, %v1340, 0
        %v1374 = vsel %vm494, %v1341, 0
        %v1377 = vsel %vm494, %v1361, 0
        %v1380 = vsel %vm494, %v1362, 0
        %1382 = vmatprep.subr.bf16.mxu0 0
        %1383 = vmatpush1.bf16.msra.mxu0 0
        %1384 = vmatprep.subr.bf16.mxu0 0
        %1385 = vmatpush1.bf16.msra.mxu0 0
        %1386 = vmatprep.subr.bf16.mxu0 0
        %1387 = vmatpush1.bf16.msra.mxu0 0
        %1388 = vmatprep.subr.bf16.mxu0 0
        %1389 = vmatpush1.bf16.msra.mxu0 0
        %1390 = vmatprep.subr.bf16.mxu0 0
        %1391 = vmatpush1.bf16.msra.mxu0 0
        %1392 = vmatprep.subr.bf16.mxu0 0
        %1393 = vmatpush1.bf16.msra.mxu0 0
        %1394 = vmatprep.subr.bf16.mxu0 %v1374
        %1395 = vmatpush1.bf16.msra.mxu0 %v1371
        %1396 = vmatprep.subr.bf16.mxu0 %v1339
        %1397 = vmatpush1.bf16.msra.mxu0 %v1338
        %1398 = vmatprep.subr.bf16.mxu0 0
        %1399 = vmatpush2.bf16.msra.mxu0 0
        %1400 = vmatprep.subr.bf16.mxu0 0
        %1401 = vmatpush2.bf16.msra.mxu0 0
        %1402 = vmatprep.subr.bf16.mxu0 0
        %1403 = vmatpush2.bf16.msra.mxu0 0
        %1404 = vmatprep.subr.bf16.mxu0 0
        %1405 = vmatpush2.bf16.msra.mxu0 0
        %1406 = vmatprep.subr.bf16.mxu0 0
        %1407 = vmatpush2.bf16.msra.mxu0 0
        %1408 = vmatprep.subr.bf16.mxu0 0
        %1409 = vmatpush2.bf16.msra.mxu0 0
        %1410 = vmatprep.subr.bf16.mxu0 0
        %1411 = vmatpush2.bf16.msra.mxu0 0
        %1412 = vmatprep.subr.bf16.mxu0 0
        %1413 = vmatpush2.bf16.msra.mxu0 0
        %1414 = vmatprep.mubr.bf16.mxu0 0
        %1415 = vmatmul.mubr.bf16.gmra.mxu0 %v1368
        %v1416 = vpop.f32.mrf.mxu0
        %v1417 = vadd.f32 0.0, %v1416
        %v1418 = vpop.f32.mrf.mxu0
        %v1419 = vadd.f32 0.0, %v1418
        %v1420 = vpop.f32.mrf.mxu0
        %v1421 = vpop.f32.mrf.mxu0
        %1422 = vdwg.mxu0
        %1423 = vmatprep.subr.bf16.mxu0 0
        %1424 = vmatpush1.bf16.msra.mxu0 0
        %1425 = vmatprep.subr.bf16.mxu0 0
        %1426 = vmatpush1.bf16.msra.mxu0 0
        %1427 = vmatprep.subr.bf16.mxu0 0
        %1428 = vmatpush1.bf16.msra.mxu0 0
        %1429 = vmatprep.subr.bf16.mxu0 0
        %1430 = vmatpush1.bf16.msra.mxu0 0
        %1431 = vmatprep.subr.bf16.mxu0 0
        %1432 = vmatpush1.bf16.msra.mxu0 0
        %1433 = vmatprep.subr.bf16.mxu0 0
        %1434 = vmatpush1.bf16.msra.mxu0 0
        %1435 = vmatprep.subr.bf16.mxu0 %v1380
        %1436 = vmatpush1.bf16.msra.mxu0 %v1377
        %1437 = vmatprep.subr.bf16.mxu0 %v1360
        %1438 = vmatpush1.bf16.msra.mxu0 %v1359
        %1439 = vmatprep.subr.bf16.mxu0 0
        %1440 = vmatpush2.bf16.msra.mxu0 0
        %1441 = vmatprep.subr.bf16.mxu0 0
        %1442 = vmatpush2.bf16.msra.mxu0 0
        %1443 = vmatprep.subr.bf16.mxu0 0
        %1444 = vmatpush2.bf16.msra.mxu0 0
        %1445 = vmatprep.subr.bf16.mxu0 0
        %1446 = vmatpush2.bf16.msra.mxu0 0
        %1447 = vmatprep.subr.bf16.mxu0 0
        %1448 = vmatpush2.bf16.msra.mxu0 0
        %1449 = vmatprep.subr.bf16.mxu0 0
        %1450 = vmatpush2.bf16.msra.mxu0 0
        %1451 = vmatprep.subr.bf16.mxu0 0
        %1452 = vmatpush2.bf16.msra.mxu0 0
        %1453 = vmatprep.subr.bf16.mxu0 0
        %1454 = vmatpush2.bf16.msra.mxu0 0
        %1455 = vmatprep.mubr.bf16.mxu0 0
        %1456 = vmatmul.mubr.bf16.gmra.mxu0 %v1368
        %v1457 = vpop.f32.mrf.mxu0
        %v1458 = vadd.f32 0.0, %v1457
        %v1459 = vpop.f32.mrf.mxu0
        %v1460 = vadd.f32 0.0, %v1459
        %v1461 = vpop.f32.mrf.mxu0
        %v1462 = vpop.f32.mrf.mxu0
        %1463 = vdwg.mxu0
        %v1465 = vsel %vm685, %v1252, 0
        %v1468 = vsel %vm494, %v1192, 0
        %v1471 = vsel %vm494, %v1193, 0
        %v1474 = vsel %vm494, %v1242, 0
        %v1477 = vsel %vm494, %v1243, 0
        %1479 = vmatprep.subr.bf16.mxu0 0
        %1480 = vmatpush1.bf16.msra.mxu0 0
        %1481 = vmatprep.subr.bf16.mxu0 0
        %1482 = vmatpush1.bf16.msra.mxu0 0
        %1483 = vmatprep.subr.bf16.mxu0 0
        %1484 = vmatpush1.bf16.msra.mxu0 0
        %1485 = vmatprep.subr.bf16.mxu0 0
        %1486 = vmatpush1.bf16.msra.mxu0 0
        %1487 = vmatprep.subr.bf16.mxu0 0
        %1488 = vmatpush1.bf16.msra.mxu0 0
        %1489 = vmatprep.subr.bf16.mxu0 0
        %1490 = vmatpush1.bf16.msra.mxu0 0
        %1491 = vmatprep.subr.bf16.mxu0 %v1471
        %1492 = vmatpush1.bf16.msra.mxu0 %v1468
        %1493 = vmatprep.subr.bf16.mxu0 %v1200
        %1494 = vmatpush1.bf16.msra.mxu0 %v1196
        %1495 = vmatprep.subr.bf16.mxu0 0
        %1496 = vmatpush2.bf16.msra.mxu0 0
        %1497 = vmatprep.subr.bf16.mxu0 0
        %1498 = vmatpush2.bf16.msra.mxu0 0
        %1499 = vmatprep.subr.bf16.mxu0 0
        %1500 = vmatpush2.bf16.msra.mxu0 0
        %1501 = vmatprep.subr.bf16.mxu0 0
        %1502 = vmatpush2.bf16.msra.mxu0 0
        %1503 = vmatprep.subr.bf16.mxu0 0
        %1504 = vmatpush2.bf16.msra.mxu0 0
        %1505 = vmatprep.subr.bf16.mxu0 0
        %1506 = vmatpush2.bf16.msra.mxu0 0
        %1507 = vmatprep.subr.bf16.mxu0 0
        %1508 = vmatpush2.bf16.msra.mxu0 0
        %1509 = vmatprep.subr.bf16.mxu0 0
        %1510 = vmatpush2.bf16.msra.mxu0 0
        %1511 = vmatprep.mubr.bf16.mxu0 0
        %1512 = vmatmul.mubr.bf16.gmra.mxu0 %v1465
        %v1513 = vpop.f32.mrf.mxu0
        %v1514 = vadd.f32 %v1417, %v1513
        %v1515 = vpop.f32.mrf.mxu0
        %v1516 = vadd.f32 %v1419, %v1515
        %v1517 = vpop.f32.mrf.mxu0
        %v1518 = vpop.f32.mrf.mxu0
        %1519 = vdwg.mxu0
        %1520 = vmatprep.subr.bf16.mxu0 0
        %1521 = vmatpush1.bf16.msra.mxu0 0
        %1522 = vmatprep.subr.bf16.mxu0 0
        %1523 = vmatpush1.bf16.msra.mxu0 0
        %1524 = vmatprep.subr.bf16.mxu0 0
        %1525 = vmatpush1.bf16.msra.mxu0 0
        %1526 = vmatprep.subr.bf16.mxu0 0
        %1527 = vmatpush1.bf16.msra.mxu0 0
        %1528 = vmatprep.subr.bf16.mxu0 0
        %1529 = vmatpush1.bf16.msra.mxu0 0
        %1530 = vmatprep.subr.bf16.mxu0 0
        %1531 = vmatpush1.bf16.msra.mxu0 0
        %1532 = vmatprep.subr.bf16.mxu0 %v1477
        %1533 = vmatpush1.bf16.msra.mxu0 %v1474
        %1534 = vmatprep.subr.bf16.mxu0 %v1250
        %1535 = vmatpush1.bf16.msra.mxu0 %v1246
        %1536 = vmatprep.subr.bf16.mxu0 0
        %1537 = vmatpush2.bf16.msra.mxu0 0
        %1538 = vmatprep.subr.bf16.mxu0 0
        %1539 = vmatpush2.bf16.msra.mxu0 0
        %1540 = vmatprep.subr.bf16.mxu0 0
        %1541 = vmatpush2.bf16.msra.mxu0 0
        %1542 = vmatprep.subr.bf16.mxu0 0
        %1543 = vmatpush2.bf16.msra.mxu0 0
        %1544 = vmatprep.subr.bf16.mxu0 0
        %1545 = vmatpush2.bf16.msra.mxu0 0
        %1546 = vmatprep.subr.bf16.mxu0 0
        %1547 = vmatpush2.bf16.msra.mxu0 0
        %1548 = vmatprep.subr.bf16.mxu0 0
        %1549 = vmatpush2.bf16.msra.mxu0 0
        %1550 = vmatprep.subr.bf16.mxu0 0
        %1551 = vmatpush2.bf16.msra.mxu0 0
        %1552 = vmatprep.mubr.bf16.mxu0 0
        %1553 = vmatmul.mubr.bf16.gmra.mxu0 %v1465
        %v1554 = vpop.f32.mrf.mxu0
        %v1555 = vadd.f32 %v1458, %v1554
        %v1556 = vpop.f32.mrf.mxu0
        %v1557 = vadd.f32 %v1460, %v1556
        %v1558 = vpop.f32.mrf.mxu0
        %v1559 = vpop.f32.mrf.mxu0
        %1560 = vdwg.mxu0
        %v1561 = vsel %vm885, %v1152, 0
        %v1562 = vsel %vm886, %v1153, 0
        %v1563 = vsel %vm894, %v1152, 0
        %v1564 = vsel %vm895, %v1153, 0
        %v1567 = vunpack.c.l.b16 %v1561
        %v1568 = vunpack.c.h.b16 %v1561
        %v1569 = vunpack.c.l.b16 %v1562
        %v1570 = vpack.c.b16 %v1567, %v1567
        %v1571 = vpack.c.b16 %v1568, %v1568
        %v1572 = vpack.c.b16 %v1569, %v1569
        %v1575 = vunpack.c.l.b16 %v1563
        %v1576 = vunpack.c.h.b16 %v1563
        %v1577 = vunpack.c.l.b16 %v1564
        %v1578 = vpack.c.b16 %v1575, %v1575
        %v1579 = vpack.c.b16 %v1576, %v1576
        %v1580 = vpack.c.b16 %v1577, %v1577
        %1581 = vrot.lane.b32.xlu0 %v1578, 126
        %v1582 = vpop.permute.xlu0 %1581
        %1583 = vrot.lane.b32.xlu0 %v1579, 126
        %v1584 = vpop.permute.xlu0 %1583
        %1585 = vrot.lane.b32.xlu0 %v1580, 126
        %v1586 = vpop.permute.xlu0 %1585
        %v1587 = vsel %vm491, %v1582, %v1584
        %v1588 = vsel %vm491, %v1584, %v1586
        %v1590 = vsel %vm494, %v1570, %v1176
        %v1592 = vsel %vm494, %v1571, %v1177
        %v1594 = vsel %vm494, %v1572, %v1175
        %v1595 = vsel %vm885, %v1202, 0
        %v1596 = vsel %vm886, %v1203, 0
        %v1597 = vsel %vm894, %v1202, 0
        %v1598 = vsel %vm895, %v1203, 0
        %v1601 = vunpack.c.l.b16 %v1595
        %v1602 = vunpack.c.h.b16 %v1595
        %v1603 = vunpack.c.l.b16 %v1596
        %v1604 = vpack.c.b16 %v1601, %v1601
        %v1605 = vpack.c.b16 %v1602, %v1602
        %v1606 = vpack.c.b16 %v1603, %v1603
        %v1609 = vunpack.c.l.b16 %v1597
        %v1610 = vunpack.c.h.b16 %v1597
        %v1611 = vunpack.c.l.b16 %v1598
        %v1612 = vpack.c.b16 %v1609, %v1609
        %v1613 = vpack.c.b16 %v1610, %v1610
        %v1614 = vpack.c.b16 %v1611, %v1611
        %1615 = vrot.lane.b32.xlu0 %v1612, 126
        %v1616 = vpop.permute.xlu0 %1615
        %1617 = vrot.lane.b32.xlu0 %v1613, 126
        %v1618 = vpop.permute.xlu0 %1617
        %1619 = vrot.lane.b32.xlu0 %v1614, 126
        %v1620 = vpop.permute.xlu0 %1619
        %v1621 = vsel %vm491, %v1616, %v1618
        %v1622 = vsel %vm491, %v1618, %v1620
        %v1624 = vsel %vm494, %v1604, %v1226
        %v1626 = vsel %vm494, %v1605, %v1227
        %v1628 = vsel %vm494, %v1606, %v1225
        %1632 = vrot.lane.b32.xlu0 %v1590, 96
        %v1633 = vpop.permute.xlu0 %1632
        %1634 = vrot.lane.b32.xlu0 %v1592, 96
        %v1635 = vpop.permute.xlu0 %1634
        %1636 = vrot.lane.b32.xlu0 %v1594, 96
        %v1637 = vpop.permute.xlu0 %1636
        %1638 = vrot.lane.b32.xlu0 %v1587, 96
        %v1639 = vpop.permute.xlu0 %1638
        %1640 = vrot.lane.b32.xlu0 %v1588, 96
        %v1641 = vpop.permute.xlu0 %1640
        %1642 = vrot.lane.b32.xlu0 %v1586, 96
        %v1643 = vpop.permute.xlu0 %1642
        %v1644 = vsel %vm977, %v1633, %v1635
        %v1645 = vsel %vm977, %v1635, %v1637
        %v1646 = vsel %vm977, %v1639, %v1641
        %v1647 = vsel %vm977, %v1641, %v1643
        %1653 = vrot.lane.b32.xlu0 %v1624, 96
        %v1654 = vpop.permute.xlu0 %1653
        %1655 = vrot.lane.b32.xlu0 %v1626, 96
        %v1656 = vpop.permute.xlu0 %1655
        %1657 = vrot.lane.b32.xlu0 %v1628, 96
        %v1658 = vpop.permute.xlu0 %1657
        %1659 = vrot.lane.b32.xlu0 %v1621, 96
        %v1660 = vpop.permute.xlu0 %1659
        %1661 = vrot.lane.b32.xlu0 %v1622, 96
        %v1662 = vpop.permute.xlu0 %1661
        %1663 = vrot.lane.b32.xlu0 %v1620, 96
        %v1664 = vpop.permute.xlu0 %1663
        %v1665 = vsel %vm977, %v1654, %v1656
        %v1666 = vsel %vm977, %v1656, %v1658
        %v1667 = vsel %vm977, %v1660, %v1662
        %v1668 = vsel %vm977, %v1662, %v1664
        %s1671 = scalar_lea.vmem %s3, 8
        %v1672 = vld [vmem:[%s1671] sm:$0xf]
        %v1674 = vsel %vm685, %v1672, 0
        %v1677 = vsel %vm494, %v1646, 0
        %v1680 = vsel %vm494, %v1647, 0
        %v1683 = vsel %vm494, %v1667, 0
        %v1686 = vsel %vm494, %v1668, 0
        %1688 = vmatprep.subr.bf16.mxu0 0
        %1689 = vmatpush1.bf16.msra.mxu0 0
        %1690 = vmatprep.subr.bf16.mxu0 0
        %1691 = vmatpush1.bf16.msra.mxu0 0
        %1692 = vmatprep.subr.bf16.mxu0 0
        %1693 = vmatpush1.bf16.msra.mxu0 0
        %1694 = vmatprep.subr.bf16.mxu0 0
        %1695 = vmatpush1.bf16.msra.mxu0 0
        %1696 = vmatprep.subr.bf16.mxu0 0
        %1697 = vmatpush1.bf16.msra.mxu0 0
        %1698 = vmatprep.subr.bf16.mxu0 0
        %1699 = vmatpush1.bf16.msra.mxu0 0
        %1700 = vmatprep.subr.bf16.mxu0 %v1680
        %1701 = vmatpush1.bf16.msra.mxu0 %v1677
        %1702 = vmatprep.subr.bf16.mxu0 %v1645
        %1703 = vmatpush1.bf16.msra.mxu0 %v1644
        %1704 = vmatprep.subr.bf16.mxu0 0
        %1705 = vmatpush2.bf16.msra.mxu0 0
        %1706 = vmatprep.subr.bf16.mxu0 0
        %1707 = vmatpush2.bf16.msra.mxu0 0
        %1708 = vmatprep.subr.bf16.mxu0 0
        %1709 = vmatpush2.bf16.msra.mxu0 0
        %1710 = vmatprep.subr.bf16.mxu0 0
        %1711 = vmatpush2.bf16.msra.mxu0 0
        %1712 = vmatprep.subr.bf16.mxu0 0
        %1713 = vmatpush2.bf16.msra.mxu0 0
        %1714 = vmatprep.subr.bf16.mxu0 0
        %1715 = vmatpush2.bf16.msra.mxu0 0
        %1716 = vmatprep.subr.bf16.mxu0 0
        %1717 = vmatpush2.bf16.msra.mxu0 0
        %1718 = vmatprep.subr.bf16.mxu0 0
        %1719 = vmatpush2.bf16.msra.mxu0 0
        %1720 = vmatprep.mubr.bf16.mxu0 0
        %1721 = vmatmul.mubr.bf16.gmra.mxu0 %v1674
        %v1722 = vpop.f32.mrf.mxu0
        %v1723 = vadd.f32 0.0, %v1722
        %v1724 = vpop.f32.mrf.mxu0
        %v1725 = vadd.f32 0.0, %v1724
        %v1726 = vpop.f32.mrf.mxu0
        %v1727 = vpop.f32.mrf.mxu0
        %1728 = vdwg.mxu0
        %1729 = vmatprep.subr.bf16.mxu0 0
        %1730 = vmatpush1.bf16.msra.mxu0 0
        %1731 = vmatprep.subr.bf16.mxu0 0
        %1732 = vmatpush1.bf16.msra.mxu0 0
        %1733 = vmatprep.subr.bf16.mxu0 0
        %1734 = vmatpush1.bf16.msra.mxu0 0
        %1735 = vmatprep.subr.bf16.mxu0 0
        %1736 = vmatpush1.bf16.msra.mxu0 0
        %1737 = vmatprep.subr.bf16.mxu0 0
        %1738 = vmatpush1.bf16.msra.mxu0 0
        %1739 = vmatprep.subr.bf16.mxu0 0
        %1740 = vmatpush1.bf16.msra.mxu0 0
        %1741 = vmatprep.subr.bf16.mxu0 %v1686
        %1742 = vmatpush1.bf16.msra.mxu0 %v1683
        %1743 = vmatprep.subr.bf16.mxu0 %v1666
        %1744 = vmatpush1.bf16.msra.mxu0 %v1665
        %1745 = vmatprep.subr.bf16.mxu0 0
        %1746 = vmatpush2.bf16.msra.mxu0 0
        %1747 = vmatprep.subr.bf16.mxu0 0
        %1748 = vmatpush2.bf16.msra.mxu0 0
        %1749 = vmatprep.subr.bf16.mxu0 0
        %1750 = vmatpush2.bf16.msra.mxu0 0
        %1751 = vmatprep.subr.bf16.mxu0 0
        %1752 = vmatpush2.bf16.msra.mxu0 0
        %1753 = vmatprep.subr.bf16.mxu0 0
        %1754 = vmatpush2.bf16.msra.mxu0 0
        %1755 = vmatprep.subr.bf16.mxu0 0
        %1756 = vmatpush2.bf16.msra.mxu0 0
        %1757 = vmatprep.subr.bf16.mxu0 0
        %1758 = vmatpush2.bf16.msra.mxu0 0
        %1759 = vmatprep.subr.bf16.mxu0 0
        %1760 = vmatpush2.bf16.msra.mxu0 0
        %1761 = vmatprep.mubr.bf16.mxu0 0
        %1762 = vmatmul.mubr.bf16.gmra.mxu0 %v1674
        %v1763 = vpop.f32.mrf.mxu0
        %v1764 = vadd.f32 0.0, %v1763
        %v1765 = vpop.f32.mrf.mxu0
        %v1766 = vadd.f32 0.0, %v1765
        %v1767 = vpop.f32.mrf.mxu0
        %v1768 = vpop.f32.mrf.mxu0
        %1769 = vdwg.mxu0
        %v1770 = vadd.f32 %v1514, %v1723
        %v1771 = vadd.f32 %v1516, %v1725
        %v1772 = vadd.f32 %v1555, %v1764
        %v1773 = vadd.f32 %v1557, %v1766
        %v1774 = vld [vmem:[%s4] sm:$0xff]
        %1776 = vset.pattern.permute.xlu0 0
        %1777 = vperm.xlu0 %1776, %v1774
        %v1778 = vpop.permute.xlu0 %1777
        %v1780 = vadd.f32 %v1770, %v1778
        %v1781 = vadd.f32 %v1771, %v1778
        %v1782 = vadd.f32 %v1772, %v1778
        %v1783 = vadd.f32 %v1773, %v1778
        %v1784 = vmax.f32 %v1780, 0.0
        %v1785 = vmax.f32 %v1781, 0.0
        %v1786 = vmax.f32 %v1782, 0.0
        %v1787 = vmax.f32 %v1783, 0.0
        %v1788 = vadd.f32 %v1784, %v1785
        %1789 = vadd.xlane.f32.xlu0 %v1788
        %v1790 = vpop.xlane.xlu0 %1789
        %v1791 = vrcp.pop 256.0
        %v1792 = vmul.f32 %v1790, %v1791
        %v1793 = vadd.f32 %v1786, %v1787
        %1794 = vadd.xlane.f32.xlu0 %v1793
        %v1795 = vpop.xlane.xlu0 %1794
        %v1796 = vmul.f32 %v1795, %v1791
        %vm1797 = vcmask 7168
        %v1798 = vsel %vm1797, %v1792, %v1796
        %v1799 = vld [vmem:[%s5] sm:$0x1]
        %v1800 = vpack.c.bf16 %v1798, %v1798
        %v1801 = vld [vmem:[%s6] sm:$0x3]
        %1803 = vset.pattern.permute.xlu0 0
        %1804 = vperm.xlu0 %1803, %v1801
        %v1805 = vpop.permute.xlu0 %1804
        %vm1807 = vcmask 64512
        %v1809 = vsel %vm1807, %v1799, 0
        %v1812 = vsel %vm494, %v1800, 0
        %1814 = vmatprep.subr.bf16.mxu0 0
        %1815 = vmatpush1.bf16.msra.mxu0 0
        %1816 = vmatprep.subr.bf16.mxu0 0
        %1817 = vmatpush1.bf16.msra.mxu0 0
        %1818 = vmatprep.subr.bf16.mxu0 0
        %1819 = vmatpush1.bf16.msra.mxu0 0
        %1820 = vmatprep.subr.bf16.mxu0 0
        %1821 = vmatpush1.bf16.msra.mxu0 0
        %1822 = vmatprep.subr.bf16.mxu0 0
        %1823 = vmatpush1.bf16.msra.mxu0 0
        %1824 = vmatprep.subr.bf16.mxu0 0
        %1825 = vmatpush1.bf16.msra.mxu0 0
        %1826 = vmatprep.subr.bf16.mxu0 0
        %1827 = vmatpush1.bf16.msra.mxu0 0
        %1828 = vmatprep.subr.bf16.mxu0 0
        %1829 = vmatpush1.bf16.msra.mxu0 %v1812
        %1830 = vmatprep.subr.bf16.mxu0 0
        %1831 = vmatpush2.bf16.msra.mxu0 0
        %1832 = vmatprep.subr.bf16.mxu0 0
        %1833 = vmatpush2.bf16.msra.mxu0 0
        %1834 = vmatprep.subr.bf16.mxu0 0
        %1835 = vmatpush2.bf16.msra.mxu0 0
        %1836 = vmatprep.subr.bf16.mxu0 0
        %1837 = vmatpush2.bf16.msra.mxu0 0
        %1838 = vmatprep.subr.bf16.mxu0 0
        %1839 = vmatpush2.bf16.msra.mxu0 0
        %1840 = vmatprep.subr.bf16.mxu0 0
        %1841 = vmatpush2.bf16.msra.mxu0 0
        %1842 = vmatprep.subr.bf16.mxu0 0
        %1843 = vmatpush2.bf16.msra.mxu0 0
        %1844 = vmatprep.subr.bf16.mxu0 0
        %1845 = vmatpush2.bf16.msra.mxu0 0
        %1846 = vmatprep.mubr.bf16.mxu0 0
        %1847 = vmatmul.mubr.bf16.gmra.mxu0 %v1809
        %v1848 = vpop.f32.mrf.mxu0
        %v1849 = vadd.f32 %v1805, %v1848
        %v1850 = vpop.f32.mrf.mxu0
        %v1851 = vpop.f32.mrf.mxu0
        %v1852 = vpop.f32.mrf.mxu0
        %1853 = vdwg.mxu0
        %v1854 = vmax.f32 %v1849, 0.0
        %v1855 = vld [vmem:[%s7] sm:$0xf]
        %v1856 = vpack.c.bf16 %v1854, %v1854
        %v1857 = vld [vmem:[%s8] sm:$0xff]
        %1859 = vset.pattern.permute.xlu0 0
        %1860 = vperm.xlu0 %1859, %v1857
        %v1861 = vpop.permute.xlu0 %1860
        %vm1863 = vcmask 15360
        %v1865 = vsel %vm1863, %v1855, 0
        %vm1867 = vcmask 1040384
        %v1869 = vsel %vm1867, %v1856, 0
        %1871 = vmatprep.subr.bf16.mxu0 0
        %1872 = vmatpush1.bf16.msra.mxu0 0
        %1873 = vmatprep.subr.bf16.mxu0 0
        %1874 = vmatpush1.bf16.msra.mxu0 0
        %1875 = vmatprep.subr.bf16.mxu0 0
        %1876 = vmatpush1.bf16.msra.mxu0 0
        %1877 = vmatprep.subr.bf16.mxu0 0
        %1878 = vmatpush1.bf16.msra.mxu0 0
        %1879 = vmatprep.subr.bf16.mxu0 0
        %1880 = vmatpush1.bf16.msra.mxu0 0
        %1881 = vmatprep.subr.bf16.mxu0 0
        %1882 = vmatpush1.bf16.msra.mxu0 0
        %1883 = vmatprep.subr.bf16.mxu0 0
        %1884 = vmatpush1.bf16.msra.mxu0 0
        %1885 = vmatprep.subr.bf16.mxu0 0
        %1886 = vmatpush1.bf16.msra.mxu0 %v1869
        %1887 = vmatprep.subr.bf16.mxu0 0
        %1888 = vmatpush2.bf16.msra.mxu0 0
        %1889 = vmatprep.subr.bf16.mxu0 0
        %1890 = vmatpush2.bf16.msra.mxu0 0
        %1891 = vmatprep.subr.bf16.mxu0 0
        %1892 = vmatpush2.bf16.msra.mxu0 0
        %1893 = vmatprep.subr.bf16.mxu0 0
        %1894 = vmatpush2.bf16.msra.mxu0 0
        %1895 = vmatprep.subr.bf16.mxu0 0
        %1896 = vmatpush2.bf16.msra.mxu0 0
        %1897 = vmatprep.subr.bf16.mxu0 0
        %1898 = vmatpush2.bf16.msra.mxu0 0
        %1899 = vmatprep.subr.bf16.mxu0 0
        %1900 = vmatpush2.bf16.msra.mxu0 0
        %1901 = vmatprep.subr.bf16.mxu0 0
        %1902 = vmatpush2.bf16.msra.mxu0 0
        %1903 = vmatprep.mubr.bf16.mxu0 0
        %1904 = vmatmul.mubr.bf16.gmra.mxu0 %v1865
        %v1905 = vpop.f32.mrf.mxu0
        %v1906 = vadd.f32 %v1861, %v1905
        %v1907 = vpop.f32.mrf.mxu0
        %v1908 = vpop.f32.mrf.mxu0
        %v1909 = vpop.f32.mrf.mxu0
        %1910 = vdwg.mxu0
        %v1911 = vxor.u32 %v1906, 2147483648
        %v1912 = vmul.f32 %v1911, 1.442695
        %v1913 = vpow.pop %v1912
        %v1914 = vadd.f32 %v1913, 1.0
        %v1915 = vrcp.pop %v1914
        %v1916 = vmul.f32 1.0, %v1915
        %1918 = vset.pattern.permute.xlu0 0
        %1919 = vperm.xlu0 %1918, %v1916
        %v1920 = vpop.permute.xlu0 %1919
        %v1922 = vmul.f32 %v1784, %v1920
        %v1923 = vmul.f32 %v1785, %v1920
        %v1924 = vld [vmem:[%s317] sm:$0xff]
        %v1925 = vld [vmem:[%s317 + $0x8] sm:$0xff]
        %v1926 = vadd.f32 %v1922, %v1924
        %v1927 = vadd.f32 %v1923, %v1925
        %v1928 = vmax.f32 %v1926, 0.0
        %v1929 = vmax.f32 %v1927, 0.0
        %1930 = vst [vmem:[%s351] sm:$0xff] %v1928
        %1931 = vst [vmem:[%s351 + $0x8] sm:$0xff] %v1929
        %1932 = vset.pattern.permute.xlu0 1
        %1933 = vperm.xlu0 %1932, %v1916
        %v1934 = vpop.permute.xlu0 %1933
        %v1936 = vmul.f32 %v1786, %v1934
        %v1937 = vmul.f32 %v1787, %v1934
        %s1938 = scalar_lea.vmem %s317, 16 [#allocation3]
        %v1939 = vld [vmem:[%s1938] sm:$0xff]
        %v1940 = vld [vmem:[%s1938 + $0x8] sm:$0xff]
        %v1941 = vadd.f32 %v1936, %v1939
        %v1942 = vadd.f32 %v1937, %v1940
        %v1943 = vmax.f32 %v1941, 0.0
        %v1944 = vmax.f32 %v1942, 0.0
        %s1945 = scalar_lea.vmem %s351, 16 [#allocation6]
        %1946 = vst [vmem:[%s1945] sm:$0xff] %v1943
        %1947 = vst [vmem:[%s1945 + $0x8] sm:$0xff] %v1944
        %s1948 = sand.u32 %s228, 1
        %s1949 = scalar_lea.sflag [#allocation5], %s1948
        %s1950 = sand.u32 %s228, 1
        %s1951 = smul.addr %s1950, 32
        %s1952 = scalar_lea.vmem [#allocation6], %s1951
        // Predicated region
        $region61: #{tpu_custom_call.1} parent=55 // pred_check
          %p1953 = pneg %p238
        $region62: #{tpu_custom_call.1} parent=55 // pred_check_branch
          %1955 = sbr.rel (%p1953) target = $region64
        $region63: #{tpu_custom_call.1} parent=55 // pred_region
          %s1956 = smul.u32 2, %s26
          %s1958 = ssub.s32 512, 512
          %1959 = vsyncadd %s1949, %s1958
          %s1960 = smul.addr %s1956, 2
          %s1961 = smul.addr %s1960, 128
          %s1962 = scalar_lea.hbm %s9, %s1961
          %s1963 = sshll.u32 %s1952, 4
          %s1964 = int_to_ptr.vmem [resolvable:$true] %s1963
          %1969 = dma.vmem_to_hbm [thread:$0]  %s1964, 512, %s1962, %s1949, 256, 256, 16
        $region64: #{tpu_custom_call.1} parent=55 // pred_fallthru
          _
      $region56: #{tpu_custom_call.1} parent=5 // pred_fallthru
        _
      %p1970 = scmp.le.s32.totalorder 2, %s21
      // Predicated region
      $region65: #{tpu_custom_call.1} parent=5 // pred_check
        %p1971 = pneg %p1970
      $region66: #{tpu_custom_call.1} parent=5 // pred_check_branch
        %1973 = sbr.rel (%p1971) target = $region68
      $region67: #{tpu_custom_call.1} parent=5 // pred_region
        %s1974 = ssub.s32 %s21, 2
        // Predicated region
        $region69: #{tpu_custom_call.1} parent=67 // pred_check
          %p1975 = pneg %p244
        $region70: #{tpu_custom_call.1} parent=67 // pred_check_branch
          %1977 = sbr.rel (%p1975) target = $region72
        $region71: #{tpu_custom_call.1} parent=67 // pred_region
          %s1978 = sand.u32 %s229, 1
          %s1979 = scalar_lea.sflag [#allocation5], %s1978
          %s1980 = sand.u32 %s229, 1
          %s1981 = smul.addr %s1980, 32
          %s1982 = scalar_lea.vmem [#allocation6], %s1981
          %1983 = dma.done %s1979, 512
        $region72: #{tpu_custom_call.1} parent=67 // pred_fallthru
          _
      $region68: #{tpu_custom_call.1} parent=5 // pred_fallthru
        _
    $region6: #{tpu_custom_call.1} parent=1 // loop_footer
      %s25 = sadd.s32 1, %s21
    $region7: #{tpu_custom_call.1} parent=1 // loop_footer_branch
      %20 = sbr.rel target = $region3
    $region8: #{tpu_custom_call.1} parent=1 // loop_exit
      _
    %1984 = vsyncpa [#allocation4], 1
    %s1985 = scalar_lea.sflag [#allocation4], 1
    %1986 = vsyncpa %s1985, 1
    %1987 = vsyncpa [#allocation5], 1
    %s1988 = scalar_lea.sflag [#allocation5], 1
    %1989 = vsyncpa %s1988, 1

// kernel: tpu_custom_call.1
$region0: #{tpu_custom_call.1}
  #allocation0 [shape = 'u32[]', space=smem, size = 0x4, offset = 0x4, fixed_abs, tag = 'smem constant byte address 0x4 - core index']
  #allocation1 [shape = 'u32[144,128]{1,0:T(1,128)}', space=vmem, size = 0x12000, scoped, tag = 'internal scratch']
  #allocation2 [shape = 'bf16[2,8,290]{2,1,0:T(8,128)(2,1)}', space=vmem, size = 0x3000, scoped, tag = 'scratch operand']
  %s0 = inlined_call_operand.hbm [shape: f32[4,8,256], index: 0, kind: input, shape index: {}]
  %s1 = inlined_call_operand.vmem [shape: bf16[3,8,24], index: 1, kind: input, shape index: {}]
  %s2 = inlined_call_operand.vmem [shape: f32[8,1], index: 2, kind: input, shape index: {}]
  %s3 = inlined_call_operand.vmem [shape: bf16[3,8,24], index: 3, kind: input, shape index: {}]
  %s4 = inlined_call_operand.vmem [shape: f32[8,1], index: 4, kind: input, shape index: {}]
  %s5 = inlined_call_operand.vmem [shape: bf16[2,8], index: 5, kind: input, shape index: {}]
  %s6 = inlined_call_operand.vmem [shape: f32[2,1], index: 6, kind: input, shape index: {}]
  %s7 = inlined_call_operand.vmem [shape: bf16[8,2], index: 7, kind: input, shape index: {}]
  %s8 = inlined_call_operand.vmem [shape: f32[8,1], index: 8, kind: input, shape index: {}]
  %s9 = inlined_call_operand.hbm [shape: f32[4,8,256], index: 9, kind: output, shape index: {}]
  %s10 = sld [smem:[#allocation0]]
  $region73: #{tpu_custom_call.1} parent=0
    _
  %s12 = ssub.s32 1, %s10
  %s13 = scalar_select 0, %s12, %s10
  $region1: #{tpu_custom_call.1} parent=0
    #allocation3 [shape = 'u8[32768]{0}', space=vmem, size = 0x8000, scoped, tag = 'input window, operand 0']
    #allocation4 [shape = 's32[2]{0}', space=sflag, size = 0x8, scoped, tag = 'scoped memory for tpu_custom_call.1']
    #allocation5 [shape = 's32[2]{0}', space=sflag, size = 0x8, scoped, tag = 'scoped memory for tpu_custom_call.1']
    #allocation6 [shape = 'u8[32768]{0}', space=vmem, size = 0x8000, scoped, tag = 'output window, operand 0']
    %14 = vsyncpa [#allocation4], 0
    %s15 = scalar_lea.sflag [#allocation4], 1
    %16 = vsyncpa %s15, 0
    %17 = vsyncpa [#allocation5], 0
    %s18 = scalar_lea.sflag [#allocation5], 1
    %19 = vsyncpa %s18, 0
    loop: start=0, step=1, limit=4
    $region2: #{tpu_custom_call.1} parent=1 // loop_pre_header
      _
    $region3: #{tpu_custom_call.1} parent=1 // loop_header
      %s21 = sphi 0, %s25
      %p22 = scmp.ge.s32.totalorder %s21, 4
      %s31 = sphi 0, %s33
      %s34 = sphi 0, %s31
      %s35 = sphi 0, %s34
      %s51 = sphi 0, %s35
      %s55 = sphi 0, %s55
      %s57 = sphi 0, %s55
      %s58 = sphi 0, %s57
      %s72 = sphi 0, %s58
      %s76 = sphi 0, %s76
      %s78 = sphi 0, %s76
      %s79 = sphi 0, %s78
      %s93 = sphi 0, %s79
      %s97 = sphi 0, %s97
      %s99 = sphi 0, %s97
      %s100 = sphi 0, %s99
      %s114 = sphi 0, %s100
      %s118 = sphi 0, %s118
      %s120 = sphi 0, %s118
      %s121 = sphi 0, %s120
      %s135 = sphi 0, %s121
      %s139 = sphi 0, %s139
      %s141 = sphi 0, %s139
      %s142 = sphi 0, %s141
      %s156 = sphi 0, %s142
      %s160 = sphi 0, %s160
      %s162 = sphi 0, %s160
      %s163 = sphi 0, %s162
      %s177 = sphi 0, %s163
      %s181 = sphi 0, %s181
      %s183 = sphi 0, %s181
      %s184 = sphi 0, %s183
      %s198 = sphi 0, %s184
      %s202 = sphi 0, %s202
      %s204 = sphi 0, %s202
      %s205 = sphi 0, %s204
      %s219 = sphi 0, %s205
      %s225 = sphi 0, %s227
      %s228 = sphi 0, %s225
      %s229 = sphi 0, %s228
      %s245 = sphi 0, %s229
    $region4: #{tpu_custom_call.1} parent=1 // loop_header_branch
      %24 = sbr.rel (%p22) target = $region8
    $region5: #{tpu_custom_call.1} parent=1 // loop_body
      %s26 = ssub.s32 %s21, 1
      %s27 = ssub.s32 %s21, 2
      %s28 = sadd.s32 %s21, 1
      %s29 = ssub.s32 %s21, %s28
      %p30 = scmp.eq.s32.totalorder %s29, 0
      %s32 = sadd.s32 %s31, 1
      %s33 = scalar_select %p30, %s31, %s32
      %p36 = pneg %p30
      %p37 = scmp.eq.s32.totalorder %s21, 1
      %p38 = por %p36, %p37
      %p39 = scmp.ne.s32.totalorder %s31, %s34
      %p40 = scmp.eq.s32.totalorder %s21, 0
      %p41 = por %p39, %p40
      %p42 = scmp.ne.s32.totalorder %s31, %s34
      %p43 = scmp.eq.s32.totalorder %s26, 1
      %p44 = por %p42, %p43
      %p45 = scmp.ne.s32.totalorder %s34, %s35
      %p46 = scmp.eq.s32.totalorder %s26, 0
      %p47 = por %p45, %p46
      %p48 = scmp.ne.s32.totalorder %s34, %s35
      %p49 = scmp.eq.s32.totalorder %s27, 1
      %p50 = por %p48, %p49
      %p52 = scmp.ne.s32.totalorder %s35, %s51
      %p53 = scmp.eq.s32.totalorder %s27, 0
      %p54 = por %p52, %p53
      %s56 = sadd.s32 %s55, 1
      %p59 = scmp.eq.s32.totalorder %s21, 1
      %p60 = scmp.ne.s32.totalorder %s55, %s57
      %p61 = scmp.eq.s32.totalorder %s21, 0
      %p62 = por %p60, %p61
      %p63 = scmp.ne.s32.totalorder %s55, %s57
      %p64 = scmp.eq.s32.totalorder %s26, 1
      %p65 = por %p63, %p64
      %p66 = scmp.ne.s32.totalorder %s57, %s58
      %p67 = scmp.eq.s32.totalorder %s26, 0
      %p68 = por %p66, %p67
      %p69 = scmp.ne.s32.totalorder %s57, %s58
      %p70 = scmp.eq.s32.totalorder %s27, 1
      %p71 = por %p69, %p70
      %p73 = scmp.ne.s32.totalorder %s58, %s72
      %p74 = scmp.eq.s32.totalorder %s27, 0
      %p75 = por %p73, %p74
      %s77 = sadd.s32 %s76, 1
      %p80 = scmp.eq.s32.totalorder %s21, 1
      %p81 = scmp.ne.s32.totalorder %s76, %s78
      %p82 = scmp.eq.s32.totalorder %s21, 0
      %p83 = por %p81, %p82
      %p84 = scmp.ne.s32.totalorder %s76, %s78
      %p85 = scmp.eq.s32.totalorder %s26, 1
      %p86 = por %p84, %p85
      %p87 = scmp.ne.s32.totalorder %s78, %s79
      %p88 = scmp.eq.s32.totalorder %s26, 0
      %p89 = por %p87, %p88
      %p90 = scmp.ne.s32.totalorder %s78, %s79
      %p91 = scmp.eq.s32.totalorder %s27, 1
      %p92 = por %p90, %p91
      %p94 = scmp.ne.s32.totalorder %s79, %s93
      %p95 = scmp.eq.s32.totalorder %s27, 0
      %p96 = por %p94, %p95
      %s98 = sadd.s32 %s97, 1
      %p101 = scmp.eq.s32.totalorder %s21, 1
      %p102 = scmp.ne.s32.totalorder %s97, %s99
      %p103 = scmp.eq.s32.totalorder %s21, 0
      %p104 = por %p102, %p103
      %p105 = scmp.ne.s32.totalorder %s97, %s99
      %p106 = scmp.eq.s32.totalorder %s26, 1
      %p107 = por %p105, %p106
      %p108 = scmp.ne.s32.totalorder %s99, %s100
      %p109 = scmp.eq.s32.totalorder %s26, 0
      %p110 = por %p108, %p109
      %p111 = scmp.ne.s32.totalorder %s99, %s100
      %p112 = scmp.eq.s32.totalorder %s27, 1
      %p113 = por %p111, %p112
      %p115 = scmp.ne.s32.totalorder %s100, %s114
      %p116 = scmp.eq.s32.totalorder %s27, 0
      %p117 = por %p115, %p116
      %s119 = sadd.s32 %s118, 1
      %p122 = scmp.eq.s32.totalorder %s21, 1
      %p123 = scmp.ne.s32.totalorder %s118, %s120
      %p124 = scmp.eq.s32.totalorder %s21, 0
      %p125 = por %p123, %p124
      %p126 = scmp.ne.s32.totalorder %s118, %s120
      %p127 = scmp.eq.s32.totalorder %s26, 1
      %p128 = por %p126, %p127
      %p129 = scmp.ne.s32.totalorder %s120, %s121
      %p130 = scmp.eq.s32.totalorder %s26, 0
      %p131 = por %p129, %p130
      %p132 = scmp.ne.s32.totalorder %s120, %s121
      %p133 = scmp.eq.s32.totalorder %s27, 1
      %p134 = por %p132, %p133
      %p136 = scmp.ne.s32.totalorder %s121, %s135
      %p137 = scmp.eq.s32.totalorder %s27, 0
      %p138 = por %p136, %p137
      %s140 = sadd.s32 %s139, 1
      %p143 = scmp.eq.s32.totalorder %s21, 1
      %p144 = scmp.ne.s32.totalorder %s139, %s141
      %p145 = scmp.eq.s32.totalorder %s21, 0
      %p146 = por %p144, %p145
      %p147 = scmp.ne.s32.totalorder %s139, %s141
      %p148 = scmp.eq.s32.totalorder %s26, 1
      %p149 = por %p147, %p148
      %p150 = scmp.ne.s32.totalorder %s141, %s142
      %p151 = scmp.eq.s32.totalorder %s26, 0
      %p152 = por %p150, %p151
      %p153 = scmp.ne.s32.totalorder %s141, %s142
      %p154 = scmp.eq.s32.totalorder %s27, 1
      %p155 = por %p153, %p154
      %p157 = scmp.ne.s32.totalorder %s142, %s156
      %p158 = scmp.eq.s32.totalorder %s27, 0
      %p159 = por %p157, %p158
      %s161 = sadd.s32 %s160, 1
      %p164 = scmp.eq.s32.totalorder %s21, 1
      %p165 = scmp.ne.s32.totalorder %s160, %s162
      %p166 = scmp.eq.s32.totalorder %s21, 0
      %p167 = por %p165, %p166
      %p168 = scmp.ne.s32.totalorder %s160, %s162
      %p169 = scmp.eq.s32.totalorder %s26, 1
      %p170 = por %p168, %p169
      %p171 = scmp.ne.s32.totalorder %s162, %s163
      %p172 = scmp.eq.s32.totalorder %s26, 0
      %p173 = por %p171, %p172
      %p174 = scmp.ne.s32.totalorder %s162, %s163
      %p175 = scmp.eq.s32.totalorder %s27, 1
      %p176 = por %p174, %p175
      %p178 = scmp.ne.s32.totalorder %s163, %s177
      %p179 = scmp.eq.s32.totalorder %s27, 0
      %p180 = por %p178, %p179
      %s182 = sadd.s32 %s181, 1
      %p185 = scmp.eq.s32.totalorder %s21, 1
      %p186 = scmp.ne.s32.totalorder %s181, %s183
      %p187 = scmp.eq.s32.totalorder %s21, 0
      %p188 = por %p186, %p187
      %p189 = scmp.ne.s32.totalorder %s181, %s183
      %p190 = scmp.eq.s32.totalorder %s26, 1
      %p191 = por %p189, %p190
      %p192 = scmp.ne.s32.totalorder %s183, %s184
      %p193 = scmp.eq.s32.totalorder %s26, 0
      %p194 = por %p192, %p193
      %p195 = scmp.ne.s32.totalorder %s183, %s184
      %p196 = scmp.eq.s32.totalorder %s27, 1
      %p197 = por %p195, %p196
      %p199 = scmp.ne.s32.totalorder %s184, %s198
      %p200 = scmp.eq.s32.totalorder %s27, 0
      %p201 = por %p199, %p200
      %s203 = sadd.s32 %s202, 1
      %p206 = scmp.eq.s32.totalorder %s21, 1
      %p207 = scmp.ne.s32.totalorder %s202, %s204
      %p208 = scmp.eq.s32.totalorder %s21, 0
      %p209 = por %p207, %p208
      %p210 = scmp.ne.s32.totalorder %s202, %s204
      %p211 = scmp.eq.s32.totalorder %s26, 1
      %p212 = por %p210, %p211
      %p213 = scmp.ne.s32.totalorder %s204, %s205
      %p214 = scmp.eq.s32.totalorder %s26, 0
      %p215 = por %p213, %p214
      %p216 = scmp.ne.s32.totalorder %s204, %s205
      %p217 = scmp.eq.s32.totalorder %s27, 1
      %p218 = por %p216, %p217
      %p220 = scmp.ne.s32.totalorder %s205, %s219
      %p221 = scmp.eq.s32.totalorder %s27, 0
      %p222 = por %p220, %p221
      %s223 = ssub.s32 %s21, %s28
      %p224 = scmp.eq.s32.totalorder %s223, 0
      %s226 = sadd.s32 %s225, 1
      %s227 = scalar_select %p224, %s225, %s226
      %p230 = pneg %p224
      %p231 = scmp.eq.s32.totalorder %s21, 1
      %p232 = por %p230, %p231
      %p233 = scmp.ne.s32.totalorder %s225, %s228
      %p234 = scmp.eq.s32.totalorder %s21, 0
      %p235 = por %p233, %p234
      %p236 = scmp.ne.s32.totalorder %s225, %s228
      %p237 = scmp.eq.s32.totalorder %s26, 1
      %p238 = por %p236, %p237
      %p239 = scmp.ne.s32.totalorder %s228, %s229
      %p240 = scmp.eq.s32.totalorder %s26, 0
      %p241 = por %p239, %p240
      %p242 = scmp.ne.s32.totalorder %s228, %s229
      %p243 = scmp.eq.s32.totalorder %s27, 1
      %p244 = por %p242, %p243
      %p246 = scmp.ne.s32.totalorder %s229, %s245
      %p247 = scmp.eq.s32.totalorder %s27, 0
      %p248 = por %p246, %p247
      %p249 = scmp.le.s32.totalorder 1, %s21
      %p250 = scmp.lt.s32.totalorder %s21, 3
      %p251 = pnand %p249, %p250
      %p252 = pneg %p251
      // Predicated region
      $region9: #{tpu_custom_call.1} parent=5 // pred_check
        _
      $region10: #{tpu_custom_call.1} parent=5 // pred_check_branch
        %254 = sbr.rel (%p251) target = $region12
      $region11: #{tpu_custom_call.1} parent=5 // pred_region
        %s255 = ssub.s32 %s21, 1
        // Predicated region
        $region13: #{tpu_custom_call.1} parent=11 // pred_check
          %p256 = pneg %p68
        $region14: #{tpu_custom_call.1} parent=11 // pred_check_branch
          %258 = sbr.rel (%p256) target = $region16
        $region15: #{tpu_custom_call.1} parent=11 // pred_region
          _
        $region16: #{tpu_custom_call.1} parent=11 // pred_fallthru
          _
        // Predicated region
        $region17: #{tpu_custom_call.1} parent=11 // pred_check
          %p259 = pneg %p89
        $region18: #{tpu_custom_call.1} parent=11 // pred_check_branch
          %261 = sbr.rel (%p259) target = $region20
        $region19: #{tpu_custom_call.1} parent=11 // pred_region
          _
        $region20: #{tpu_custom_call.1} parent=11 // pred_fallthru
          _
        // Predicated region
        $region21: #{tpu_custom_call.1} parent=11 // pred_check
          %p262 = pneg %p110
        $region22: #{tpu_custom_call.1} parent=11 // pred_check_branch
          %264 = sbr.rel (%p262) target = $region24
        $region23: #{tpu_custom_call.1} parent=11 // pred_region
          _
        $region24: #{tpu_custom_call.1} parent=11 // pred_fallthru
          _
        // Predicated region
        $region25: #{tpu_custom_call.1} parent=11 // pred_check
          %p265 = pneg %p131
        $region26: #{tpu_custom_call.1} parent=11 // pred_check_branch
          %267 = sbr.rel (%p265) target = $region28
        $region27: #{tpu_custom_call.1} parent=11 // pred_region
          _
        $region28: #{tpu_custom_call.1} parent=11 // pred_fallthru
          _
        // Predicated region
        $region29: #{tpu_custom_call.1} parent=11 // pred_check
          %p268 = pneg %p152
        $region30: #{tpu_custom_call.1} parent=11 // pred_check_branch
          %270 = sbr.rel (%p268) target = $region32
        $region31: #{tpu_custom_call.1} parent=11 // pred_region
          _
        $region32: #{tpu_custom_call.1} parent=11 // pred_fallthru
          _
        // Predicated region
        $region33: #{tpu_custom_call.1} parent=11 // pred_check
          %p271 = pneg %p173
        $region34: #{tpu_custom_call.1} parent=11 // pred_check_branch
          %273 = sbr.rel (%p271) target = $region36
        $region35: #{tpu_custom_call.1} parent=11 // pred_region
          _
        $region36: #{tpu_custom_call.1} parent=11 // pred_fallthru
          _
        // Predicated region
        $region37: #{tpu_custom_call.1} parent=11 // pred_check
          %p274 = pneg %p194
        $region38: #{tpu_custom_call.1} parent=11 // pred_check_branch
          %276 = sbr.rel (%p274) target = $region40
        $region39: #{tpu_custom_call.1} parent=11 // pred_region
          _
        $region40: #{tpu_custom_call.1} parent=11 // pred_fallthru
          _
        // Predicated region
        $region41: #{tpu_custom_call.1} parent=11 // pred_check
          %p277 = pneg %p215
        $region42: #{tpu_custom_call.1} parent=11 // pred_check_branch
          %279 = sbr.rel (%p277) target = $region44
        $region43: #{tpu_custom_call.1} parent=11 // pred_region
          _
        $region44: #{tpu_custom_call.1} parent=11 // pred_fallthru
          _
      $region12: #{tpu_custom_call.1} parent=5 // pred_fallthru
        _
      %p280 = scmp.lt.s32.totalorder %s21, 2
      // Predicated region
      $region45: #{tpu_custom_call.1} parent=5 // pred_check
        %p281 = pneg %p280
      $region46: #{tpu_custom_call.1} parent=5 // pred_check_branch
        %283 = sbr.rel (%p281) target = $region48
      $region47: #{tpu_custom_call.1} parent=5 // pred_region
        // Predicated region
        $region49: #{tpu_custom_call.1} parent=47 // pred_check
          %p284 = pneg %p41
        $region50: #{tpu_custom_call.1} parent=47 // pred_check_branch
          %286 = sbr.rel (%p284) target = $region52
        $region51: #{tpu_custom_call.1} parent=47 // pred_region
          %s287 = sand.u32 %s31, 1
          %s288 = scalar_lea.sflag [#allocation4], %s287
          %s289 = sand.u32 %s31, 1
          %s290 = smul.addr %s289, 32
          %s291 = scalar_lea.vmem [#allocation3], %s290
          %s292 = smul.u32 2, %s21
          %s294 = ssub.s32 512, 512
          %295 = vsyncadd %s288, %s294
          %s296 = smul.addr %s292, 2
          %s297 = smul.addr %s296, 128
          %s298 = scalar_lea.hbm %s0, %s297
          %s299 = sshll.u32 %s291, 4
          %s300 = int_to_ptr.vmem [resolvable:$true] %s299
          %305 = dma.hbm_to_vmem [thread:$0]  %s298, 512, %s300, %s288, 256, 256, 16
        $region52: #{tpu_custom_call.1} parent=47 // pred_fallthru
          _
      $region48: #{tpu_custom_call.1} parent=5 // pred_fallthru
        _
      %p306 = scmp.le.s32.totalorder 1, %s21
      %p307 = scmp.lt.s32.totalorder %s21, 3
      %p308 = pnand %p306, %p307
      %p309 = pneg %p308
      // Predicated region
      $region53: #{tpu_custom_call.1} parent=5 // pred_check
        _
      $region54: #{tpu_custom_call.1} parent=5 // pred_check_branch
        %311 = sbr.rel (%p308) target = $region56
      $region55: #{tpu_custom_call.1} parent=5 // pred_region
        %s312 = ssub.s32 %s21, 1
        %s313 = sand.u32 %s34, 1
        %s314 = scalar_lea.sflag [#allocation4], %s313
        %s315 = sand.u32 %s34, 1
        %s316 = smul.addr %s315, 32
        %s317 = scalar_lea.vmem [#allocation3], %s316
        // Predicated region
        $region57: #{tpu_custom_call.1} parent=55 // pred_check
          %p318 = pneg %p47
        $region58: #{tpu_custom_call.1} parent=55 // pred_check_branch
          %320 = sbr.rel (%p318) target = $region60
        $region59: #{tpu_custom_call.1} parent=55 // pred_region
          %321 = dma.done %s314, 512
        $region60: #{tpu_custom_call.1} parent=55 // pred_fallthru
          _
        %s322 = sand.u32 %s34, 1
        %s323 = scalar_lea.sflag [#allocation4], %s322
        %s324 = sand.u32 %s34, 1
        %s325 = smul.addr %s324, 32
        %s326 = scalar_lea.vmem [#allocation3], %s325
        %p327 = pneg %p47
        %p328 = pneg %p44
        %p329 = pneg %p68
        %p330 = pneg %p65
        %p331 = pneg %p89
        %p332 = pneg %p86
        %p333 = pneg %p110
        %p334 = pneg %p107
        %p335 = pneg %p131
        %p336 = pneg %p128
        %p337 = pneg %p152
        %p338 = pneg %p149
        %p339 = pneg %p173
        %p340 = pneg %p170
        %p341 = pneg %p194
        %p342 = pneg %p191
        %p343 = pneg %p215
        %p344 = pneg %p212
        %p345 = pneg %p241
        %p346 = pneg %p238
        %s347 = sand.u32 %s228, 1
        %s348 = scalar_lea.sflag [#allocation5], %s347
        %s349 = sand.u32 %s228, 1
        %s350 = smul.addr %s349, 32
        %s351 = scalar_lea.vmem [#allocation6], %s350
        %s352 = smul.u32 2, %s26
        %s353 = smul.u32 2, %s26
        %v357 = vlaneseq
        %v358 = vand.u32 %v357, 127
        %v359 = vadd.s32 %v358, 128
        %vm360 = vcmp.lt.s32.totalorder %v358, 0
        %v361 = vsub.s32 0, %v358
        %v362 = vsel %vm360, %v361, %v358
        %v363 = vshrl.u32 %v362, 4
        %v364 = vand.u32 %v362, 15
        %v365 = vsub.s32 0, %v364
        %v366 = vsel %vm360, %v365, %v364
        %vm367 = vcmp.lt.s32.totalorder %v359, 0
        %v368 = vsub.s32 0, %v359
        %v369 = vsel %vm367, %v368, %v359
        %v370 = vshrl.u32 %v369, 4
        %v371 = vand.u32 %v369, 15
        %v372 = vsub.s32 0, %v371
        %v373 = vsel %vm367, %v372, %v371
        %vm374 = vcmp.ne.s32.totalorder %v366, 0
        %vm375 = vcmp.ne.s32.totalorder %v373, 0
        %vm376 = vcmp.lt.s32.totalorder %v366, 0
        %vm377 = vcmp.lt.s32.totalorder %v373, 0
        %vm378 = vmand %vm376, %vm374
        %vm379 = vmand %vm377, %vm375
        %v380 = vadd.s32 %v366, 16
        %v381 = vadd.s32 %v373, 16
        %v382 = vsel %vm378, %v380, %v366
        %v383 = vsel %vm379, %v381, %v373
        %vm384 = vcmp.ne.s32.totalorder %v382, 0
        %vm385 = vcmp.ne.s32.totalorder %v383, 0
        %vm386 = vcmp.ne.s32.totalorder %v382, 15
        %vm387 = vcmp.ne.s32.totalorder %v383, 15
        %vm388 = vcmask 134144
        %389 = vst.msk [vmem:[#allocation2] sm:$0xf] %vm388, 0
        %390 = vst.msk [vmem:[#allocation2 + $0xc] sm:$0xf] %vm388, 0
        %vm391 = vcmask 273544
        %392 = vst.msk [vmem:[#allocation2 + $0x8] sm:$0xf] %vm391, 0
        %393 = vst.msk [vmem:[#allocation2 + $0x14] sm:$0xf] %vm391, 0
        %v394 = vld [vmem:[%s317] sm:$0xff]
        %v395 = vld [vmem:[%s317 + $0x8] sm:$0xff]
        %v396 = vld [vmem:[%s317 + $0x10] sm:$0xff]
        %v397 = vld [vmem:[%s317 + $0x18] sm:$0xff]
        %v398 = vpack.c.bf16 %v394, %v394
        %v399 = vpack.c.bf16 %v395, %v395
        %v400 = vpack.c.bf16 %v396, %v396
        %v401 = vpack.c.bf16 %v397, %v397
        %v406 = vunpack.c.l.b16 %v398
        %v407 = vunpack.c.l.b16 %v399
        %v408 = vunpack.c.l.b16 %v400
        %v409 = vunpack.c.l.b16 %v401
        %v410 = vpack.c.b16 %v407, %v406
        %v411 = vpack.c.b16 %v409, %v408
        %412 = vrot.lane.b32.xlu0 %v410, 17
        %v413 = vpop.permute.xlu0 %412
        %414 = vrot.lane.b32.xlu0 %v411, 17
        %v415 = vpop.permute.xlu0 %414
        %v416 = vrot.slane %v413, 4
        %v417 = vrot.slane %v415, 4
        %vm418 = vcmask 138240
        %v419 = vsel %vm418, %v416, %v413
        %v420 = vsel %vm418, %v417, %v415
        %vm425 = vcmask 1043592
        %vm426 = vcmask 1047556
        %vm427 = vmor %vm426, %vm425
        %428 = vst.msk [vmem:[#allocation2] sm:$0xff] %vm427, %v419
        %429 = vst.msk [vmem:[#allocation2 + $0x8] sm:$0xf] %vm388, %v416
        %430 = vst.msk [vmem:[#allocation2 + $0xc] sm:$0xff] %vm427, %v420
        %431 = vst.msk [vmem:[#allocation2 + $0x14] sm:$0xf] %vm388, %v417
        %v432 = vld [vmem:[#allocation2] sm:$0xff]
        %v433 = vld [vmem:[#allocation2 + $0x8] sm:$0xf]
        %v434 = vsel %vm384, 1, 0
        %v435 = vsel %vm385, 1, 0
        %vm436 = vcmp.eq.s32.totalorder %v434, 1
        %vm437 = vcmp.eq.s32.totalorder %v435, 1
        %vm438 = vmpackc.low %vm437, %vm436
        %v439 = vsel %vm438, %v432, 0
        %v440 = vsel %vm386, 1, 0
        %v441 = vsel %vm387, 1, 0
        %vm442 = vcmp.eq.s32.totalorder %v440, 1
        %vm443 = vcmp.eq.s32.totalorder %v441, 1
        %vm444 = vmpackc.low %vm443, %vm442
        %v445 = vsel %vm444, 65537, 0
        %446 = vrot.lane.b32.xlu0 %v445, 2
        %v447 = vpop.permute.xlu0 %446
        %v448 = vrot.slane %v447, 4
        %vm449 = vcmask 15360
        %v450 = vsel %vm449, %v448, %v447
        %vm451 = vcmp.ne.s16.totalorder %v450, 0
        %vm452 = vcmp.ne.s16.totalorder %v448, 0
        %v453 = vsel %vm451, %v432, 0
        %v454 = vsel %vm452, %v433, 0
        %v456 = vunpack.c.l.b16 %v439
        %v457 = vunpack.c.h.b16 %v439
        %v458 = vpack.c.b16 %v456, %v456
        %v459 = vpack.c.b16 %v457, %v457
        %v462 = vunpack.c.l.b16 %v432
        %v463 = vunpack.c.h.b16 %v432
        %v464 = vunpack.c.l.b16 %v433
        %v465 = vpack.c.b16 %v462, %v462
        %v466 = vpack.c.b16 %v463, %v463
        %v467 = vpack.c.b16 %v464, %v464
        %468 = vrot.lane.b32.xlu0 %v465, 127
        %v469 = vpop.permute.xlu0 %468
        %470 = vrot.lane.b32.xlu0 %v466, 127
        %v471 = vpop.permute.xlu0 %470
        %472 = vrot.lane.b32.xlu0 %v467, 127
        %v473 = vpop.permute.xlu0 %472
        %vm474 = vcmask 1039360
        %v475 = vsel %vm474, %v469, %v471
        %v476 = vsel %vm474, %v471, %v473
        %v479 = vunpack.c.l.b16 %v453
        %v480 = vunpack.c.h.b16 %v453
        %v481 = vunpack.c.l.b16 %v454
        %v482 = vpack.c.b16 %v479, %v479
        %v483 = vpack.c.b16 %v480, %v480
        %v484 = vpack.c.b16 %v481, %v481
        %485 = vrot.lane.b32.xlu0 %v482, 126
        %v486 = vpop.permute.xlu0 %485
        %487 = vrot.lane.b32.xlu0 %v483, 126
        %v488 = vpop.permute.xlu0 %487
        %489 = vrot.lane.b32.xlu0 %v484, 126
        %v490 = vpop.permute.xlu0 %489
        %vm491 = vcmask 1031168
        %v492 = vsel %vm491, %v486, %v488
        %v493 = vsel %vm491, %v488, %v490
        %vm494 = vcmask 1043456
        %v497 = vsel %vm494, %v458, %v475
        %v501 = vsel %vm494, %v459, %v476
        %s503 = scalar_lea.vmem [#allocation2], 12
        %v504 = vld [vmem:[%s503] sm:$0xff]
        %v505 = vld [vmem:[%s503 + $0x8] sm:$0xf]
        %v506 = vsel %vm438, %v504, 0
        %v507 = vsel %vm451, %v504, 0
        %v508 = vsel %vm452, %v505, 0
        %v510 = vunpack.c.l.b16 %v506
        %v511 = vunpack.c.h.b16 %v506
        %v512 = vpack.c.b16 %v510, %v510
        %v513 = vpack.c.b16 %v511, %v511
        %v516 = vunpack.c.l.b16 %v504
        %v517 = vunpack.c.h.b16 %v504
        %v518 = vunpack.c.l.b16 %v505
        %v519 = vpack.c.b16 %v516, %v516
        %v520 = vpack.c.b16 %v517, %v517
        %v521 = vpack.c.b16 %v518, %v518
        %522 = vrot.lane.b32.xlu0 %v519, 127
        %v523 = vpop.permute.xlu0 %522
        %524 = vrot.lane.b32.xlu0 %v520, 127
        %v525 = vpop.permute.xlu0 %524
        %526 = vrot.lane.b32.xlu0 %v521, 127
        %v527 = vpop.permute.xlu0 %526
        %v528 = vsel %vm474, %v523, %v525
        %v529 = vsel %vm474, %v525, %v527
        %v532 = vunpack.c.l.b16 %v507
        %v533 = vunpack.c.h.b16 %v507
        %v534 = vunpack.c.l.b16 %v508
        %v535 = vpack.c.b16 %v532, %v532
        %v536 = vpack.c.b16 %v533, %v533
        %v537 = vpack.c.b16 %v534, %v534
        %538 = vrot.lane.b32.xlu0 %v535, 126
        %v539 = vpop.permute.xlu0 %538
        %540 = vrot.lane.b32.xlu0 %v536, 126
        %v541 = vpop.permute.xlu0 %540
        %542 = vrot.lane.b32.xlu0 %v537, 126
        %v543 = vpop.permute.xlu0 %542
        %v544 = vsel %vm491, %v539, %v541
        %v545 = vsel %vm491, %v541, %v543
        %v548 = vsel %vm494, %v512, %v528
        %v552 = vsel %vm494, %v513, %v529
        %v554 = vld [vmem:[%s1] sm:$0xf]
        %v555 = vsel %vm438, 65537, 0
        %556 = vrot.lane.b32.xlu0 %v555, 16
        %v557 = vpop.permute.xlu0 %556
        %v558 = vrot.slane %v557, 4
        %vm559 = vcmask 130048
        %v560 = vsel %vm559, %v558, %v557
        %vm561 = vcmp.ne.s16.totalorder %v560, 0
        %vm562 = vcmp.ne.s16.totalorder %v558, 0
        %v563 = vsel %vm561, %v432, 0
        %v564 = vsel %vm562, %v433, 0
        %565 = vrot.lane.b32.xlu0 %v445, 18
        %v566 = vpop.permute.xlu0 %565
        %v567 = vrot.slane %v566, 4
        %vm568 = vcmask 146432
        %v569 = vsel %vm568, %v567, %v566
        %vm570 = vcmp.ne.s16.totalorder %v569, 0
        %vm571 = vcmp.ne.s16.totalorder %v567, 0
        %v572 = vsel %vm570, %v432, 0
        %v573 = vsel %vm571, %v433, 0
        %v576 = vunpack.c.l.b16 %v563
        %v577 = vunpack.c.h.b16 %v563
        %v578 = vunpack.c.l.b16 %v564
        %v579 = vpack.c.b16 %v576, %v576
        %v580 = vpack.c.b16 %v577, %v577
        %v581 = vpack.c.b16 %v578, %v578
        %v584 = vunpack.c.l.b16 %v572
        %v585 = vunpack.c.h.b16 %v572
        %v586 = vunpack.c.l.b16 %v573
        %v587 = vpack.c.b16 %v584, %v584
        %v588 = vpack.c.b16 %v585, %v585
        %v589 = vpack.c.b16 %v586, %v586
        %590 = vrot.lane.b32.xlu0 %v587, 126
        %v591 = vpop.permute.xlu0 %590
        %592 = vrot.lane.b32.xlu0 %v588, 126
        %v593 = vpop.permute.xlu0 %592
        %594 = vrot.lane.b32.xlu0 %v589, 126
        %v595 = vpop.permute.xlu0 %594
        %v596 = vsel %vm491, %v591, %v593
        %v597 = vsel %vm491, %v593, %v595
        %v599 = vsel %vm494, %v579, %v475
        %v601 = vsel %vm494, %v580, %v476
        %v604 = vsel %vm494, %v581, %v473
        %v605 = vsel %vm561, %v504, 0
        %v606 = vsel %vm562, %v505, 0
        %v607 = vsel %vm570, %v504, 0
        %v608 = vsel %vm571, %v505, 0
        %v611 = vunpack.c.l.b16 %v605
        %v612 = vunpack.c.h.b16 %v605
        %v613 = vunpack.c.l.b16 %v606
        %v614 = vpack.c.b16 %v611, %v611
        %v615 = vpack.c.b16 %v612, %v612
        %v616 = vpack.c.b16 %v613, %v613
        %v619 = vunpack.c.l.b16 %v607
        %v620 = vunpack.c.h.b16 %v607
        %v621 = vunpack.c.l.b16 %v608
        %v622 = vpack.c.b16 %v619, %v619
        %v623 = vpack.c.b16 %v620, %v620
        %v624 = vpack.c.b16 %v621, %v621
        %625 = vrot.lane.b32.xlu0 %v622, 126
        %v626 = vpop.permute.xlu0 %625
        %627 = vrot.lane.b32.xlu0 %v623, 126
        %v628 = vpop.permute.xlu0 %627
        %629 = vrot.lane.b32.xlu0 %v624, 126
        %v630 = vpop.permute.xlu0 %629
        %v631 = vsel %vm491, %v626, %v628
        %v632 = vsel %vm491, %v628, %v630
        %v634 = vsel %vm494, %v614, %v528
        %v636 = vsel %vm494, %v615, %v529
        %v639 = vsel %vm494, %v616, %v527
        %643 = vrot.lane.b32.xlu0 %v599, 112
        %v644 = vpop.permute.xlu0 %643
        %645 = vrot.lane.b32.xlu0 %v601, 112
        %v646 = vpop.permute.xlu0 %645
        %647 = vrot.lane.b32.xlu0 %v604, 112
        %v648 = vpop.permute.xlu0 %647
        %649 = vrot.lane.b32.xlu0 %v596, 112
        %v650 = vpop.permute.xlu0 %649
        %651 = vrot.lane.b32.xlu0 %v597, 112
        %v652 = vpop.permute.xlu0 %651
        %653 = vrot.lane.b32.xlu0 %v595, 112
        %v654 = vpop.permute.xlu0 %653
        %vm655 = vcmask 916480
        %v656 = vsel %vm655, %v644, %v646
        %v657 = vsel %vm655, %v646, %v648
        %v658 = vsel %vm655, %v650, %v652
        %v659 = vsel %vm655, %v652, %v654
        %665 = vrot.lane.b32.xlu0 %v634, 112
        %v666 = vpop.permute.xlu0 %665
        %667 = vrot.lane.b32.xlu0 %v636, 112
        %v668 = vpop.permute.xlu0 %667
        %669 = vrot.lane.b32.xlu0 %v639, 112
        %v670 = vpop.permute.xlu0 %669
        %671 = vrot.lane.b32.xlu0 %v631, 112
        %v672 = vpop.permute.xlu0 %671
        %673 = vrot.lane.b32.xlu0 %v632, 112
        %v674 = vpop.permute.xlu0 %673
        %675 = vrot.lane.b32.xlu0 %v630, 112
        %v676 = vpop.permute.xlu0 %675
        %v677 = vsel %vm655, %v666, %v668
        %v678 = vsel %vm655, %v668, %v670
        %v679 = vsel %vm655, %v672, %v674
        %v680 = vsel %vm655, %v674, %v676
        %s683 = scalar_lea.vmem %s1, 4
        %v684 = vld [vmem:[%s683] sm:$0xf]
        %vm685 = vcmask 195584
        %v687 = vsel %vm685, %v684, 0
        %v690 = vsel %vm494, %v658, 0
        %v693 = vsel %vm494, %v659, 0
        %v696 = vsel %vm494, %v679, 0
        %v699 = vsel %vm494, %v680, 0
        %701 = vmatprep.subr.bf16.mxu0 0
        %702 = vmatpush1.bf16.msra.mxu0 0
        %703 = vmatprep.subr.bf16.mxu0 0
        %704 = vmatpush1.bf16.msra.mxu0 0
        %705 = vmatprep.subr.bf16.mxu0 0
        %706 = vmatpush1.bf16.msra.mxu0 0
        %707 = vmatprep.subr.bf16.mxu0 0
        %708 = vmatpush1.bf16.msra.mxu0 0
        %709 = vmatprep.subr.bf16.mxu0 0
        %710 = vmatpush1.bf16.msra.mxu0 0
        %711 = vmatprep.subr.bf16.mxu0 0
        %712 = vmatpush1.bf16.msra.mxu0 0
        %713 = vmatprep.subr.bf16.mxu0 %v693
        %714 = vmatpush1.bf16.msra.mxu0 %v690
        %715 = vmatprep.subr.bf16.mxu0 %v657
        %716 = vmatpush1.bf16.msra.mxu0 %v656
        %717 = vmatprep.subr.bf16.mxu0 0
        %718 = vmatpush2.bf16.msra.mxu0 0
        %719 = vmatprep.subr.bf16.mxu0 0
        %720 = vmatpush2.bf16.msra.mxu0 0
        %721 = vmatprep.subr.bf16.mxu0 0
        %722 = vmatpush2.bf16.msra.mxu0 0
        %723 = vmatprep.subr.bf16.mxu0 0
        %724 = vmatpush2.bf16.msra.mxu0 0
        %725 = vmatprep.subr.bf16.mxu0 0
        %726 = vmatpush2.bf16.msra.mxu0 0
        %727 = vmatprep.subr.bf16.mxu0 0
        %728 = vmatpush2.bf16.msra.mxu0 0
        %729 = vmatprep.subr.bf16.mxu0 0
        %730 = vmatpush2.bf16.msra.mxu0 0
        %731 = vmatprep.subr.bf16.mxu0 0
        %732 = vmatpush2.bf16.msra.mxu0 0
        %733 = vmatprep.mubr.bf16.mxu0 0
        %734 = vmatmul.mubr.bf16.gmra.mxu0 %v687
        %v735 = vpop.f32.mrf.mxu0
        %v736 = vadd.f32 0.0, %v735
        %v737 = vpop.f32.mrf.mxu0
        %v738 = vadd.f32 0.0, %v737
        %v739 = vpop.f32.mrf.mxu0
        %v740 = vpop.f32.mrf.mxu0
        %741 = vdwg.mxu0
        %742 = vmatprep.subr.bf16.mxu0 0
        %743 = vmatpush1.bf16.msra.mxu0 0
        %744 = vmatprep.subr.bf16.mxu0 0
        %745 = vmatpush1.bf16.msra.mxu0 0
        %746 = vmatprep.subr.bf16.mxu0 0
        %747 = vmatpush1.bf16.msra.mxu0 0
        %748 = vmatprep.subr.bf16.mxu0 0
        %749 = vmatpush1.bf16.msra.mxu0 0
        %750 = vmatprep.subr.bf16.mxu0 0
        %751 = vmatpush1.bf16.msra.mxu0 0
        %752 = vmatprep.subr.bf16.mxu0 0
        %753 = vmatpush1.bf16.msra.mxu0 0
        %754 = vmatprep.subr.bf16.mxu0 %v699
        %755 = vmatpush1.bf16.msra.mxu0 %v696
        %756 = vmatprep.subr.bf16.mxu0 %v678
        %757 = vmatpush1.bf16.msra.mxu0 %v677
        %758 = vmatprep.subr.bf16.mxu0 0
        %759 = vmatpush2.bf16.msra.mxu0 0
        %760 = vmatprep.subr.bf16.mxu0 0
        %761 = vmatpush2.bf16.msra.mxu0 0
        %762 = vmatprep.subr.bf16.mxu0 0
        %763 = vmatpush2.bf16.msra.mxu0 0
        %764 = vmatprep.subr.bf16.mxu0 0
        %765 = vmatpush2.bf16.msra.mxu0 0
        %766 = vmatprep.subr.bf16.mxu0 0
        %767 = vmatpush2.bf16.msra.mxu0 0
        %768 = vmatprep.subr.bf16.mxu0 0
        %769 = vmatpush2.bf16.msra.mxu0 0
        %770 = vmatprep.subr.bf16.mxu0 0
        %771 = vmatpush2.bf16.msra.mxu0 0
        %772 = vmatprep.subr.bf16.mxu0 0
        %773 = vmatpush2.bf16.msra.mxu0 0
        %774 = vmatprep.mubr.bf16.mxu0 0
        %775 = vmatmul.mubr.bf16.gmra.mxu0 %v687
        %v776 = vpop.f32.mrf.mxu0
        %v777 = vadd.f32 0.0, %v776
        %v778 = vpop.f32.mrf.mxu0
        %v779 = vadd.f32 0.0, %v778
        %v780 = vpop.f32.mrf.mxu0
        %v781 = vpop.f32.mrf.mxu0
        %782 = vdwg.mxu0
        %v784 = vsel %vm685, %v554, 0
        %v787 = vsel %vm494, %v492, 0
        %v790 = vsel %vm494, %v493, 0
        %v793 = vsel %vm494, %v544, 0
        %v796 = vsel %vm494, %v545, 0
        %798 = vmatprep.subr.bf16.mxu0 0
        %799 = vmatpush1.bf16.msra.mxu0 0
        %800 = vmatprep.subr.bf16.mxu0 0
        %801 = vmatpush1.bf16.msra.mxu0 0
        %802 = vmatprep.subr.bf16.mxu0 0
        %803 = vmatpush1.bf16.msra.mxu0 0
        %804 = vmatprep.subr.bf16.mxu0 0
        %805 = vmatpush1.bf16.msra.mxu0 0
        %806 = vmatprep.subr.bf16.mxu0 0
        %807 = vmatpush1.bf16.msra.mxu0 0
        %808 = vmatprep.subr.bf16.mxu0 0
        %809 = vmatpush1.bf16.msra.mxu0 0
        %810 = vmatprep.subr.bf16.mxu0 %v790
        %811 = vmatpush1.bf16.msra.mxu0 %v787
        %812 = vmatprep.subr.bf16.mxu0 %v501
        %813 = vmatpush1.bf16.msra.mxu0 %v497
        %814 = vmatprep.subr.bf16.mxu0 0
        %815 = vmatpush2.bf16.msra.mxu0 0
        %816 = vmatprep.subr.bf16.mxu0 0
        %817 = vmatpush2.bf16.msra.mxu0 0
        %818 = vmatprep.subr.bf16.mxu0 0
        %819 = vmatpush2.bf16.msra.mxu0 0
        %820 = vmatprep.subr.bf16.mxu0 0
        %821 = vmatpush2.bf16.msra.mxu0 0
        %822 = vmatprep.subr.bf16.mxu0 0
        %823 = vmatpush2.bf16.msra.mxu0 0
        %824 = vmatprep.subr.bf16.mxu0 0
        %825 = vmatpush2.bf16.msra.mxu0 0
        %826 = vmatprep.subr.bf16.mxu0 0
        %827 = vmatpush2.bf16.msra.mxu0 0
        %828 = vmatprep.subr.bf16.mxu0 0
        %829 = vmatpush2.bf16.msra.mxu0 0
        %830 = vmatprep.mubr.bf16.mxu0 0
        %831 = vmatmul.mubr.bf16.gmra.mxu0 %v784
        %v832 = vpop.f32.mrf.mxu0
        %v833 = vadd.f32 %v736, %v832
        %v834 = vpop.f32.mrf.mxu0
        %v835 = vadd.f32 %v738, %v834
        %v836 = vpop.f32.mrf.mxu0
        %v837 = vpop.f32.mrf.mxu0
        %838 = vdwg.mxu0
        %839 = vmatprep.subr.bf16.mxu0 0
        %840 = vmatpush1.bf16.msra.mxu0 0
        %841 = vmatprep.subr.bf16.mxu0 0
        %842 = vmatpush1.bf16.msra.mxu0 0
        %843 = vmatprep.subr.bf16.mxu0 0
        %844 = vmatpush1.bf16.msra.mxu0 0
        %845 = vmatprep.subr.bf16.mxu0 0
        %846 = vmatpush1.bf16.msra.mxu0 0
        %847 = vmatprep.subr.bf16.mxu0 0
        %848 = vmatpush1.bf16.msra.mxu0 0
        %849 = vmatprep.subr.bf16.mxu0 0
        %850 = vmatpush1.bf16.msra.mxu0 0
        %851 = vmatprep.subr.bf16.mxu0 %v796
        %852 = vmatpush1.bf16.msra.mxu0 %v793
        %853 = vmatprep.subr.bf16.mxu0 %v552
        %854 = vmatpush1.bf16.msra.mxu0 %v548
        %855 = vmatprep.subr.bf16.mxu0 0
        %856 = vmatpush2.bf16.msra.mxu0 0
        %857 = vmatprep.subr.bf16.mxu0 0
        %858 = vmatpush2.bf16.msra.mxu0 0
        %859 = vmatprep.subr.bf16.mxu0 0
        %860 = vmatpush2.bf16.msra.mxu0 0
        %861 = vmatprep.subr.bf16.mxu0 0
        %862 = vmatpush2.bf16.msra.mxu0 0
        %863 = vmatprep.subr.bf16.mxu0 0
        %864 = vmatpush2.bf16.msra.mxu0 0
        %865 = vmatprep.subr.bf16.mxu0 0
        %866 = vmatpush2.bf16.msra.mxu0 0
        %867 = vmatprep.subr.bf16.mxu0 0
        %868 = vmatpush2.bf16.msra.mxu0 0
        %869 = vmatprep.subr.bf16.mxu0 0
        %870 = vmatpush2.bf16.msra.mxu0 0
        %871 = vmatprep.mubr.bf16.mxu0 0
        %872 = vmatmul.mubr.bf16.gmra.mxu0 %v784
        %v873 = vpop.f32.mrf.mxu0
        %v874 = vadd.f32 %v777, %v873
        %v875 = vpop.f32.mrf.mxu0
        %v876 = vadd.f32 %v779, %v875
        %v877 = vpop.f32.mrf.mxu0
        %v878 = vpop.f32.mrf.mxu0
        %879 = vdwg.mxu0
        %880 = vrot.lane.b32.xlu0 %v555, 32
        %v881 = vpop.permute.xlu0 %880
        %v882 = vrot.slane %v881, 4
        %vm883 = vcmask 261120
        %v884 = vsel %vm883, %v882, %v881
        %vm885 = vcmp.ne.s16.totalorder %v884, 0
        %vm886 = vcmp.ne.s16.totalorder %v882, 0
        %v887 = vsel %vm885, %v432, 0
        %v888 = vsel %vm886, %v433, 0
        %889 = vrot.lane.b32.xlu0 %v445, 34
        %v890 = vpop.permute.xlu0 %889
        %v891 = vrot.slane %v890, 4
        %vm892 = vcmask 277504
        %v893 = vsel %vm892, %v891, %v890
        %vm894 = vcmp.ne.s16.totalorder %v893, 0
        %vm895 = vcmp.ne.s16.totalorder %v891, 0
        %v896 = vsel %vm894, %v432, 0
        %v897 = vsel %vm895, %v433, 0
        %v900 = vunpack.c.l.b16 %v887
        %v901 = vunpack.c.h.b16 %v887
        %v902 = vunpack.c.l.b16 %v888
        %v903 = vpack.c.b16 %v900, %v900
        %v904 = vpack.c.b16 %v901, %v901
        %v905 = vpack.c.b16 %v902, %v902
        %v908 = vunpack.c.l.b16 %v896
        %v909 = vunpack.c.h.b16 %v896
        %v910 = vunpack.c.l.b16 %v897
        %v911 = vpack.c.b16 %v908, %v908
        %v912 = vpack.c.b16 %v909, %v909
        %v913 = vpack.c.b16 %v910, %v910
        %914 = vrot.lane.b32.xlu0 %v911, 126
        %v915 = vpop.permute.xlu0 %914
        %916 = vrot.lane.b32.xlu0 %v912, 126
        %v917 = vpop.permute.xlu0 %916
        %918 = vrot.lane.b32.xlu0 %v913, 126
        %v919 = vpop.permute.xlu0 %918
        %v920 = vsel %vm491, %v915, %v917
        %v921 = vsel %vm491, %v917, %v919
        %v923 = vsel %vm494, %v903, %v475
        %v925 = vsel %vm494, %v904, %v476
        %v927 = vsel %vm494, %v905, %v473
        %v928 = vsel %vm885, %v504, 0
        %v929 = vsel %vm886, %v505, 0
        %v930 = vsel %vm894, %v504, 0
        %v931 = vsel %vm895, %v505, 0
        %v934 = vunpack.c.l.b16 %v928
        %v935 = vunpack.c.h.b16 %v928
        %v936 = vunpack.c.l.b16 %v929
        %v937 = vpack.c.b16 %v934, %v934
        %v938 = vpack.c.b16 %v935, %v935
        %v939 = vpack.c.b16 %v936, %v936
        %v942 = vunpack.c.l.b16 %v930
        %v943 = vunpack.c.h.b16 %v930
        %v944 = vunpack.c.l.b16 %v931
        %v945 = vpack.c.b16 %v942, %v942
        %v946 = vpack.c.b16 %v943, %v943
        %v947 = vpack.c.b16 %v944, %v944
        %948 = vrot.lane.b32.xlu0 %v945, 126
        %v949 = vpop.permute.xlu0 %948
        %950 = vrot.lane.b32.xlu0 %v946, 126
        %v951 = vpop.permute.xlu0 %950
        %952 = vrot.lane.b32.xlu0 %v947, 126
        %v953 = vpop.permute.xlu0 %952
        %v954 = vsel %vm491, %v949, %v951
        %v955 = vsel %vm491, %v951, %v953
        %v957 = vsel %vm494, %v937, %v528
        %v959 = vsel %vm494, %v938, %v529
        %v961 = vsel %vm494, %v939, %v527
        %965 = vrot.lane.b32.xlu0 %v923, 96
        %v966 = vpop.permute.xlu0 %965
        %967 = vrot.lane.b32.xlu0 %v925, 96
        %v968 = vpop.permute.xlu0 %967
        %969 = vrot.lane.b32.xlu0 %v927, 96
        %v970 = vpop.permute.xlu0 %969
        %971 = vrot.lane.b32.xlu0 %v920, 96
        %v972 = vpop.permute.xlu0 %971
        %973 = vrot.lane.b32.xlu0 %v921, 96
        %v974 = vpop.permute.xlu0 %973
        %975 = vrot.lane.b32.xlu0 %v919, 96
        %v976 = vpop.permute.xlu0 %975
        %vm977 = vcmask 785408
        %v978 = vsel %vm977, %v966, %v968
        %v979 = vsel %vm977, %v968, %v970
        %v980 = vsel %vm977, %v972, %v974
        %v981 = vsel %vm977, %v974, %v976
        %987 = vrot.lane.b32.xlu0 %v957, 96
        %v988 = vpop.permute.xlu0 %987
        %989 = vrot.lane.b32.xlu0 %v959, 96
        %v990 = vpop.permute.xlu0 %989
        %991 = vrot.lane.b32.xlu0 %v961, 96
        %v992 = vpop.permute.xlu0 %991
        %993 = vrot.lane.b32.xlu0 %v954, 96
        %v994 = vpop.permute.xlu0 %993
        %995 = vrot.lane.b32.xlu0 %v955, 96
        %v996 = vpop.permute.xlu0 %995
        %997 = vrot.lane.b32.xlu0 %v953, 96
        %v998 = vpop.permute.xlu0 %997
        %v999 = vsel %vm977, %v988, %v990
        %v1000 = vsel %vm977, %v990, %v992
        %v1001 = vsel %vm977, %v994, %v996
        %v1002 = vsel %vm977, %v996, %v998
        %s1005 = scalar_lea.vmem %s1, 8
        %v1006 = vld [vmem:[%s1005] sm:$0xf]
        %v1008 = vsel %vm685, %v1006, 0
        %v1011 = vsel %vm494, %v980, 0
        %v1014 = vsel %vm494, %v981, 0
        %v1017 = vsel %vm494, %v1001, 0
        %v1020 = vsel %vm494, %v1002, 0
        %1022 = vmatprep.subr.bf16.mxu0 0
        %1023 = vmatpush1.bf16.msra.mxu0 0
        %1024 = vmatprep.subr.bf16.mxu0 0
        %1025 = vmatpush1.bf16.msra.mxu0 0
        %1026 = vmatprep.subr.bf16.mxu0 0
        %1027 = vmatpush1.bf16.msra.mxu0 0
        %1028 = vmatprep.subr.bf16.mxu0 0
        %1029 = vmatpush1.bf16.msra.mxu0 0
        %1030 = vmatprep.subr.bf16.mxu0 0
        %1031 = vmatpush1.bf16.msra.mxu0 0
        %1032 = vmatprep.subr.bf16.mxu0 0
        %1033 = vmatpush1.bf16.msra.mxu0 0
        %1034 = vmatprep.subr.bf16.mxu0 %v1014
        %1035 = vmatpush1.bf16.msra.mxu0 %v1011
        %1036 = vmatprep.subr.bf16.mxu0 %v979
        %1037 = vmatpush1.bf16.msra.mxu0 %v978
        %1038 = vmatprep.subr.bf16.mxu0 0
        %1039 = vmatpush2.bf16.msra.mxu0 0
        %1040 = vmatprep.subr.bf16.mxu0 0
        %1041 = vmatpush2.bf16.msra.mxu0 0
        %1042 = vmatprep.subr.bf16.mxu0 0
        %1043 = vmatpush2.bf16.msra.mxu0 0
        %1044 = vmatprep.subr.bf16.mxu0 0
        %1045 = vmatpush2.bf16.msra.mxu0 0
        %1046 = vmatprep.subr.bf16.mxu0 0
        %1047 = vmatpush2.bf16.msra.mxu0 0
        %1048 = vmatprep.subr.bf16.mxu0 0
        %1049 = vmatpush2.bf16.msra.mxu0 0
        %1050 = vmatprep.subr.bf16.mxu0 0
        %1051 = vmatpush2.bf16.msra.mxu0 0
        %1052 = vmatprep.subr.bf16.mxu0 0
        %1053 = vmatpush2.bf16.msra.mxu0 0
        %1054 = vmatprep.mubr.bf16.mxu0 0
        %1055 = vmatmul.mubr.bf16.gmra.mxu0 %v1008
        %v1056 = vpop.f32.mrf.mxu0
        %v1057 = vadd.f32 0.0, %v1056
        %v1058 = vpop.f32.mrf.mxu0
        %v1059 = vadd.f32 0.0, %v1058
        %v1060 = vpop.f32.mrf.mxu0
        %v1061 = vpop.f32.mrf.mxu0
        %1062 = vdwg.mxu0
        %1063 = vmatprep.subr.bf16.mxu0 0
        %1064 = vmatpush1.bf16.msra.mxu0 0
        %1065 = vmatprep.subr.bf16.mxu0 0
        %1066 = vmatpush1.bf16.msra.mxu0 0
        %1067 = vmatprep.subr.bf16.mxu0 0
        %1068 = vmatpush1.bf16.msra.mxu0 0
        %1069 = vmatprep.subr.bf16.mxu0 0
        %1070 = vmatpush1.bf16.msra.mxu0 0
        %1071 = vmatprep.subr.bf16.mxu0 0
        %1072 = vmatpush1.bf16.msra.mxu0 0
        %1073 = vmatprep.subr.bf16.mxu0 0
        %1074 = vmatpush1.bf16.msra.mxu0 0
        %1075 = vmatprep.subr.bf16.mxu0 %v1020
        %1076 = vmatpush1.bf16.msra.mxu0 %v1017
        %1077 = vmatprep.subr.bf16.mxu0 %v1000
        %1078 = vmatpush1.bf16.msra.mxu0 %v999
        %1079 = vmatprep.subr.bf16.mxu0 0
        %1080 = vmatpush2.bf16.msra.mxu0 0
        %1081 = vmatprep.subr.bf16.mxu0 0
        %1082 = vmatpush2.bf16.msra.mxu0 0
        %1083 = vmatprep.subr.bf16.mxu0 0
        %1084 = vmatpush2.bf16.msra.mxu0 0
        %1085 = vmatprep.subr.bf16.mxu0 0
        %1086 = vmatpush2.bf16.msra.mxu0 0
        %1087 = vmatprep.subr.bf16.mxu0 0
        %1088 = vmatpush2.bf16.msra.mxu0 0
        %1089 = vmatprep.subr.bf16.mxu0 0
        %1090 = vmatpush2.bf16.msra.mxu0 0
        %1091 = vmatprep.subr.bf16.mxu0 0
        %1092 = vmatpush2.bf16.msra.mxu0 0
        %1093 = vmatprep.subr.bf16.mxu0 0
        %1094 = vmatpush2.bf16.msra.mxu0 0
        %1095 = vmatprep.mubr.bf16.mxu0 0
        %1096 = vmatmul.mubr.bf16.gmra.mxu0 %v1008
        %v1097 = vpop.f32.mrf.mxu0
        %v1098 = vadd.f32 0.0, %v1097
        %v1099 = vpop.f32.mrf.mxu0
        %v1100 = vadd.f32 0.0, %v1099
        %v1101 = vpop.f32.mrf.mxu0
        %v1102 = vpop.f32.mrf.mxu0
        %1103 = vdwg.mxu0
        %v1104 = vadd.f32 %v833, %v1057
        %v1105 = vadd.f32 %v835, %v1059
        %v1106 = vadd.f32 %v874, %v1098
        %v1107 = vadd.f32 %v876, %v1100
        %v1108 = vld [vmem:[%s2] sm:$0xff]
        %1110 = vset.pattern.permute.xlu0 0
        %1111 = vperm.xlu0 %1110, %v1108
        %v1112 = vpop.permute.xlu0 %1111
        %v1114 = vadd.f32 %v1104, %v1112
        %v1115 = vadd.f32 %v1105, %v1112
        %v1116 = vadd.f32 %v1106, %v1112
        %v1117 = vadd.f32 %v1107, %v1112
        %v1118 = vmax.f32 %v1114, 0.0
        %v1119 = vmax.f32 %v1115, 0.0
        %v1120 = vmax.f32 %v1116, 0.0
        %v1121 = vmax.f32 %v1117, 0.0
        %v1122 = vpack.c.bf16 %v1118, %v1118
        %v1123 = vpack.c.bf16 %v1119, %v1119
        %v1126 = vunpack.c.l.b16 %v1122
        %v1127 = vunpack.c.l.b16 %v1123
        %v1128 = vpack.c.b16 %v1127, %v1126
        %1129 = vrot.lane.b32.xlu0 %v1128, 17
        %v1130 = vpop.permute.xlu0 %1129
        %v1131 = vrot.slane %v1130, 4
        %v1132 = vsel %vm418, %v1131, %v1130
        %1135 = vst.msk [vmem:[#allocation2] sm:$0xff] %vm427, %v1132
        %1136 = vst.msk [vmem:[#allocation2 + $0x8] sm:$0xf] %vm388, %v1131
        %v1137 = vpack.c.bf16 %v1120, %v1120
        %v1138 = vpack.c.bf16 %v1121, %v1121
        %v1141 = vunpack.c.l.b16 %v1137
        %v1142 = vunpack.c.l.b16 %v1138
        %v1143 = vpack.c.b16 %v1142, %v1141
        %1144 = vrot.lane.b32.xlu0 %v1143, 17
        %v1145 = vpop.permute.xlu0 %1144
        %v1146 = vrot.slane %v1145, 4
        %v1147 = vsel %vm418, %v1146, %v1145
        %1150 = vst.msk [vmem:[%s503] sm:$0xff] %vm427, %v1147
        %1151 = vst.msk [vmem:[%s503 + $0x8] sm:$0xf] %vm388, %v1146
        %v1152 = vld [vmem:[#allocation2] sm:$0xff]
        %v1153 = vld [vmem:[#allocation2 + $0x8] sm:$0xf]
        %v1154 = vsel %vm438, %v1152, 0
        %v1155 = vsel %vm451, %v1152, 0
        %v1156 = vsel %vm452, %v1153, 0
        %v1158 = vunpack.c.l.b16 %v1154
        %v1159 = vunpack.c.h.b16 %v1154
        %v1160 = vpack.c.b16 %v1158, %v1158
        %v1161 = vpack.c.b16 %v1159, %v1159
        %v1164 = vunpack.c.l.b16 %v1152
        %v1165 = vunpack.c.h.b16 %v1152
        %v1166 = vunpack.c.l.b16 %v1153
        %v1167 = vpack.c.b16 %v1164, %v1164
        %v1168 = vpack.c.b16 %v1165, %v1165
        %v1169 = vpack.c.b16 %v1166, %v1166
        %1170 = vrot.lane.b32.xlu0 %v1167, 127
        %v1171 = vpop.permute.xlu0 %1170
        %1172 = vrot.lane.b32.xlu0 %v1168, 127
        %v1173 = vpop.permute.xlu0 %1172
        %1174 = vrot.lane.b32.xlu0 %v1169, 127
        %v1175 = vpop.permute.xlu0 %1174
        %v1176 = vsel %vm474, %v1171, %v1173
        %v1177 = vsel %vm474, %v1173, %v1175
        %v1180 = vunpack.c.l.b16 %v1155
        %v1181 = vunpack.c.h.b16 %v1155
        %v1182 = vunpack.c.l.b16 %v1156
        %v1183 = vpack.c.b16 %v1180, %v1180
        %v1184 = vpack.c.b16 %v1181, %v1181
        %v1185 = vpack.c.b16 %v1182, %v1182
        %1186 = vrot.lane.b32.xlu0 %v1183, 126
        %v1187 = vpop.permute.xlu0 %1186
        %1188 = vrot.lane.b32.xlu0 %v1184, 126
        %v1189 = vpop.permute.xlu0 %1188
        %1190 = vrot.lane.b32.xlu0 %v1185, 126
        %v1191 = vpop.permute.xlu0 %1190
        %v1192 = vsel %vm491, %v1187, %v1189
        %v1193 = vsel %vm491, %v1189, %v1191
        %v1196 = vsel %vm494, %v1160, %v1176
        %v1200 = vsel %vm494, %v1161, %v1177
        %v1202 = vld [vmem:[%s503] sm:$0xff]
        %v1203 = vld [vmem:[%s503 + $0x8] sm:$0xf]
        %v1204 = vsel %vm438, %v1202, 0
        %v1205 = vsel %vm451, %v1202, 0
        %v1206 = vsel %vm452, %v1203, 0
        %v1208 = vunpack.c.l.b16 %v1204
        %v1209 = vunpack.c.h.b16 %v1204
        %v1210 = vpack.c.b16 %v1208, %v1208
        %v1211 = vpack.c.b16 %v1209, %v1209
        %v1214 = vunpack.c.l.b16 %v1202
        %v1215 = vunpack.c.h.b16 %v1202
        %v1216 = vunpack.c.l.b16 %v1203
        %v1217 = vpack.c.b16 %v1214, %v1214
        %v1218 = vpack.c.b16 %v1215, %v1215
        %v1219 = vpack.c.b16 %v1216, %v1216
        %1220 = vrot.lane.b32.xlu0 %v1217, 127
        %v1221 = vpop.permute.xlu0 %1220
        %1222 = vrot.lane.b32.xlu0 %v1218, 127
        %v1223 = vpop.permute.xlu0 %1222
        %1224 = vrot.lane.b32.xlu0 %v1219, 127
        %v1225 = vpop.permute.xlu0 %1224
        %v1226 = vsel %vm474, %v1221, %v1223
        %v1227 = vsel %vm474, %v1223, %v1225
        %v1230 = vunpack.c.l.b16 %v1205
        %v1231 = vunpack.c.h.b16 %v1205
        %v1232 = vunpack.c.l.b16 %v1206
        %v1233 = vpack.c.b16 %v1230, %v1230
        %v1234 = vpack.c.b16 %v1231, %v1231
        %v1235 = vpack.c.b16 %v1232, %v1232
        %1236 = vrot.lane.b32.xlu0 %v1233, 126
        %v1237 = vpop.permute.xlu0 %1236
        %1238 = vrot.lane.b32.xlu0 %v1234, 126
        %v1239 = vpop.permute.xlu0 %1238
        %1240 = vrot.lane.b32.xlu0 %v1235, 126
        %v1241 = vpop.permute.xlu0 %1240
        %v1242 = vsel %vm491, %v1237, %v1239
        %v1243 = vsel %vm491, %v1239, %v1241
        %v1246 = vsel %vm494, %v1210, %v1226
        %v1250 = vsel %vm494, %v1211, %v1227
        %v1252 = vld [vmem:[%s3] sm:$0xf]
        %v1253 = vsel %vm561, %v1152, 0
        %v1254 = vsel %vm562, %v1153, 0
        %v1255 = vsel %vm570, %v1152, 0
        %v1256 = vsel %vm571, %v1153, 0
        %v1259 = vunpack.c.l.b16 %v1253
        %v1260 = vunpack.c.h.b16 %v1253
        %v1261 = vunpack.c.l.b16 %v1254
        %v1262 = vpack.c.b16 %v1259, %v1259
        %v1263 = vpack.c.b16 %v1260, %v1260
        %v1264 = vpack.c.b16 %v1261, %v1261
        %v1267 = vunpack.c.l.b16 %v1255
        %v1268 = vunpack.c.h.b16 %v1255
        %v1269 = vunpack.c.l.b16 %v1256
        %v1270 = vpack.c.b16 %v1267, %v1267
        %v1271 = vpack.c.b16 %v1268, %v1268
        %v1272 = vpack.c.b16 %v1269, %v1269
        %1273 = vrot.lane.b32.xlu0 %v1270, 126
        %v1274 = vpop.permute.xlu0 %1273
        %1275 = vrot.lane.b32.xlu0 %v1271, 126
        %v1276 = vpop.permute.xlu0 %1275
        %1277 = vrot.lane.b32.xlu0 %v1272, 126
        %v1278 = vpop.permute.xlu0 %1277
        %v1279 = vsel %vm491, %v1274, %v1276
        %v1280 = vsel %vm491, %v1276, %v1278
        %v1282 = vsel %vm494, %v1262, %v1176
        %v1284 = vsel %vm494, %v1263, %v1177
        %v1287 = vsel %vm494, %v1264, %v1175
        %v1288 = vsel %vm561, %v1202, 0
        %v1289 = vsel %vm562, %v1203, 0
        %v1290 = vsel %vm570, %v1202, 0
        %v1291 = vsel %vm571, %v1203, 0
        %v1294 = vunpack.c.l.b16 %v1288
        %v1295 = vunpack.c.h.b16 %v1288
        %v1296 = vunpack.c.l.b16 %v1289
        %v1297 = vpack.c.b16 %v1294, %v1294
        %v1298 = vpack.c.b16 %v1295, %v1295
        %v1299 = vpack.c.b16 %v1296, %v1296
        %v1302 = vunpack.c.l.b16 %v1290
        %v1303 = vunpack.c.h.b16 %v1290
        %v1304 = vunpack.c.l.b16 %v1291
        %v1305 = vpack.c.b16 %v1302, %v1302
        %v1306 = vpack.c.b16 %v1303, %v1303
        %v1307 = vpack.c.b16 %v1304, %v1304
        %1308 = vrot.lane.b32.xlu0 %v1305, 126
        %v1309 = vpop.permute.xlu0 %1308
        %1310 = vrot.lane.b32.xlu0 %v1306, 126
        %v1311 = vpop.permute.xlu0 %1310
        %1312 = vrot.lane.b32.xlu0 %v1307, 126
        %v1313 = vpop.permute.xlu0 %1312
        %v1314 = vsel %vm491, %v1309, %v1311
        %v1315 = vsel %vm491, %v1311, %v1313
        %v1317 = vsel %vm494, %v1297, %v1226
        %v1319 = vsel %vm494, %v1298, %v1227
        %v1322 = vsel %vm494, %v1299, %v1225
        %1326 = vrot.lane.b32.xlu0 %v1282, 112
        %v1327 = vpop.permute.xlu0 %1326
        %1328 = vrot.lane.b32.xlu0 %v1284, 112
        %v1329 = vpop.permute.xlu0 %1328
        %1330 = vrot.lane.b32.xlu0 %v1287, 112
        %v1331 = vpop.permute.xlu0 %1330
        %1332 = vrot.lane.b32.xlu0 %v1279, 112
        %v1333 = vpop.permute.xlu0 %1332
        %1334 = vrot.lane.b32.xlu0 %v1280, 112
        %v1335 = vpop.permute.xlu0 %1334
        %1336 = vrot.lane.b32.xlu0 %v1278, 112
        %v1337 = vpop.permute.xlu0 %1336
        %v1338 = vsel %vm655, %v1327, %v1329
        %v1339 = vsel %vm655, %v1329, %v1331
        %v1340 = vsel %vm655, %v1333, %v1335
        %v1341 = vsel %vm655, %v1335, %v1337
        %1347 = vrot.lane.b32.xlu0 %v1317, 112
        %v1348 = vpop.permute.xlu0 %1347
        %1349 = vrot.lane.b32.xlu0 %v1319, 112
        %v1350 = vpop.permute.xlu0 %1349
        %1351 = vrot.lane.b32.xlu0 %v1322, 112
        %v1352 = vpop.permute.xlu0 %1351
        %1353 = vrot.lane.b32.xlu0 %v1314, 112
        %v1354 = vpop.permute.xlu0 %1353
        %1355 = vrot.lane.b32.xlu0 %v1315, 112
        %v1356 = vpop.permute.xlu0 %1355
        %1357 = vrot.lane.b32.xlu0 %v1313, 112
        %v1358 = vpop.permute.xlu0 %1357
        %v1359 = vsel %vm655, %v1348, %v1350
        %v1360 = vsel %vm655, %v1350, %v1352
        %v1361 = vsel %vm655, %v1354, %v1356
        %v1362 = vsel %vm655, %v1356, %v1358
        %s1365 = scalar_lea.vmem %s3, 4
        %v1366 = vld [vmem:[%s1365] sm:$0xf]
        %v1368 = vsel %vm685, %v1366, 0
        %v1371 = vsel %vm494, %v1340, 0
        %v1374 = vsel %vm494, %v1341, 0
        %v1377 = vsel %vm494, %v1361, 0
        %v1380 = vsel %vm494, %v1362, 0
        %1382 = vmatprep.subr.bf16.mxu0 0
        %1383 = vmatpush1.bf16.msra.mxu0 0
        %1384 = vmatprep.subr.bf16.mxu0 0
        %1385 = vmatpush1.bf16.msra.mxu0 0
        %1386 = vmatprep.subr.bf16.mxu0 0
        %1387 = vmatpush1.bf16.msra.mxu0 0
        %1388 = vmatprep.subr.bf16.mxu0 0
        %1389 = vmatpush1.bf16.msra.mxu0 0
        %1390 = vmatprep.subr.bf16.mxu0 0
        %1391 = vmatpush1.bf16.msra.mxu0 0
        %1392 = vmatprep.subr.bf16.mxu0 0
        %1393 = vmatpush1.bf16.msra.mxu0 0
        %1394 = vmatprep.subr.bf16.mxu0 %v1374
        %1395 = vmatpush1.bf16.msra.mxu0 %v1371
        %1396 = vmatprep.subr.bf16.mxu0 %v1339
        %1397 = vmatpush1.bf16.msra.mxu0 %v1338
        %1398 = vmatprep.subr.bf16.mxu0 0
        %1399 = vmatpush2.bf16.msra.mxu0 0
        %1400 = vmatprep.subr.bf16.mxu0 0
        %1401 = vmatpush2.bf16.msra.mxu0 0
        %1402 = vmatprep.subr.bf16.mxu0 0
        %1403 = vmatpush2.bf16.msra.mxu0 0
        %1404 = vmatprep.subr.bf16.mxu0 0
        %1405 = vmatpush2.bf16.msra.mxu0 0
        %1406 = vmatprep.subr.bf16.mxu0 0
        %1407 = vmatpush2.bf16.msra.mxu0 0
        %1408 = vmatprep.subr.bf16.mxu0 0
        %1409 = vmatpush2.bf16.msra.mxu0 0
        %1410 = vmatprep.subr.bf16.mxu0 0
        %1411 = vmatpush2.bf16.msra.mxu0 0
        %1412 = vmatprep.subr.bf16.mxu0 0
        %1413 = vmatpush2.bf16.msra.mxu0 0
        %1414 = vmatprep.mubr.bf16.mxu0 0
        %1415 = vmatmul.mubr.bf16.gmra.mxu0 %v1368
        %v1416 = vpop.f32.mrf.mxu0
        %v1417 = vadd.f32 0.0, %v1416
        %v1418 = vpop.f32.mrf.mxu0
        %v1419 = vadd.f32 0.0, %v1418
        %v1420 = vpop.f32.mrf.mxu0
        %v1421 = vpop.f32.mrf.mxu0
        %1422 = vdwg.mxu0
        %1423 = vmatprep.subr.bf16.mxu0 0
        %1424 = vmatpush1.bf16.msra.mxu0 0
        %1425 = vmatprep.subr.bf16.mxu0 0
        %1426 = vmatpush1.bf16.msra.mxu0 0
        %1427 = vmatprep.subr.bf16.mxu0 0
        %1428 = vmatpush1.bf16.msra.mxu0 0
        %1429 = vmatprep.subr.bf16.mxu0 0
        %1430 = vmatpush1.bf16.msra.mxu0 0
        %1431 = vmatprep.subr.bf16.mxu0 0
        %1432 = vmatpush1.bf16.msra.mxu0 0
        %1433 = vmatprep.subr.bf16.mxu0 0
        %1434 = vmatpush1.bf16.msra.mxu0 0
        %1435 = vmatprep.subr.bf16.mxu0 %v1380
        %1436 = vmatpush1.bf16.msra.mxu0 %v1377
        %1437 = vmatprep.subr.bf16.mxu0 %v1360
        %1438 = vmatpush1.bf16.msra.mxu0 %v1359
        %1439 = vmatprep.subr.bf16.mxu0 0
        %1440 = vmatpush2.bf16.msra.mxu0 0
        %1441 = vmatprep.subr.bf16.mxu0 0
        %1442 = vmatpush2.bf16.msra.mxu0 0
        %1443 = vmatprep.subr.bf16.mxu0 0
        %1444 = vmatpush2.bf16.msra.mxu0 0
        %1445 = vmatprep.subr.bf16.mxu0 0
        %1446 = vmatpush2.bf16.msra.mxu0 0
        %1447 = vmatprep.subr.bf16.mxu0 0
        %1448 = vmatpush2.bf16.msra.mxu0 0
        %1449 = vmatprep.subr.bf16.mxu0 0
        %1450 = vmatpush2.bf16.msra.mxu0 0
        %1451 = vmatprep.subr.bf16.mxu0 0
        %1452 = vmatpush2.bf16.msra.mxu0 0
        %1453 = vmatprep.subr.bf16.mxu0 0
        %1454 = vmatpush2.bf16.msra.mxu0 0
        %1455 = vmatprep.mubr.bf16.mxu0 0
        %1456 = vmatmul.mubr.bf16.gmra.mxu0 %v1368
        %v1457 = vpop.f32.mrf.mxu0
        %v1458 = vadd.f32 0.0, %v1457
        %v1459 = vpop.f32.mrf.mxu0
        %v1460 = vadd.f32 0.0, %v1459
        %v1461 = vpop.f32.mrf.mxu0
        %v1462 = vpop.f32.mrf.mxu0
        %1463 = vdwg.mxu0
        %v1465 = vsel %vm685, %v1252, 0
        %v1468 = vsel %vm494, %v1192, 0
        %v1471 = vsel %vm494, %v1193, 0
        %v1474 = vsel %vm494, %v1242, 0
        %v1477 = vsel %vm494, %v1243, 0
        %1479 = vmatprep.subr.bf16.mxu0 0
        %1480 = vmatpush1.bf16.msra.mxu0 0
        %1481 = vmatprep.subr.bf16.mxu0 0
        %1482 = vmatpush1.bf16.msra.mxu0 0
        %1483 = vmatprep.subr.bf16.mxu0 0
        %1484 = vmatpush1.bf16.msra.mxu0 0
        %1485 = vmatprep.subr.bf16.mxu0 0
        %1486 = vmatpush1.bf16.msra.mxu0 0
        %1487 = vmatprep.subr.bf16.mxu0 0
        %1488 = vmatpush1.bf16.msra.mxu0 0
        %1489 = vmatprep.subr.bf16.mxu0 0
        %1490 = vmatpush1.bf16.msra.mxu0 0
        %1491 = vmatprep.subr.bf16.mxu0 %v1471
        %1492 = vmatpush1.bf16.msra.mxu0 %v1468
        %1493 = vmatprep.subr.bf16.mxu0 %v1200
        %1494 = vmatpush1.bf16.msra.mxu0 %v1196
        %1495 = vmatprep.subr.bf16.mxu0 0
        %1496 = vmatpush2.bf16.msra.mxu0 0
        %1497 = vmatprep.subr.bf16.mxu0 0
        %1498 = vmatpush2.bf16.msra.mxu0 0
        %1499 = vmatprep.subr.bf16.mxu0 0
        %1500 = vmatpush2.bf16.msra.mxu0 0
        %1501 = vmatprep.subr.bf16.mxu0 0
        %1502 = vmatpush2.bf16.msra.mxu0 0
        %1503 = vmatprep.subr.bf16.mxu0 0
        %1504 = vmatpush2.bf16.msra.mxu0 0
        %1505 = vmatprep.subr.bf16.mxu0 0
        %1506 = vmatpush2.bf16.msra.mxu0 0
        %1507 = vmatprep.subr.bf16.mxu0 0
        %1508 = vmatpush2.bf16.msra.mxu0 0
        %1509 = vmatprep.subr.bf16.mxu0 0
        %1510 = vmatpush2.bf16.msra.mxu0 0
        %1511 = vmatprep.mubr.bf16.mxu0 0
        %1512 = vmatmul.mubr.bf16.gmra.mxu0 %v1465
        %v1513 = vpop.f32.mrf.mxu0
        %v1514 = vadd.f32 %v1417, %v1513
        %v1515 = vpop.f32.mrf.mxu0
        %v1516 = vadd.f32 %v1419, %v1515
        %v1517 = vpop.f32.mrf.mxu0
        %v1518 = vpop.f32.mrf.mxu0
        %1519 = vdwg.mxu0
        %1520 = vmatprep.subr.bf16.mxu0 0
        %1521 = vmatpush1.bf16.msra.mxu0 0
        %1522 = vmatprep.subr.bf16.mxu0 0
        %1523 = vmatpush1.bf16.msra.mxu0 0
        %1524 = vmatprep.subr.bf16.mxu0 0
        %1525 = vmatpush1.bf16.msra.mxu0 0
        %1526 = vmatprep.subr.bf16.mxu0 0
        %1527 = vmatpush1.bf16.msra.mxu0 0
        %1528 = vmatprep.subr.bf16.mxu0 0
        %1529 = vmatpush1.bf16.msra.mxu0 0
        %1530 = vmatprep.subr.bf16.mxu0 0
        %1531 = vmatpush1.bf16.msra.mxu0 0
        %1532 = vmatprep.subr.bf16.mxu0 %v1477
        %1533 = vmatpush1.bf16.msra.mxu0 %v1474
        %1534 = vmatprep.subr.bf16.mxu0 %v1250
        %1535 = vmatpush1.bf16.msra.mxu0 %v1246
        %1536 = vmatprep.subr.bf16.mxu0 0
        %1537 = vmatpush2.bf16.msra.mxu0 0
        %1538 = vmatprep.subr.bf16.mxu0 0
        %1539 = vmatpush2.bf16.msra.mxu0 0
        %1540 = vmatprep.subr.bf16.mxu0 0
        %1541 = vmatpush2.bf16.msra.mxu0 0
        %1542 = vmatprep.subr.bf16.mxu0 0
        %1543 = vmatpush2.bf16.msra.mxu0 0
        %1544 = vmatprep.subr.bf16.mxu0 0
        %1545 = vmatpush2.bf16.msra.mxu0 0
        %1546 = vmatprep.subr.bf16.mxu0 0
        %1547 = vmatpush2.bf16.msra.mxu0 0
        %1548 = vmatprep.subr.bf16.mxu0 0
        %1549 = vmatpush2.bf16.msra.mxu0 0
        %1550 = vmatprep.subr.bf16.mxu0 0
        %1551 = vmatpush2.bf16.msra.mxu0 0
        %1552 = vmatprep.mubr.bf16.mxu0 0
        %1553 = vmatmul.mubr.bf16.gmra.mxu0 %v1465
        %v1554 = vpop.f32.mrf.mxu0
        %v1555 = vadd.f32 %v1458, %v1554
        %v1556 = vpop.f32.mrf.mxu0
        %v1557 = vadd.f32 %v1460, %v1556
        %v1558 = vpop.f32.mrf.mxu0
        %v1559 = vpop.f32.mrf.mxu0
        %1560 = vdwg.mxu0
        %v1561 = vsel %vm885, %v1152, 0
        %v1562 = vsel %vm886, %v1153, 0
        %v1563 = vsel %vm894, %v1152, 0
        %v1564 = vsel %vm895, %v1153, 0
        %v1567 = vunpack.c.l.b16 %v1561
        %v1568 = vunpack.c.h.b16 %v1561
        %v1569 = vunpack.c.l.b16 %v1562
        %v1570 = vpack.c.b16 %v1567, %v1567
        %v1571 = vpack.c.b16 %v1568, %v1568
        %v1572 = vpack.c.b16 %v1569, %v1569
        %v1575 = vunpack.c.l.b16 %v1563
        %v1576 = vunpack.c.h.b16 %v1563
        %v1577 = vunpack.c.l.b16 %v1564
        %v1578 = vpack.c.b16 %v1575, %v1575
        %v1579 = vpack.c.b16 %v1576, %v1576
        %v1580 = vpack.c.b16 %v1577, %v1577
        %1581 = vrot.lane.b32.xlu0 %v1578, 126
        %v1582 = vpop.permute.xlu0 %1581
        %1583 = vrot.lane.b32.xlu0 %v1579, 126
        %v1584 = vpop.permute.xlu0 %1583
        %1585 = vrot.lane.b32.xlu0 %v1580, 126
        %v1586 = vpop.permute.xlu0 %1585
        %v1587 = vsel %vm491, %v1582, %v1584
        %v1588 = vsel %vm491, %v1584, %v1586
        %v1590 = vsel %vm494, %v1570, %v1176
        %v1592 = vsel %vm494, %v1571, %v1177
        %v1594 = vsel %vm494, %v1572, %v1175
        %v1595 = vsel %vm885, %v1202, 0
        %v1596 = vsel %vm886, %v1203, 0
        %v1597 = vsel %vm894, %v1202, 0
        %v1598 = vsel %vm895, %v1203, 0
        %v1601 = vunpack.c.l.b16 %v1595
        %v1602 = vunpack.c.h.b16 %v1595
        %v1603 = vunpack.c.l.b16 %v1596
        %v1604 = vpack.c.b16 %v1601, %v1601
        %v1605 = vpack.c.b16 %v1602, %v1602
        %v1606 = vpack.c.b16 %v1603, %v1603
        %v1609 = vunpack.c.l.b16 %v1597
        %v1610 = vunpack.c.h.b16 %v1597
        %v1611 = vunpack.c.l.b16 %v1598
        %v1612 = vpack.c.b16 %v1609, %v1609
        %v1613 = vpack.c.b16 %v1610, %v1610
        %v1614 = vpack.c.b16 %v1611, %v1611
        %1615 = vrot.lane.b32.xlu0 %v1612, 126
        %v1616 = vpop.permute.xlu0 %1615
        %1617 = vrot.lane.b32.xlu0 %v1613, 126
        %v1618 = vpop.permute.xlu0 %1617
        %1619 = vrot.lane.b32.xlu0 %v1614, 126
        %v1620 = vpop.permute.xlu0 %1619
        %v1621 = vsel %vm491, %v1616, %v1618
        %v1622 = vsel %vm491, %v1618, %v1620
        %v1624 = vsel %vm494, %v1604, %v1226
        %v1626 = vsel %vm494, %v1605, %v1227
        %v1628 = vsel %vm494, %v1606, %v1225
        %1632 = vrot.lane.b32.xlu0 %v1590, 96
        %v1633 = vpop.permute.xlu0 %1632
        %1634 = vrot.lane.b32.xlu0 %v1592, 96
        %v1635 = vpop.permute.xlu0 %1634
        %1636 = vrot.lane.b32.xlu0 %v1594, 96
        %v1637 = vpop.permute.xlu0 %1636
        %1638 = vrot.lane.b32.xlu0 %v1587, 96
        %v1639 = vpop.permute.xlu0 %1638
        %1640 = vrot.lane.b32.xlu0 %v1588, 96
        %v1641 = vpop.permute.xlu0 %1640
        %1642 = vrot.lane.b32.xlu0 %v1586, 96
        %v1643 = vpop.permute.xlu0 %1642
        %v1644 = vsel %vm977, %v1633, %v1635
        %v1645 = vsel %vm977, %v1635, %v1637
        %v1646 = vsel %vm977, %v1639, %v1641
        %v1647 = vsel %vm977, %v1641, %v1643
        %1653 = vrot.lane.b32.xlu0 %v1624, 96
        %v1654 = vpop.permute.xlu0 %1653
        %1655 = vrot.lane.b32.xlu0 %v1626, 96
        %v1656 = vpop.permute.xlu0 %1655
        %1657 = vrot.lane.b32.xlu0 %v1628, 96
        %v1658 = vpop.permute.xlu0 %1657
        %1659 = vrot.lane.b32.xlu0 %v1621, 96
        %v1660 = vpop.permute.xlu0 %1659
        %1661 = vrot.lane.b32.xlu0 %v1622, 96
        %v1662 = vpop.permute.xlu0 %1661
        %1663 = vrot.lane.b32.xlu0 %v1620, 96
        %v1664 = vpop.permute.xlu0 %1663
        %v1665 = vsel %vm977, %v1654, %v1656
        %v1666 = vsel %vm977, %v1656, %v1658
        %v1667 = vsel %vm977, %v1660, %v1662
        %v1668 = vsel %vm977, %v1662, %v1664
        %s1671 = scalar_lea.vmem %s3, 8
        %v1672 = vld [vmem:[%s1671] sm:$0xf]
        %v1674 = vsel %vm685, %v1672, 0
        %v1677 = vsel %vm494, %v1646, 0
        %v1680 = vsel %vm494, %v1647, 0
        %v1683 = vsel %vm494, %v1667, 0
        %v1686 = vsel %vm494, %v1668, 0
        %1688 = vmatprep.subr.bf16.mxu0 0
        %1689 = vmatpush1.bf16.msra.mxu0 0
        %1690 = vmatprep.subr.bf16.mxu0 0
        %1691 = vmatpush1.bf16.msra.mxu0 0
        %1692 = vmatprep.subr.bf16.mxu0 0
        %1693 = vmatpush1.bf16.msra.mxu0 0
        %1694 = vmatprep.subr.bf16.mxu0 0
        %1695 = vmatpush1.bf16.msra.mxu0 0
        %1696 = vmatprep.subr.bf16.mxu0 0
        %1697 = vmatpush1.bf16.msra.mxu0 0
        %1698 = vmatprep.subr.bf16.mxu0 0
        %1699 = vmatpush1.bf16.msra.mxu0 0
        %1700 = vmatprep.subr.bf16.mxu0 %v1680
        %1701 = vmatpush1.bf16.msra.mxu0 %v1677
        %1702 = vmatprep.subr.bf16.mxu0 %v1645
        %1703 = vmatpush1.bf16.msra.mxu0 %v1644
        %1704 = vmatprep.subr.bf16.mxu0 0
        %1705 = vmatpush2.bf16.msra.mxu0 0
        %1706 = vmatprep.subr.bf16.mxu0 0
        %1707 = vmatpush2.bf16.msra.mxu0 0
        %1708 = vmatprep.subr.bf16.mxu0 0
        %1709 = vmatpush2.bf16.msra.mxu0 0
        %1710 = vmatprep.subr.bf16.mxu0 0
        %1711 = vmatpush2.bf16.msra.mxu0 0
        %1712 = vmatprep.subr.bf16.mxu0 0
        %1713 = vmatpush2.bf16.msra.mxu0 0
        %1714 = vmatprep.subr.bf16.mxu0 0
        %1715 = vmatpush2.bf16.msra.mxu0 0
        %1716 = vmatprep.subr.bf16.mxu0 0
        %1717 = vmatpush2.bf16.msra.mxu0 0
        %1718 = vmatprep.subr.bf16.mxu0 0
        %1719 = vmatpush2.bf16.msra.mxu0 0
        %1720 = vmatprep.mubr.bf16.mxu0 0
        %1721 = vmatmul.mubr.bf16.gmra.mxu0 %v1674
        %v1722 = vpop.f32.mrf.mxu0
        %v1723 = vadd.f32 0.0, %v1722
        %v1724 = vpop.f32.mrf.mxu0
        %v1725 = vadd.f32 0.0, %v1724
        %v1726 = vpop.f32.mrf.mxu0
        %v1727 = vpop.f32.mrf.mxu0
        %1728 = vdwg.mxu0
        %1729 = vmatprep.subr.bf16.mxu0 0
        %1730 = vmatpush1.bf16.msra.mxu0 0
        %1731 = vmatprep.subr.bf16.mxu0 0
        %1732 = vmatpush1.bf16.msra.mxu0 0
        %1733 = vmatprep.subr.bf16.mxu0 0
        %1734 = vmatpush1.bf16.msra.mxu0 0
        %1735 = vmatprep.subr.bf16.mxu0 0
        %1736 = vmatpush1.bf16.msra.mxu0 0
        %1737 = vmatprep.subr.bf16.mxu0 0
        %1738 = vmatpush1.bf16.msra.mxu0 0
        %1739 = vmatprep.subr.bf16.mxu0 0
        %1740 = vmatpush1.bf16.msra.mxu0 0
        %1741 = vmatprep.subr.bf16.mxu0 %v1686
        %1742 = vmatpush1.bf16.msra.mxu0 %v1683
        %1743 = vmatprep.subr.bf16.mxu0 %v1666
        %1744 = vmatpush1.bf16.msra.mxu0 %v1665
        %1745 = vmatprep.subr.bf16.mxu0 0
        %1746 = vmatpush2.bf16.msra.mxu0 0
        %1747 = vmatprep.subr.bf16.mxu0 0
        %1748 = vmatpush2.bf16.msra.mxu0 0
        %1749 = vmatprep.subr.bf16.mxu0 0
        %1750 = vmatpush2.bf16.msra.mxu0 0
        %1751 = vmatprep.subr.bf16.mxu0 0
        %1752 = vmatpush2.bf16.msra.mxu0 0
        %1753 = vmatprep.subr.bf16.mxu0 0
        %1754 = vmatpush2.bf16.msra.mxu0 0
        %1755 = vmatprep.subr.bf16.mxu0 0
        %1756 = vmatpush2.bf16.msra.mxu0 0
        %1757 = vmatprep.subr.bf16.mxu0 0
        %1758 = vmatpush2.bf16.msra.mxu0 0
        %1759 = vmatprep.subr.bf16.mxu0 0
        %1760 = vmatpush2.bf16.msra.mxu0 0
        %1761 = vmatprep.mubr.bf16.mxu0 0
        %1762 = vmatmul.mubr.bf16.gmra.mxu0 %v1674
        %v1763 = vpop.f32.mrf.mxu0
        %v1764 = vadd.f32 0.0, %v1763
        %v1765 = vpop.f32.mrf.mxu0
        %v1766 = vadd.f32 0.0, %v1765
        %v1767 = vpop.f32.mrf.mxu0
        %v1768 = vpop.f32.mrf.mxu0
        %1769 = vdwg.mxu0
        %v1770 = vadd.f32 %v1514, %v1723
        %v1771 = vadd.f32 %v1516, %v1725
        %v1772 = vadd.f32 %v1555, %v1764
        %v1773 = vadd.f32 %v1557, %v1766
        %v1774 = vld [vmem:[%s4] sm:$0xff]
        %1776 = vset.pattern.permute.xlu0 0
        %1777 = vperm.xlu0 %1776, %v1774
        %v1778 = vpop.permute.xlu0 %1777
        %v1780 = vadd.f32 %v1770, %v1778
        %v1781 = vadd.f32 %v1771, %v1778
        %v1782 = vadd.f32 %v1772, %v1778
        %v1783 = vadd.f32 %v1773, %v1778
        %v1784 = vmax.f32 %v1780, 0.0
        %v1785 = vmax.f32 %v1781, 0.0
        %v1786 = vmax.f32 %v1782, 0.0
        %v1787 = vmax.f32 %v1783, 0.0
        %v1788 = vadd.f32 %v1784, %v1785
        %1789 = vadd.xlane.f32.xlu0 %v1788
        %v1790 = vpop.xlane.xlu0 %1789
        %v1791 = vrcp.pop 256.0
        %v1792 = vmul.f32 %v1790, %v1791
        %v1793 = vadd.f32 %v1786, %v1787
        %1794 = vadd.xlane.f32.xlu0 %v1793
        %v1795 = vpop.xlane.xlu0 %1794
        %v1796 = vmul.f32 %v1795, %v1791
        %vm1797 = vcmask 7168
        %v1798 = vsel %vm1797, %v1792, %v1796
        %v1799 = vld [vmem:[%s5] sm:$0x1]
        %v1800 = vpack.c.bf16 %v1798, %v1798
        %v1801 = vld [vmem:[%s6] sm:$0x3]
        %1803 = vset.pattern.permute.xlu0 0
        %1804 = vperm.xlu0 %1803, %v1801
        %v1805 = vpop.permute.xlu0 %1804
        %vm1807 = vcmask 64512
        %v1809 = vsel %vm1807, %v1799, 0
        %v1812 = vsel %vm494, %v1800, 0
        %1814 = vmatprep.subr.bf16.mxu0 0
        %1815 = vmatpush1.bf16.msra.mxu0 0
        %1816 = vmatprep.subr.bf16.mxu0 0
        %1817 = vmatpush1.bf16.msra.mxu0 0
        %1818 = vmatprep.subr.bf16.mxu0 0
        %1819 = vmatpush1.bf16.msra.mxu0 0
        %1820 = vmatprep.subr.bf16.mxu0 0
        %1821 = vmatpush1.bf16.msra.mxu0 0
        %1822 = vmatprep.subr.bf16.mxu0 0
        %1823 = vmatpush1.bf16.msra.mxu0 0
        %1824 = vmatprep.subr.bf16.mxu0 0
        %1825 = vmatpush1.bf16.msra.mxu0 0
        %1826 = vmatprep.subr.bf16.mxu0 0
        %1827 = vmatpush1.bf16.msra.mxu0 0
        %1828 = vmatprep.subr.bf16.mxu0 0
        %1829 = vmatpush1.bf16.msra.mxu0 %v1812
        %1830 = vmatprep.subr.bf16.mxu0 0
        %1831 = vmatpush2.bf16.msra.mxu0 0
        %1832 = vmatprep.subr.bf16.mxu0 0
        %1833 = vmatpush2.bf16.msra.mxu0 0
        %1834 = vmatprep.subr.bf16.mxu0 0
        %1835 = vmatpush2.bf16.msra.mxu0 0
        %1836 = vmatprep.subr.bf16.mxu0 0
        %1837 = vmatpush2.bf16.msra.mxu0 0
        %1838 = vmatprep.subr.bf16.mxu0 0
        %1839 = vmatpush2.bf16.msra.mxu0 0
        %1840 = vmatprep.subr.bf16.mxu0 0
        %1841 = vmatpush2.bf16.msra.mxu0 0
        %1842 = vmatprep.subr.bf16.mxu0 0
        %1843 = vmatpush2.bf16.msra.mxu0 0
        %1844 = vmatprep.subr.bf16.mxu0 0
        %1845 = vmatpush2.bf16.msra.mxu0 0
        %1846 = vmatprep.mubr.bf16.mxu0 0
        %1847 = vmatmul.mubr.bf16.gmra.mxu0 %v1809
        %v1848 = vpop.f32.mrf.mxu0
        %v1849 = vadd.f32 %v1805, %v1848
        %v1850 = vpop.f32.mrf.mxu0
        %v1851 = vpop.f32.mrf.mxu0
        %v1852 = vpop.f32.mrf.mxu0
        %1853 = vdwg.mxu0
        %v1854 = vmax.f32 %v1849, 0.0
        %v1855 = vld [vmem:[%s7] sm:$0xf]
        %v1856 = vpack.c.bf16 %v1854, %v1854
        %v1857 = vld [vmem:[%s8] sm:$0xff]
        %1859 = vset.pattern.permute.xlu0 0
        %1860 = vperm.xlu0 %1859, %v1857
        %v1861 = vpop.permute.xlu0 %1860
        %vm1863 = vcmask 15360
        %v1865 = vsel %vm1863, %v1855, 0
        %vm1867 = vcmask 1040384
        %v1869 = vsel %vm1867, %v1856, 0
        %1871 = vmatprep.subr.bf16.mxu0 0
        %1872 = vmatpush1.bf16.msra.mxu0 0
        %1873 = vmatprep.subr.bf16.mxu0 0
        %1874 = vmatpush1.bf16.msra.mxu0 0
        %1875 = vmatprep.subr.bf16.mxu0 0
        %1876 = vmatpush1.bf16.msra.mxu0 0
        %1877 = vmatprep.subr.bf16.mxu0 0
        %1878 = vmatpush1.bf16.msra.mxu0 0
        %1879 = vmatprep.subr.bf16.mxu0 0
        %1880 = vmatpush1.bf16.msra.mxu0 0
        %1881 = vmatprep.subr.bf16.mxu0 0
        %1882 = vmatpush1.bf16.msra.mxu0 0
        %1883 = vmatprep.subr.bf16.mxu0 0
        %1884 = vmatpush1.bf16.msra.mxu0 0
        %1885 = vmatprep.subr.bf16.mxu0 0
        %1886 = vmatpush1.bf16.msra.mxu0 %v1869
        %1887 = vmatprep.subr.bf16.mxu0 0
        %1888 = vmatpush2.bf16.msra.mxu0 0
        %1889 = vmatprep.subr.bf16.mxu0 0
        %1890 = vmatpush2.bf16.msra.mxu0 0
        %1891 = vmatprep.subr.bf16.mxu0 0
        %1892 = vmatpush2.bf16.msra.mxu0 0
        %1893 = vmatprep.subr.bf16.mxu0 0
        %1894 = vmatpush2.bf16.msra.mxu0 0
        %1895 = vmatprep.subr.bf16.mxu0 0
        %1896 = vmatpush2.bf16.msra.mxu0 0
        %1897 = vmatprep.subr.bf16.mxu0 0
        %1898 = vmatpush2.bf16.msra.mxu0 0
        %1899 = vmatprep.subr.bf16.mxu0 0
        %1900 = vmatpush2.bf16.msra.mxu0 0
        %1901 = vmatprep.subr.bf16.mxu0 0
        %1902 = vmatpush2.bf16.msra.mxu0 0
        %1903 = vmatprep.mubr.bf16.mxu0 0
        %1904 = vmatmul.mubr.bf16.gmra.mxu0 %v1865
        %v1905 = vpop.f32.mrf.mxu0
        %v1906 = vadd.f32 %v1861, %v1905
        %v1907 = vpop.f32.mrf.mxu0
        %v1908 = vpop.f32.mrf.mxu0
        %v1909 = vpop.f32.mrf.mxu0
        %1910 = vdwg.mxu0
        %v1911 = vxor.u32 %v1906, 2147483648
        %v1912 = vmul.f32 %v1911, 1.442695
        %v1913 = vpow.pop %v1912
        %v1914 = vadd.f32 %v1913, 1.0
        %v1915 = vrcp.pop %v1914
        %v1916 = vmul.f32 1.0, %v1915
        %1918 = vset.pattern.permute.xlu0 0
        %1919 = vperm.xlu0 %1918, %v1916
        %v1920 = vpop.permute.xlu0 %1919
        %v1922 = vmul.f32 %v1784, %v1920
        %v1923 = vmul.f32 %v1785, %v1920
        %v1924 = vld [vmem:[%s317] sm:$0xff]
        %v1925 = vld [vmem:[%s317 + $0x8] sm:$0xff]
        %v1926 = vadd.f32 %v1922, %v1924
        %v1927 = vadd.f32 %v1923, %v1925
        %v1928 = vmax.f32 %v1926, 0.0
        %v1929 = vmax.f32 %v1927, 0.0
        %1930 = vst [vmem:[%s351] sm:$0xff] %v1928
        %1931 = vst [vmem:[%s351 + $0x8] sm:$0xff] %v1929
        %1932 = vset.pattern.permute.xlu0 1
        %1933 = vperm.xlu0 %1932, %v1916
        %v1934 = vpop.permute.xlu0 %1933
        %v1936 = vmul.f32 %v1786, %v1934
        %v1937 = vmul.f32 %v1787, %v1934
        %s1938 = scalar_lea.vmem %s317, 16 [#allocation3]
        %v1939 = vld [vmem:[%s1938] sm:$0xff]
        %v1940 = vld [vmem:[%s1938 + $0x8] sm:$0xff]
        %v1941 = vadd.f32 %v1936, %v1939
        %v1942 = vadd.f32 %v1937, %v1940
        %v1943 = vmax.f32 %v1941, 0.0
        %v1944 = vmax.f32 %v1942, 0.0
        %s1945 = scalar_lea.vmem %s351, 16 [#allocation6]
        %1946 = vst [vmem:[%s1945] sm:$0xff] %v1943
        %1947 = vst [vmem:[%s1945 + $0x8] sm:$0xff] %v1944
        %s1948 = sand.u32 %s228, 1
        %s1949 = scalar_lea.sflag [#allocation5], %s1948
        %s1950 = sand.u32 %s228, 1
        %s1951 = smul.addr %s1950, 32
        %s1952 = scalar_lea.vmem [#allocation6], %s1951
        // Predicated region
        $region61: #{tpu_custom_call.1} parent=55 // pred_check
          %p1953 = pneg %p238
        $region62: #{tpu_custom_call.1} parent=55 // pred_check_branch
          %1955 = sbr.rel (%p1953) target = $region64
        $region63: #{tpu_custom_call.1} parent=55 // pred_region
          %s1956 = smul.u32 2, %s26
          %s1958 = ssub.s32 512, 512
          %1959 = vsyncadd %s1949, %s1958
          %s1960 = smul.addr %s1956, 2
          %s1961 = smul.addr %s1960, 128
          %s1962 = scalar_lea.hbm %s9, %s1961
          %s1963 = sshll.u32 %s1952, 4
          %s1964 = int_to_ptr.vmem [resolvable:$true] %s1963
          %1969 = dma.vmem_to_hbm [thread:$0]  %s1964, 512, %s1962, %s1949, 256, 256, 16
        $region64: #{tpu_custom_call.1} parent=55 // pred_fallthru
          _
      $region56: #{tpu_custom_call.1} parent=5 // pred_fallthru
        _
      %p1970 = scmp.le.s32.totalorder 2, %s21
      // Predicated region
      $region65: #{tpu_custom_call.1} parent=5 // pred_check
        %p1971 = pneg %p1970
      $region66: #{tpu_custom_call.1} parent=5 // pred_check_branch
        %1973 = sbr.rel (%p1971) target = $region68
      $region67: #{tpu_custom_call.1} parent=5 // pred_region
        %s1974 = ssub.s32 %s21, 2
        // Predicated region
        $region69: #{tpu_custom_call.1} parent=67 // pred_check
          %p1975 = pneg %p244
        $region70: #{tpu_custom_call.1} parent=67 // pred_check_branch
          %1977 = sbr.rel (%p1975) target = $region72
        $region71: #{tpu_custom_call.1} parent=67 // pred_region
          %s1978 = sand.u32 %s229, 1
          %s1979 = scalar_lea.sflag [#allocation5], %s1978
          %s1980 = sand.u32 %s229, 1
          %s1981 = smul.addr %s1980, 32
          %s1982 = scalar_lea.vmem [#allocation6], %s1981
          %1983 = dma.done %s1979, 512
        $region72: #{tpu_custom_call.1} parent=67 // pred_fallthru
          _
      $region68: #{tpu_custom_call.1} parent=5 // pred_fallthru
        _
    $region6: #{tpu_custom_call.1} parent=1 // loop_footer
      %s25 = sadd.s32 1, %s21
    $region7: #{tpu_custom_call.1} parent=1 // loop_footer_branch
      %20 = sbr.rel target = $region3
    $region8: #{tpu_custom_call.1} parent=1 // loop_exit
      _
    %1984 = vsyncpa [#allocation4], 1
    %s1985 = scalar_lea.sflag [#allocation4], 1
    %1986 = vsyncpa %s1985, 1
    %1987 = vsyncpa [#allocation5], 1
    %s1988 = scalar_lea.sflag [#allocation5], 1
    %1989 = vsyncpa %s1988, 1

</llo_original>
